<compile_context>
chip_gen: v5e
topology: v5e:2x2
jax: 0.10.0
libtpu: 0.0.40
codegen_flags: <defaults>
</compile_context>

<pallas_src>
import functools

import numpy as np
import jax
import jax.numpy as jnp
from jax.experimental import pallas as pl
from jax.experimental.pallas import tpu as pltpu

EPS = 1e-5


# ----------------------------- in-kernel building blocks -------------------- #

def _conv_block(x, pre_ref, w_ref, sb_ref, post_ref, xp_scr, xcol_scr, y_scr, cfg):
    """One fused [Upsample?] + pad + Conv2d + BN + ReLU + [MaxPool2x2?] on a value.

    x:        (Cin, S_in)  f32 dense flat-spatial activation (value, not ref)
    pre_ref:  (S_in, Hp*Wp)   0/1 placement matrix (upsample + zero padding)
    w_ref:    (Cout, T*Cin)   conv weights, tap-major (bf16)
    sb_ref:   (Cout, 2)       folded BN (scale, bias), f32
    post_ref: (LM|LQ, S_out)  0/1 compaction matrix (pool-stride / valid select)
    returns   (Cout, S_out) f32
    """
    cin, lq, wp = cfg['cin'], cfg['lq'], cfg['wp']

    # 1) upsample (nearest) + zero 'same' padding folded into one placement matmul.
    xp_scr[...] = jnp.dot(x, pre_ref[...],
                          preferred_element_type=jnp.float32)          # (Cin, Hp*Wp)

    # 2) im2col in VMEM: tap t is a contiguous lane-slice of the padded flat image.
    for t, d in enumerate(cfg['taps']):
        xcol_scr[t * cin:(t + 1) * cin, :] = xp_scr[:, d:d + lq]

    # 3) single MXU matmul, K = T*Cin, lanes = flat spatial, bf16 feeds / f32 accum.
    acc = jnp.dot(w_ref[...], xcol_scr[...].astype(jnp.bfloat16),
                  preferred_element_type=jnp.float32)                  # (Cout, LQ)

    # 4) f32 epilogue: folded BN scale/bias + ReLU.
    y = jnp.maximum(acc * sb_ref[:, 0:1] + sb_ref[:, 1:2], 0.0)

    # 5) fused MaxPool(2,2): elementwise max of the 4 window offsets.
    if cfg['pool']:
        y_scr[...] = y
        lm = lq - (wp + 1)
        y = y_scr[:, 0:lm]
        for d in (1, wp, wp + 1):
            y = jnp.maximum(y, y_scr[:, d:d + lm])

    # 6) compact padded-grid columns to the dense output (and pool-stride pick).
    return jnp.dot(y, post_ref[...], preferred_element_type=jnp.float32)


# ------------------------------- Pallas kernels ----------------------------- #

def _conv_stack_kernel(cfgs, *refs):
    """A whole encoder/decoder conv stack fused, for one batch sample."""
    nl = len(cfgs)
    x_ref = refs[0]
    o_ref = refs[1 + 4 * nl]
    scratch = refs[2 + 4 * nl:]

    h = x_ref[0]                                                       # (Cin, S_in)
    si = 0
    for l, cfg in enumerate(cfgs):
        pre_ref, w_ref, sb_ref, post_ref = refs[1 + 4 * l: 5 + 4 * l]
        xp_scr, xcol_scr = scratch[si], scratch[si + 1]
        si += 2
        y_scr = None
        if cfg['pool']:
            y_scr = scratch[si]
            si += 1
        h = _conv_block(h, pre_ref, w_ref, sb_ref, post_ref,
                        xp_scr, xcol_scr, y_scr, cfg)
    o_ref[0] = h.astype(o_ref.dtype)


def _fc_stack_kernel(num_layers, *refs):
    """Whole FC stack fused: (Linear + BN + ReLU) x k, then Linear + ReLU."""
    o_ref = refs[-1]
    h = refs[0][0]                                                     # (1, F0) f32
    for i in range(num_layers):
        w_ref = refs[1 + 2 * i]                                        # (Fi, Fo) bf16
        sb_ref = refs[2 + 2 * i]                                       # (2, Fo)  f32
        acc = jnp.dot(h.astype(jnp.bfloat16), w_ref[...],
                      preferred_element_type=jnp.float32)
        h = jnp.maximum(acc * sb_ref[0:1, :] + sb_ref[1:2, :], 0.0)
    o_ref[0] = h.astype(o_ref.dtype)


# ------------------------------ kernel wrappers ----------------------------- #

def conv_stack(x, layers):
    """x: (N, Cin, S_in) f32 dense flat spatial -> (N, Cout_last, S_out_last) f32.

    One pallas_call for the whole stack; weights stay VMEM-resident across batch.
    """
    n = x.shape[0]
    cfgs = tuple(lyr['cfg'] for lyr in layers)
    cin0, sin0 = cfgs[0]['cin'], cfgs[0]['s_in']
    cout_l, sout_l = cfgs[-1]['cout'], cfgs[-1]['s_out']

    in_specs = [pl.BlockSpec((1, cin0, sin0), lambda i: (i, 0, 0))]
    args = [x]
    scratch = []
    for lyr in layers:
        cfg = lyr['cfg']
        for name in ('pre', 'w', 'sb', 'post'):
            in_specs.append(pl.BlockSpec(lyr[name].shape, lambda i: (0, 0)))
            args.append(lyr[name])
        t_cin = lyr['w'].shape[1]
        scratch.append(pltpu.VMEM((cfg['cin'], cfg['sp']), jnp.float32))   # padded img
        scratch.append(pltpu.VMEM((t_cin, cfg['lq']), jnp.float32))        # im2col
        if cfg['pool']:
            scratch.append(pltpu.VMEM((cfg['cout'], cfg['lq']), jnp.float32))

    kernel = functools.partial(_conv_stack_kernel, cfgs)
    return pl.pallas_call(
        kernel,
        out_shape=jax.ShapeDtypeStruct((n, cout_l, sout_l), jnp.float32),
        grid=(n,),
        in_specs=in_specs,
        out_specs=pl.BlockSpec((1, cout_l, sout_l), lambda i: (i, 0, 0)),
        scratch_shapes=scratch,
        compiler_params=pltpu.CompilerParams(
            dimension_semantics=("parallel",)),
    )(*args)


def fc_stack(x_flat, layers):
    """x_flat: (N, F0) -> (N, F_last); the whole FC stack in one pallas_call."""
    n, fin = x_flat.shape
    fout = layers[-1]['w'].shape[1]
    x3 = x_flat.reshape(n, 1, fin)
    in_specs = [pl.BlockSpec((1, 1, fin), lambda i: (i, 0, 0))]
    args = [x3]
    for lyr in layers:
        in_specs.append(pl.BlockSpec(lyr['w'].shape, lambda i: (0, 0)))
        in_specs.append(pl.BlockSpec(lyr['sb'].shape, lambda i: (0, 0)))
        args.append(lyr['w'])
        args.append(lyr['sb'])
    kernel = functools.partial(_fc_stack_kernel, len(layers))
    out = pl.pallas_call(
        kernel,
        out_shape=jax.ShapeDtypeStruct((n, 1, fout), jnp.float32),
        grid=(n,),
        in_specs=in_specs,
        out_specs=pl.BlockSpec((1, 1, fout), lambda i: (i, 0, 0)),
        compiler_params=pltpu.CompilerParams(
            dimension_semantics=("parallel",)),
    )(*args)
    return out.reshape(n, fout)


# --------------------------- parameter construction ------------------------- #

def _placement_matrix(h_in, w_in, scale, ph, pw, hp, wp):
    """(h_in*w_in, hp*wp) 0/1 map: dense input -> upsampled + zero-padded grid."""
    h, w = h_in * scale, w_in * scale
    m = np.zeros((h_in * w_in, hp * wp), np.float32)
    for pi in range(hp):
        for pj in range(wp):
            y, x = pi - ph, pj - pw
            if 0 <= y < h and 0 <= x < w:
                m[(y // scale) * w_in + (x // scale), pi * wp + pj] = 1.0
    return jnp.asarray(m)


def _compaction_matrix(hc, wc, wp, pool):
    """0/1 map from the padded-grid conv output columns to the dense output."""
    lq = (hc - 1) * wp + wc
    if pool:
        ho, wo = hc // 2, wc // 2
        lm = lq - (wp + 1)
        m = np.zeros((lm, ho * wo), np.float32)
        for i in range(ho):
            for j in range(wo):
                m[(2 * i) * wp + 2 * j, i * wo + j] = 1.0
        return jnp.asarray(m), ho, wo
    m = np.zeros((lq, hc * wc), np.float32)
    for i in range(hc):
        for j in range(wc):
            m[i * wp + j, i * wc + j] = 1.0
    return jnp.asarray(m), hc, wc


def _conv_layer_init(key, cin, cout, kh, kw, h_in, w_in, up, pool):
    ks = jax.random.split(key, 6)
    fan_in = cin * kh * kw
    wgt = jax.random.normal(ks[0], (kh, kw, cin, cout), jnp.float32) / float(np.sqrt(fan_in))
    b = 0.05 * jax.random.normal(ks[1], (cout,), jnp.float32)
    gamma = 1.0 + 0.1 * jax.random.normal(ks[2], (cout,), jnp.float32)
    beta = 0.1 * jax.random.normal(ks[3], (cout,), jnp.float32)
    rmean = 0.05 * jax.random.normal(ks[4], (cout,), jnp.float32)
    rvar = 1.0 + 0.1 * jnp.abs(jax.random.normal(ks[5], (cout,), jnp.float32))
    scale = gamma / jnp.sqrt(rvar + EPS)
    bias = beta + (b - rmean) * scale
    # tap-major, channel-minor flattening to match the in-kernel im2col order.
    w_flat = jnp.transpose(wgt, (3, 0, 1, 2)).reshape(cout, kh * kw * cin)

    s = 2 if up else 1
    h, w = h_in * s, w_in * s
    ph, pw = (kh - 1) // 2, (kw - 1) // 2          # matches int((k-1)/2) padding
    hp, wp = h + 2 * ph, w + 2 * pw
    hc, wc = h + 2 * ph - kh + 1, w + 2 * pw - kw + 1
    lq = (hc - 1) * wp + wc
    taps = tuple(i * wp + j for i in range(kh) for j in range(kw))

    pre = _placement_matrix(h_in, w_in, s, ph, pw, hp, wp)
    post, h_out, w_out = _compaction_matrix(hc, wc, wp, pool)

    cfg = dict(cin=cin, cout=cout, s_in=h_in * w_in, sp=hp * wp, lq=lq, wp=wp,
               taps=taps, pool=pool, s_out=h_out * w_out)
    layer = dict(w=w_flat.astype(jnp.bfloat16),
                 sb=jnp.stack([scale, bias], axis=1),       # (Cout, 2)
                 pre=pre, post=post, cfg=cfg)
    return layer, (h_out, w_out)


def _fc_layer_init(key, fin, fout, with_bn):
    ks = jax.random.split(key, 6)
    wgt = jax.random.normal(ks[0], (fin, fout), jnp.float32) / float(np.sqrt(fin))
    b = 0.05 * jax.random.normal(ks[1], (fout,), jnp.float32)
    if with_bn:
        gamma = 1.0 + 0.1 * jax.random.normal(ks[2], (fout,), jnp.float32)
        beta = 0.1 * jax.random.normal(ks[3], (fout,), jnp.float32)
        rmean = 0.05 * jax.random.normal(ks[4], (fout,), jnp.float32)
        rvar = 1.0 + 0.1 * jnp.abs(jax.random.normal(ks[5], (fout,), jnp.float32))
        scale = gamma / jnp.sqrt(rvar + EPS)
        bias = beta + (b - rmean) * scale
    else:
        scale = jnp.ones((fout,), jnp.float32)
        bias = b
    return {'w': wgt.astype(jnp.bfloat16),
            'sb': jnp.stack([scale, bias], axis=0)}          # (2, Fout)


def init_params(key, input_shape, encoder_convs, fcs, decoder_convs):
    c, h, w = input_shape
    keys = iter(jax.random.split(key, 64))
    params = {'enc': [], 'fc': [], 'dec': []}

    cin, hh, ww = c, h, w
    for (cout, ksz, has_pool) in encoder_convs:
        layer, (hh, ww) = _conv_layer_init(next(keys), cin, cout, ksz[0], ksz[1],
                                           hh, ww, up=False, pool=has_pool)
        params['enc'].append(layer)
        cin = cout
    params['enc_out_shape'] = (cin, hh, ww)

    nodes = cin * hh * ww
    last = nodes
    for nfeat in fcs:
        params['fc'].append(_fc_layer_init(next(keys), last, nfeat, with_bn=True))
        last = nfeat
    # final Linear(last -> encoder_output_nodes) + ReLU (no BN)
    params['fc'].append(_fc_layer_init(next(keys), last, nodes, with_bn=False))

    for (cout, ksz, has_up) in decoder_convs:
        layer, (hh, ww) = _conv_layer_init(next(keys), cin, cout, ksz[0], ksz[1],
                                           hh, ww, up=has_up, pool=False)
        params['dec'].append(layer)
        cin = cout
    params['out_shape'] = (cin, hh, ww)
    return params


# --------------------------------- forward ---------------------------------- #

def autoencoder_forward(x_nchw, params):
    # TODO(synk): Dropout/Dropout2d layers are identity (drop rates None / eval);
    # BatchNorm uses running statistics folded into per-channel scale/bias.
    n, c, h, w = x_nchw.shape
    x = x_nchw.astype(jnp.float32).reshape(n, c, h * w)   # NCHW kept end-to-end

    # encoder: ONE fused kernel for all [Conv2d + BN + ReLU (+ MaxPool 2x2)] layers
    x = conv_stack(x, params['enc'])

    # flatten (already PyTorch NCHW order -> free reshape, no transpose)
    c2, h2, w2 = params['enc_out_shape']
    flat = x.reshape(n, c2 * h2 * w2)
    flat = fc_stack(flat, params['fc'])                    # ONE fused FC kernel
    x = flat.reshape(n, c2, h2 * w2)

    # decoder: ONE fused kernel for all [(Upsample x2) + Conv2d + BN + ReLU] layers
    x = conv_stack(x, params['dec'])

    cf, hf, wf = params['out_shape']
    return x.reshape(n, cf, hf, wf)


# ----------------------------------- main ------------------------------------ #

if __name__ == "__main__":
    key = jax.random.PRNGKey(0)
    pkey, xkey = jax.random.split(key)

    # small, self-consistent config (mirrors the PyTorch constructor args)
    input_shape = (4, 16, 16)                       # (depth, height, width)
    encoder_convs = [(8, (3, 3), True), (16, (3, 3), True)]
    fcs = [32]
    decoder_convs = [(8, (3, 3), True), (4, (3, 3), True)]

    params = init_params(pkey, input_shape, encoder_convs, fcs, decoder_convs)
    x = jax.random.normal(xkey, (2, *input_shape), jnp.float32)    # NCHW input

    fwd = jax.jit(lambda inp: autoencoder_forward(inp, params))
    out = jax.block_until_ready(fwd(x))

    assert out.shape == (2, 4, 16, 16), out.shape
    assert bool(jnp.all(jnp.isfinite(out)))
    print("KERNEL_OK")
</pallas_src>

<mosaic_0001>
module attributes {stable_mosaic.version = 11 : i64} {
  func.func @_fc_stack_kernel(%arg0: i32, %arg1: memref<1x1x256xf32, #tpu.memory_space<vmem>>, %arg2: memref<256x32xbf16, #tpu.memory_space<vmem>>, %arg3: memref<2x32xf32, #tpu.memory_space<vmem>>, %arg4: memref<32x256xbf16, #tpu.memory_space<vmem>>, %arg5: memref<2x256xf32, #tpu.memory_space<vmem>>, %arg6: memref<1x1x256xf32, #tpu.memory_space<vmem>>) attributes {dimension_semantics = [#tpu.dimension_semantics<parallel>], iteration_bounds = array<i64: 2>, scalar_prefetch = 0 : i64, scratch_operands = 0 : i64, tpu.core_type = #tpu.core_type<tc>, window_params = [{transform_indices = @transform_0, window_bounds = array<i64: 1, 1, 256>}, {pipeline_mode = #tpu.pipeline_mode<synchronous>, transform_indices = @transform_1, window_bounds = array<i64: 256, 32>}, {pipeline_mode = #tpu.pipeline_mode<synchronous>, transform_indices = @transform_2, window_bounds = array<i64: 2, 32>}, {pipeline_mode = #tpu.pipeline_mode<synchronous>, transform_indices = @transform_3, window_bounds = array<i64: 32, 256>}, {pipeline_mode = #tpu.pipeline_mode<synchronous>, transform_indices = @transform_4, window_bounds = array<i64: 2, 256>}, {transform_indices = @transform_5, window_bounds = array<i64: 1, 1, 256>}]} {
    %c0 = arith.constant 0 : index
    %c0_0 = arith.constant 0 : index
    %c0_1 = arith.constant 0 : index
    %0 = vector.load %arg1[%c0, %c0_0, %c0_1] : memref<1x1x256xf32, #tpu.memory_space<vmem>>, vector<1x1x256xf32>
    %1 = vector.shape_cast %0 : vector<1x1x256xf32> to vector<1x256xf32>
    %2 = arith.truncf %1 : vector<1x256xf32> to vector<1x256xbf16>
    %c0_2 = arith.constant 0 : index
    %c0_3 = arith.constant 0 : index
    %3 = vector.load %arg2[%c0_2, %c0_3] : memref<256x32xbf16, #tpu.memory_space<vmem>>, vector<256x32xbf16>
    %cst = arith.constant dense<0.000000e+00> : vector<1x32xf32>
    %4 = tpu.matmul %2, %3, %cst {dimension_numbers = #tpu.dot_dimension_numbers<[1], [0], [0], [1], [0, 0, 1, 1], [], []>} : vector<1x256xbf16>, vector<256x32xbf16>, vector<1x32xf32> -> vector<1x32xf32>
    %c0_4 = arith.constant 0 : index
    %c0_5 = arith.constant 0 : index
    %5 = vector.load %arg3[%c0_4, %c0_5] : memref<2x32xf32, #tpu.memory_space<vmem>>, vector<1x32xf32>
    %6 = arith.mulf %4, %5 : vector<1x32xf32>
    %c1 = arith.constant 1 : index
    %c0_6 = arith.constant 0 : index
    %7 = vector.load %arg3[%c1, %c0_6] : memref<2x32xf32, #tpu.memory_space<vmem>>, vector<1x32xf32>
    %8 = arith.addf %6, %7 : vector<1x32xf32>
    %cst_7 = arith.constant 0.000000e+00 : f32
    %9 = vector.broadcast %cst_7 : f32 to vector<1x32xf32>
    %10 = arith.maximumf %8, %9 : vector<1x32xf32>
    %11 = arith.truncf %10 : vector<1x32xf32> to vector<1x32xbf16>
    %c0_8 = arith.constant 0 : index
    %c0_9 = arith.constant 0 : index
    %12 = vector.load %arg4[%c0_8, %c0_9] : memref<32x256xbf16, #tpu.memory_space<vmem>>, vector<32x256xbf16>
    %cst_10 = arith.constant dense<0.000000e+00> : vector<1x256xf32>
    %13 = tpu.matmul %11, %12, %cst_10 {dimension_numbers = #tpu.dot_dimension_numbers<[1], [0], [0], [1], [0, 0, 1, 1], [], []>} : vector<1x32xbf16>, vector<32x256xbf16>, vector<1x256xf32> -> vector<1x256xf32>
    %c0_11 = arith.constant 0 : index
    %c0_12 = arith.constant 0 : index
    %14 = vector.load %arg5[%c0_11, %c0_12] : memref<2x256xf32, #tpu.memory_space<vmem>>, vector<1x256xf32>
    %15 = arith.mulf %13, %14 : vector<1x256xf32>
    %c1_13 = arith.constant 1 : index
    %c0_14 = arith.constant 0 : index
    %16 = vector.load %arg5[%c1_13, %c0_14] : memref<2x256xf32, #tpu.memory_space<vmem>>, vector<1x256xf32>
    %17 = arith.addf %15, %16 : vector<1x256xf32>
    %cst_15 = arith.constant 0.000000e+00 : f32
    %18 = vector.broadcast %cst_15 : f32 to vector<1x256xf32>
    %19 = arith.maximumf %17, %18 : vector<1x256xf32>
    %c0_16 = arith.constant 0 : index
    %c0_17 = arith.constant 0 : index
    %c0_18 = arith.constant 0 : index
    %20 = vector.load %arg6[%c0_16, %c0_17, %c0_18] : memref<1x1x256xf32, #tpu.memory_space<vmem>>, vector<1x1x256xf32>
    %21 = vector.shape_cast %20 : vector<1x1x256xf32> to vector<1x256xf32>
    %22 = vector.shape_cast %19 : vector<1x256xf32> to vector<1x1x256xf32>
    tpu.vector_store %arg6[%c0_16, %c0_17, %c0_18], %22 {strides = array<i32>} : memref<1x1x256xf32, #tpu.memory_space<vmem>>, vector<1x1x256xf32>,
    return
  }
  func.func @transform_0(%arg0: i32) -> (i32, i32, i32) {
    %c0_i32 = arith.constant 0 : i32
    %c0_i32_0 = arith.constant 0 : i32
    %c0_i32_1 = arith.constant 0 : i32
    return %arg0, %c0_i32, %c0_i32_0 : i32, i32, i32
  }
  func.func @transform_1(%arg0: i32) -> (i32, i32) {
    %c0_i32 = arith.constant 0 : i32
    %c0_i32_0 = arith.constant 0 : i32
    %c0_i32_1 = arith.constant 0 : i32
    return %c0_i32, %c0_i32_0 : i32, i32
  }
  func.func @transform_2(%arg0: i32) -> (i32, i32) {
    %c0_i32 = arith.constant 0 : i32
    %c0_i32_0 = arith.constant 0 : i32
    %c0_i32_1 = arith.constant 0 : i32
    return %c0_i32, %c0_i32_0 : i32, i32
  }
  func.func @transform_3(%arg0: i32) -> (i32, i32) {
    %c0_i32 = arith.constant 0 : i32
    %c0_i32_0 = arith.constant 0 : i32
    %c0_i32_1 = arith.constant 0 : i32
    return %c0_i32, %c0_i32_0 : i32, i32
  }
  func.func @transform_4(%arg0: i32) -> (i32, i32) {
    %c0_i32 = arith.constant 0 : i32
    %c0_i32_0 = arith.constant 0 : i32
    %c0_i32_1 = arith.constant 0 : i32
    return %c0_i32, %c0_i32_0 : i32, i32
  }
  func.func @transform_5(%arg0: i32) -> (i32, i32, i32) {
    %c0_i32 = arith.constant 0 : i32
    %c0_i32_0 = arith.constant 0 : i32
    %c0_i32_1 = arith.constant 0 : i32
    return %arg0, %c0_i32, %c0_i32_0 : i32, i32, i32
  }
}

module attributes {stable_mosaic.version = 11 : i64} {
  func.func @_conv_stack_kernel(%arg0: i32, %arg1: memref<1x4x256xf32, #tpu.memory_space<vmem>>, %arg2: memref<256x324xf32, #tpu.memory_space<vmem>>, %arg3: memref<8x36xbf16, #tpu.memory_space<vmem>>, %arg4: memref<8x2xf32, #tpu.memory_space<vmem>>, %arg5: memref<267x64xf32, #tpu.memory_space<vmem>>, %arg6: memref<64x100xf32, #tpu.memory_space<vmem>>, %arg7: memref<16x72xbf16, #tpu.memory_space<vmem>>, %arg8: memref<16x2xf32, #tpu.memory_space<vmem>>, %arg9: memref<67x16xf32, #tpu.memory_space<vmem>>, %arg10: memref<1x16x16xf32, #tpu.memory_space<vmem>>, %arg11: memref<4x324xf32, #tpu.memory_space<vmem>>, %arg12: memref<36x286xf32, #tpu.memory_space<vmem>>, %arg13: memref<8x286xf32, #tpu.memory_space<vmem>>, %arg14: memref<8x100xf32, #tpu.memory_space<vmem>>, %arg15: memref<72x78xf32, #tpu.memory_space<vmem>>, %arg16: memref<16x78xf32, #tpu.memory_space<vmem>>) attributes {dimension_semantics = [#tpu.dimension_semantics<parallel>], iteration_bounds = array<i64: 2>, scalar_prefetch = 0 : i64, scratch_operands = 6 : i64, tpu.core_type = #tpu.core_type<tc>, window_params = [{transform_indices = @transform_0, window_bounds = array<i64: 1, 4, 256>}, {pipeline_mode = #tpu.pipeline_mode<synchronous>, transform_indices = @transform_1, window_bounds = array<i64: 256, 324>}, {pipeline_mode = #tpu.pipeline_mode<synchronous>, transform_indices = @transform_2, window_bounds = array<i64: 8, 36>}, {pipeline_mode = #tpu.pipeline_mode<synchronous>, transform_indices = @transform_3, window_bounds = array<i64: 8, 2>}, {pipeline_mode = #tpu.pipeline_mode<synchronous>, transform_indices = @transform_4, window_bounds = array<i64: 267, 64>}, {pipeline_mode = #tpu.pipeline_mode<synchronous>, transform_indices = @transform_5, window_bounds = array<i64: 64, 100>}, {pipeline_mode = #tpu.pipeline_mode<synchronous>, transform_indices = @transform_6, window_bounds = array<i64: 16, 72>}, {pipeline_mode = #tpu.pipeline_mode<synchronous>, transform_indices = @transform_7, window_bounds = array<i64: 16, 2>}, {pipeline_mode = #tpu.pipeline_mode<synchronous>, transform_indices = @transform_8, window_bounds = array<i64: 67, 16>}, {transform_indices = @transform_9, window_bounds = array<i64: 1, 16, 16>}]} {
    %c0 = arith.constant 0 : index
    %c0_0 = arith.constant 0 : index
    %c0_1 = arith.constant 0 : index
    %0 = vector.load %arg1[%c0, %c0_0, %c0_1] : memref<1x4x256xf32, #tpu.memory_space<vmem>>, vector<1x4x256xf32>
    %1 = vector.shape_cast %0 : vector<1x4x256xf32> to vector<4x256xf32>
    %c0_2 = arith.constant 0 : index
    %c0_3 = arith.constant 0 : index
    %2 = vector.load %arg2[%c0_2, %c0_3] : memref<256x324xf32, #tpu.memory_space<vmem>>, vector<256x324xf32>
    %cst = arith.constant dense<0.000000e+00> : vector<4x324xf32>
    %3 = tpu.matmul %1, %2, %cst {dimension_numbers = #tpu.dot_dimension_numbers<[1], [0], [0], [1], [0, 0, 1, 1], [], []>} : vector<4x256xf32>, vector<256x324xf32>, vector<4x324xf32> -> vector<4x324xf32>
    %c0_4 = arith.constant 0 : index
    %c0_5 = arith.constant 0 : index
    %4 = vector.load %arg11[%c0_4, %c0_5] : memref<4x324xf32, #tpu.memory_space<vmem>>, vector<4x324xf32>
    tpu.vector_store %arg11[%c0_4, %c0_5], %3 {strides = array<i32>} : memref<4x324xf32, #tpu.memory_space<vmem>>, vector<4x324xf32>,
    %c0_6 = arith.constant 0 : index
    %c0_7 = arith.constant 0 : index
    %5 = vector.load %arg11[%c0_6, %c0_7] : memref<4x324xf32, #tpu.memory_space<vmem>>, vector<4x286xf32>
    %c0_8 = arith.constant 0 : index
    %c0_9 = arith.constant 0 : index
    %6 = vector.load %arg12[%c0_8, %c0_9] : memref<36x286xf32, #tpu.memory_space<vmem>>, vector<4x286xf32>
    tpu.vector_store %arg12[%c0_8, %c0_9], %5 {strides = array<i32>} : memref<36x286xf32, #tpu.memory_space<vmem>>, vector<4x286xf32>,
    %c0_10 = arith.constant 0 : index
    %c1 = arith.constant 1 : index
    %7 = vector.load %arg11[%c0_10, %c1] : memref<4x324xf32, #tpu.memory_space<vmem>>, vector<4x286xf32>
    %c4 = arith.constant 4 : index
    %c0_11 = arith.constant 0 : index
    %8 = vector.load %arg12[%c4, %c0_11] : memref<36x286xf32, #tpu.memory_space<vmem>>, vector<4x286xf32>
    tpu.vector_store %arg12[%c4, %c0_11], %7 {strides = array<i32>} : memref<36x286xf32, #tpu.memory_space<vmem>>, vector<4x286xf32>,
    %c0_12 = arith.constant 0 : index
    %c2 = arith.constant 2 : index
    %9 = vector.load %arg11[%c0_12, %c2] : memref<4x324xf32, #tpu.memory_space<vmem>>, vector<4x286xf32>
    %c8 = arith.constant 8 : index
    %c0_13 = arith.constant 0 : index
    %10 = vector.load %arg12[%c8, %c0_13] : memref<36x286xf32, #tpu.memory_space<vmem>>, vector<4x286xf32>
    tpu.vector_store %arg12[%c8, %c0_13], %9 {strides = array<i32>} : memref<36x286xf32, #tpu.memory_space<vmem>>, vector<4x286xf32>,
    %c0_14 = arith.constant 0 : index
    %c18 = arith.constant 18 : index
    %11 = vector.load %arg11[%c0_14, %c18] : memref<4x324xf32, #tpu.memory_space<vmem>>, vector<4x286xf32>
    %c12 = arith.constant 12 : index
    %c0_15 = arith.constant 0 : index
    %12 = vector.load %arg12[%c12, %c0_15] : memref<36x286xf32, #tpu.memory_space<vmem>>, vector<4x286xf32>
    tpu.vector_store %arg12[%c12, %c0_15], %11 {strides = array<i32>} : memref<36x286xf32, #tpu.memory_space<vmem>>, vector<4x286xf32>,
    %c0_16 = arith.constant 0 : index
    %c19 = arith.constant 19 : index
    %13 = vector.load %arg11[%c0_16, %c19] : memref<4x324xf32, #tpu.memory_space<vmem>>, vector<4x286xf32>
    %c16 = arith.constant 16 : index
    %c0_17 = arith.constant 0 : index
    %14 = vector.load %arg12[%c16, %c0_17] : memref<36x286xf32, #tpu.memory_space<vmem>>, vector<4x286xf32>
    tpu.vector_store %arg12[%c16, %c0_17], %13 {strides = array<i32>} : memref<36x286xf32, #tpu.memory_space<vmem>>, vector<4x286xf32>,
    %c0_18 = arith.constant 0 : index
    %c20 = arith.constant 20 : index
    %15 = vector.load %arg11[%c0_18, %c20] : memref<4x324xf32, #tpu.memory_space<vmem>>, vector<4x286xf32>
    %c20_19 = arith.constant 20 : index
    %c0_20 = arith.constant 0 : index
    %16 = vector.load %arg12[%c20_19, %c0_20] : memref<36x286xf32, #tpu.memory_space<vmem>>, vector<4x286xf32>
    tpu.vector_store %arg12[%c20_19, %c0_20], %15 {strides = array<i32>} : memref<36x286xf32, #tpu.memory_space<vmem>>, vector<4x286xf32>,
    %c0_21 = arith.constant 0 : index
    %c36 = arith.constant 36 : index
    %17 = vector.load %arg11[%c0_21, %c36] : memref<4x324xf32, #tpu.memory_space<vmem>>, vector<4x286xf32>
    %c24 = arith.constant 24 : index
    %c0_22 = arith.constant 0 : index
    %18 = vector.load %arg12[%c24, %c0_22] : memref<36x286xf32, #tpu.memory_space<vmem>>, vector<4x286xf32>
    tpu.vector_store %arg12[%c24, %c0_22], %17 {strides = array<i32>} : memref<36x286xf32, #tpu.memory_space<vmem>>, vector<4x286xf32>,
    %c0_23 = arith.constant 0 : index
    %c37 = arith.constant 37 : index
    %19 = vector.load %arg11[%c0_23, %c37] : memref<4x324xf32, #tpu.memory_space<vmem>>, vector<4x286xf32>
    %c28 = arith.constant 28 : index
    %c0_24 = arith.constant 0 : index
    %20 = vector.load %arg12[%c28, %c0_24] : memref<36x286xf32, #tpu.memory_space<vmem>>, vector<4x286xf32>
    tpu.vector_store %arg12[%c28, %c0_24], %19 {strides = array<i32>} : memref<36x286xf32, #tpu.memory_space<vmem>>, vector<4x286xf32>,
    %c0_25 = arith.constant 0 : index
    %c38 = arith.constant 38 : index
    %21 = vector.load %arg11[%c0_25, %c38] : memref<4x324xf32, #tpu.memory_space<vmem>>, vector<4x286xf32>
    %c32 = arith.constant 32 : index
    %c0_26 = arith.constant 0 : index
    %22 = vector.load %arg12[%c32, %c0_26] : memref<36x286xf32, #tpu.memory_space<vmem>>, vector<4x286xf32>
    tpu.vector_store %arg12[%c32, %c0_26], %21 {strides = array<i32>} : memref<36x286xf32, #tpu.memory_space<vmem>>, vector<4x286xf32>,
    %c0_27 = arith.constant 0 : index
    %c0_28 = arith.constant 0 : index
    %23 = vector.load %arg3[%c0_27, %c0_28] : memref<8x36xbf16, #tpu.memory_space<vmem>>, vector<8x36xbf16>
    %c0_29 = arith.constant 0 : index
    %c0_30 = arith.constant 0 : index
    %24 = vector.load %arg12[%c0_29, %c0_30] : memref<36x286xf32, #tpu.memory_space<vmem>>, vector<36x286xf32>
    %25 = arith.truncf %24 : vector<36x286xf32> to vector<36x286xbf16>
    %cst_31 = arith.constant dense<0.000000e+00> : vector<8x286xf32>
    %26 = tpu.matmul %23, %25, %cst_31 {dimension_numbers = #tpu.dot_dimension_numbers<[1], [0], [0], [1], [0, 0, 1, 1], [], []>} : vector<8x36xbf16>, vector<36x286xbf16>, vector<8x286xf32> -> vector<8x286xf32>
    %c0_32 = arith.constant 0 : index
    %c0_33 = arith.constant 0 : index
    %27 = vector.load %arg4[%c0_32, %c0_33] : memref<8x2xf32, #tpu.memory_space<vmem>>, vector<8x1xf32>
    %28 = vector.broadcast %27 : vector<8x1xf32> to vector<8x286xf32>
    %29 = arith.mulf %26, %28 : vector<8x286xf32>
    %c0_34 = arith.constant 0 : index
    %c1_35 = arith.constant 1 : index
    %30 = vector.load %arg4[%c0_34, %c1_35] : memref<8x2xf32, #tpu.memory_space<vmem>>, vector<8x1xf32>
    %31 = vector.broadcast %30 : vector<8x1xf32> to vector<8x286xf32>
    %32 = arith.addf %29, %31 : vector<8x286xf32>
    %cst_36 = arith.constant 0.000000e+00 : f32
    %33 = vector.broadcast %cst_36 : f32 to vector<8x286xf32>
    %34 = arith.maximumf %32, %33 : vector<8x286xf32>
    %c0_37 = arith.constant 0 : index
    %c0_38 = arith.constant 0 : index
    %35 = vector.load %arg13[%c0_37, %c0_38] : memref<8x286xf32, #tpu.memory_space<vmem>>, vector<8x286xf32>
    tpu.vector_store %arg13[%c0_37, %c0_38], %34 {strides = array<i32>} : memref<8x286xf32, #tpu.memory_space<vmem>>, vector<8x286xf32>,
    %c0_39 = arith.constant 0 : index
    %c0_40 = arith.constant 0 : index
    %36 = vector.load %arg13[%c0_39, %c0_40] : memref<8x286xf32, #tpu.memory_space<vmem>>, vector<8x267xf32>
    %c0_41 = arith.constant 0 : index
    %c1_42 = arith.constant 1 : index
    %37 = vector.load %arg13[%c0_41, %c1_42] : memref<8x286xf32, #tpu.memory_space<vmem>>, vector<8x267xf32>
    %38 = arith.maximumf %36, %37 : vector<8x267xf32>
    %c0_43 = arith.constant 0 : index
    %c18_44 = arith.constant 18 : index
    %39 = vector.load %arg13[%c0_43, %c18_44] : memref<8x286xf32, #tpu.memory_space<vmem>>, vector<8x267xf32>
    %40 = arith.maximumf %38, %39 : vector<8x267xf32>
    %c0_45 = arith.constant 0 : index
    %c19_46 = arith.constant 19 : index
    %41 = vector.load %arg13[%c0_45, %c19_46] : memref<8x286xf32, #tpu.memory_space<vmem>>, vector<8x267xf32>
    %42 = arith.maximumf %40, %41 : vector<8x267xf32>
    %c0_47 = arith.constant 0 : index
    %c0_48 = arith.constant 0 : index
    %43 = vector.load %arg5[%c0_47, %c0_48] : memref<267x64xf32, #tpu.memory_space<vmem>>, vector<267x64xf32>
    %cst_49 = arith.constant dense<0.000000e+00> : vector<8x64xf32>
    %44 = tpu.matmul %42, %43, %cst_49 {dimension_numbers = #tpu.dot_dimension_numbers<[1], [0], [0], [1], [0, 0, 1, 1], [], []>} : vector<8x267xf32>, vector<267x64xf32>, vector<8x64xf32> -> vector<8x64xf32>
    %c0_50 = arith.constant 0 : index
    %c0_51 = arith.constant 0 : index
    %45 = vector.load %arg6[%c0_50, %c0_51] : memref<64x100xf32, #tpu.memory_space<vmem>>, vector<64x100xf32>
    %cst_52 = arith.constant dense<0.000000e+00> : vector<8x100xf32>
    %46 = tpu.matmul %44, %45, %cst_52 {dimension_numbers = #tpu.dot_dimension_numbers<[1], [0], [0], [1], [0, 0, 1, 1], [], []>} : vector<8x64xf32>, vector<64x100xf32>, vector<8x100xf32> -> vector<8x100xf32>
    %c0_53 = arith.constant 0 : index
    %c0_54 = arith.constant 0 : index
    %47 = vector.load %arg14[%c0_53, %c0_54] : memref<8x100xf32, #tpu.memory_space<vmem>>, vector<8x100xf32>
    tpu.vector_store %arg14[%c0_53, %c0_54], %46 {strides = array<i32>} : memref<8x100xf32, #tpu.memory_space<vmem>>, vector<8x100xf32>,
    %c0_55 = arith.constant 0 : index
    %c0_56 = arith.constant 0 : index
    %48 = vector.load %arg14[%c0_55, %c0_56] : memref<8x100xf32, #tpu.memory_space<vmem>>, vector<8x78xf32>
    %c0_57 = arith.constant 0 : index
    %c0_58 = arith.constant 0 : index
    %49 = vector.load %arg15[%c0_57, %c0_58] : memref<72x78xf32, #tpu.memory_space<vmem>>, vector<8x78xf32>
    tpu.vector_store %arg15[%c0_57, %c0_58], %48 {strides = array<i32>} : memref<72x78xf32, #tpu.memory_space<vmem>>, vector<8x78xf32>,
    %c0_59 = arith.constant 0 : index
    %c1_60 = arith.constant 1 : index
    %50 = vector.load %arg14[%c0_59, %c1_60] : memref<8x100xf32, #tpu.memory_space<vmem>>, vector<8x78xf32>
    %c8_61 = arith.constant 8 : index
    %c0_62 = arith.constant 0 : index
    %51 = vector.load %arg15[%c8_61, %c0_62] : memref<72x78xf32, #tpu.memory_space<vmem>>, vector<8x78xf32>
    tpu.vector_store %arg15[%c8_61, %c0_62], %50 {strides = array<i32>} : memref<72x78xf32, #tpu.memory_space<vmem>>, vector<8x78xf32>,
    %c0_63 = arith.constant 0 : index
    %c2_64 = arith.constant 2 : index
    %52 = vector.load %arg14[%c0_63, %c2_64] : memref<8x100xf32, #tpu.memory_space<vmem>>, vector<8x78xf32>
    %c16_65 = arith.constant 16 : index
    %c0_66 = arith.constant 0 : index
    %53 = vector.load %arg15[%c16_65, %c0_66] : memref<72x78xf32, #tpu.memory_space<vmem>>, vector<8x78xf32>
    tpu.vector_store %arg15[%c16_65, %c0_66], %52 {strides = array<i32>} : memref<72x78xf32, #tpu.memory_space<vmem>>, vector<8x78xf32>,
    %c0_67 = arith.constant 0 : index
    %c10 = arith.constant 10 : index
    %54 = vector.load %arg14[%c0_67, %c10] : memref<8x100xf32, #tpu.memory_space<vmem>>, vector<8x78xf32>
    %c24_68 = arith.constant 24 : index
    %c0_69 = arith.constant 0 : index
    %55 = vector.load %arg15[%c24_68, %c0_69] : memref<72x78xf32, #tpu.memory_space<vmem>>, vector<8x78xf32>
    tpu.vector_store %arg15[%c24_68, %c0_69], %54 {strides = array<i32>} : memref<72x78xf32, #tpu.memory_space<vmem>>, vector<8x78xf32>,
    %c0_70 = arith.constant 0 : index
    %c11 = arith.constant 11 : index
    %56 = vector.load %arg14[%c0_70, %c11] : memref<8x100xf32, #tpu.memory_space<vmem>>, vector<8x78xf32>
    %c32_71 = arith.constant 32 : index
    %c0_72 = arith.constant 0 : index
    %57 = vector.load %arg15[%c32_71, %c0_72] : memref<72x78xf32, #tpu.memory_space<vmem>>, vector<8x78xf32>
    tpu.vector_store %arg15[%c32_71, %c0_72], %56 {strides = array<i32>} : memref<72x78xf32, #tpu.memory_space<vmem>>, vector<8x78xf32>,
    %c0_73 = arith.constant 0 : index
    %c12_74 = arith.constant 12 : index
    %58 = vector.load %arg14[%c0_73, %c12_74] : memref<8x100xf32, #tpu.memory_space<vmem>>, vector<8x78xf32>
    %c40 = arith.constant 40 : index
    %c0_75 = arith.constant 0 : index
    %59 = vector.load %arg15[%c40, %c0_75] : memref<72x78xf32, #tpu.memory_space<vmem>>, vector<8x78xf32>
    tpu.vector_store %arg15[%c40, %c0_75], %58 {strides = array<i32>} : memref<72x78xf32, #tpu.memory_space<vmem>>, vector<8x78xf32>,
    %c0_76 = arith.constant 0 : index
    %c20_77 = arith.constant 20 : index
    %60 = vector.load %arg14[%c0_76, %c20_77] : memref<8x100xf32, #tpu.memory_space<vmem>>, vector<8x78xf32>
    %c48 = arith.constant 48 : index
    %c0_78 = arith.constant 0 : index
    %61 = vector.load %arg15[%c48, %c0_78] : memref<72x78xf32, #tpu.memory_space<vmem>>, vector<8x78xf32>
    tpu.vector_store %arg15[%c48, %c0_78], %60 {strides = array<i32>} : memref<72x78xf32, #tpu.memory_space<vmem>>, vector<8x78xf32>,
    %c0_79 = arith.constant 0 : index
    %c21 = arith.constant 21 : index
    %62 = vector.load %arg14[%c0_79, %c21] : memref<8x100xf32, #tpu.memory_space<vmem>>, vector<8x78xf32>
    %c56 = arith.constant 56 : index
    %c0_80 = arith.constant 0 : index
    %63 = vector.load %arg15[%c56, %c0_80] : memref<72x78xf32, #tpu.memory_space<vmem>>, vector<8x78xf32>
    tpu.vector_store %arg15[%c56, %c0_80], %62 {strides = array<i32>} : memref<72x78xf32, #tpu.memory_space<vmem>>, vector<8x78xf32>,
    %c0_81 = arith.constant 0 : index
    %c22 = arith.constant 22 : index
    %64 = vector.load %arg14[%c0_81, %c22] : memref<8x100xf32, #tpu.memory_space<vmem>>, vector<8x78xf32>
    %c64 = arith.constant 64 : index
    %c0_82 = arith.constant 0 : index
    %65 = vector.load %arg15[%c64, %c0_82] : memref<72x78xf32, #tpu.memory_space<vmem>>, vector<8x78xf32>
    tpu.vector_store %arg15[%c64, %c0_82], %64 {strides = array<i32>} : memref<72x78xf32, #tpu.memory_space<vmem>>, vector<8x78xf32>,
    %c0_83 = arith.constant 0 : index
    %c0_84 = arith.constant 0 : index
    %66 = vector.load %arg7[%c0_83, %c0_84] : memref<16x72xbf16, #tpu.memory_space<vmem>>, vector<16x72xbf16>
    %c0_85 = arith.constant 0 : index
    %c0_86 = arith.constant 0 : index
    %67 = vector.load %arg15[%c0_85, %c0_86] : memref<72x78xf32, #tpu.memory_space<vmem>>, vector<72x78xf32>
    %68 = arith.truncf %67 : vector<72x78xf32> to vector<72x78xbf16>
    %cst_87 = arith.constant dense<0.000000e+00> : vector<16x78xf32>
    %69 = tpu.matmul %66, %68, %cst_87 {dimension_numbers = #tpu.dot_dimension_numbers<[1], [0], [0], [1], [0, 0, 1, 1], [], []>} : vector<16x72xbf16>, vector<72x78xbf16>, vector<16x78xf32> -> vector<16x78xf32>
    %c0_88 = arith.constant 0 : index
    %c0_89 = arith.constant 0 : index
    %70 = vector.load %arg8[%c0_88, %c0_89] : memref<16x2xf32, #tpu.memory_space<vmem>>, vector<16x1xf32>
    %71 = vector.broadcast %70 : vector<16x1xf32> to vector<16x78xf32>
    %72 = arith.mulf %69, %71 : vector<16x78xf32>
    %c0_90 = arith.constant 0 : index
    %c1_91 = arith.constant 1 : index
    %73 = vector.load %arg8[%c0_90, %c1_91] : memref<16x2xf32, #tpu.memory_space<vmem>>, vector<16x1xf32>
    %74 = vector.broadcast %73 : vector<16x1xf32> to vector<16x78xf32>
    %75 = arith.addf %72, %74 : vector<16x78xf32>
    %cst_92 = arith.constant 0.000000e+00 : f32
    %76 = vector.broadcast %cst_92 : f32 to vector<16x78xf32>
    %77 = arith.maximumf %75, %76 : vector<16x78xf32>
    %c0_93 = arith.constant 0 : index
    %c0_94 = arith.constant 0 : index
    %78 = vector.load %arg16[%c0_93, %c0_94] : memref<16x78xf32, #tpu.memory_space<vmem>>, vector<16x78xf32>
    tpu.vector_store %arg16[%c0_93, %c0_94], %77 {strides = array<i32>} : memref<16x78xf32, #tpu.memory_space<vmem>>, vector<16x78xf32>,
    %c0_95 = arith.constant 0 : index
    %c0_96 = arith.constant 0 : index
    %79 = vector.load %arg16[%c0_95, %c0_96] : memref<16x78xf32, #tpu.memory_space<vmem>>, vector<16x67xf32>
    %c0_97 = arith.constant 0 : index
    %c1_98 = arith.constant 1 : index
    %80 = vector.load %arg16[%c0_97, %c1_98] : memref<16x78xf32, #tpu.memory_space<vmem>>, vector<16x67xf32>
    %81 = arith.maximumf %79, %80 : vector<16x67xf32>
    %c0_99 = arith.constant 0 : index
    %c10_100 = arith.constant 10 : index
    %82 = vector.load %arg16[%c0_99, %c10_100] : memref<16x78xf32, #tpu.memory_space<vmem>>, vector<16x67xf32>
    %83 = arith.maximumf %81, %82 : vector<16x67xf32>
    %c0_101 = arith.constant 0 : index
    %c11_102 = arith.constant 11 : index
    %84 = vector.load %arg16[%c0_101, %c11_102] : memref<16x78xf32, #tpu.memory_space<vmem>>, vector<16x67xf32>
    %85 = arith.maximumf %83, %84 : vector<16x67xf32>
    %c0_103 = arith.constant 0 : index
    %c0_104 = arith.constant 0 : index
    %86 = vector.load %arg9[%c0_103, %c0_104] : memref<67x16xf32, #tpu.memory_space<vmem>>, vector<67x16xf32>
    %cst_105 = arith.constant dense<0.000000e+00> : vector<16x16xf32>
    %87 = tpu.matmul %85, %86, %cst_105 {dimension_numbers = #tpu.dot_dimension_numbers<[1], [0], [0], [1], [0, 0, 1, 1], [], []>} : vector<16x67xf32>, vector<67x16xf32>, vector<16x16xf32> -> vector<16x16xf32>
    %c0_106 = arith.constant 0 : index
    %c0_107 = arith.constant 0 : index
    %c0_108 = arith.constant 0 : index
    %88 = vector.load %arg10[%c0_106, %c0_107, %c0_108] : memref<1x16x16xf32, #tpu.memory_space<vmem>>, vector<1x16x16xf32>
    %89 = vector.shape_cast %88 : vector<1x16x16xf32> to vector<16x16xf32>
    %90 = vector.shape_cast %87 : vector<16x16xf32> to vector<1x16x16xf32>
    tpu.vector_store %arg10[%c0_106, %c0_107, %c0_108], %90 {strides = array<i32>} : memref<1x16x16xf32, #tpu.memory_space<vmem>>, vector<1x16x16xf32>,
    return
  }
  func.func @transform_0(%arg0: i32) -> (i32, i32, i32) {
    %c0_i32 = arith.constant 0 : i32
    %c0_i32_0 = arith.constant 0 : i32
    %c0_i32_1 = arith.constant 0 : i32
    return %arg0, %c0_i32, %c0_i32_0 : i32, i32, i32
  }
  func.func @transform_1(%arg0: i32) -> (i32, i32) {
    %c0_i32 = arith.constant 0 : i32
    %c0_i32_0 = arith.constant 0 : i32
    %c0_i32_1 = arith.constant 0 : i32
    return %c0_i32, %c0_i32_0 : i32, i32
  }
  func.func @transform_2(%arg0: i32) -> (i32, i32) {
    %c0_i32 = arith.constant 0 : i32
    %c0_i32_0 = arith.constant 0 : i32
    %c0_i32_1 = arith.constant 0 : i32
    return %c0_i32, %c0_i32_0 : i32, i32
  }
  func.func @transform_3(%arg0: i32) -> (i32, i32) {
    %c0_i32 = arith.constant 0 : i32
    %c0_i32_0 = arith.constant 0 : i32
    %c0_i32_1 = arith.constant 0 : i32
    return %c0_i32, %c0_i32_0 : i32, i32
  }
  func.func @transform_4(%arg0: i32) -> (i32, i32) {
    %c0_i32 = arith.constant 0 : i32
    %c0_i32_0 = arith.constant 0 : i32
    %c0_i32_1 = arith.constant 0 : i32
    return %c0_i32, %c0_i32_0 : i32, i32
  }
  func.func @transform_5(%arg0: i32) -> (i32, i32) {
    %c0_i32 = arith.constant 0 : i32
    %c0_i32_0 = arith.constant 0 : i32
    %c0_i32_1 = arith.constant 0 : i32
    return %c0_i32, %c0_i32_0 : i32, i32
  }
  func.func @transform_6(%arg0: i32) -> (i32, i32) {
    %c0_i32 = arith.constant 0 : i32
    %c0_i32_0 = arith.constant 0 : i32
    %c0_i32_1 = arith.constant 0 : i32
    return %c0_i32, %c0_i32_0 : i32, i32
  }
  func.func @transform_7(%arg0: i32) -> (i32, i32) {
    %c0_i32 = arith.constant 0 : i32
    %c0_i32_0 = arith.constant 0 : i32
    %c0_i32_1 = arith.constant 0 : i32
    return %c0_i32, %c0_i32_0 : i32, i32
  }
  func.func @transform_8(%arg0: i32) -> (i32, i32) {
    %c0_i32 = arith.constant 0 : i32
    %c0_i32_0 = arith.constant 0 : i32
    %c0_i32_1 = arith.constant 0 : i32
    return %c0_i32, %c0_i32_0 : i32, i32
  }
  func.func @transform_9(%arg0: i32) -> (i32, i32, i32) {
    %c0_i32 = arith.constant 0 : i32
    %c0_i32_0 = arith.constant 0 : i32
    %c0_i32_1 = arith.constant 0 : i32
    return %arg0, %c0_i32, %c0_i32_0 : i32, i32, i32
  }
}

module attributes {stable_mosaic.version = 11 : i64} {
  func.func @_conv_stack_kernel(%arg0: i32, %arg1: memref<1x16x16xf32, #tpu.memory_space<vmem>>, %arg2: memref<16x100xf32, #tpu.memory_space<vmem>>, %arg3: memref<8x144xbf16, #tpu.memory_space<vmem>>, %arg4: memref<8x2xf32, #tpu.memory_space<vmem>>, %arg5: memref<78x64xf32, #tpu.memory_space<vmem>>, %arg6: memref<64x324xf32, #tpu.memory_space<vmem>>, %arg7: memref<4x72xbf16, #tpu.memory_space<vmem>>, %arg8: memref<4x2xf32, #tpu.memory_space<vmem>>, %arg9: memref<286x256xf32, #tpu.memory_space<vmem>>, %arg10: memref<1x4x256xf32, #tpu.memory_space<vmem>>, %arg11: memref<16x100xf32, #tpu.memory_space<vmem>>, %arg12: memref<144x78xf32, #tpu.memory_space<vmem>>, %arg13: memref<8x324xf32, #tpu.memory_space<vmem>>, %arg14: memref<72x286xf32, #tpu.memory_space<vmem>>) attributes {dimension_semantics = [#tpu.dimension_semantics<parallel>], iteration_bounds = array<i64: 2>, scalar_prefetch = 0 : i64, scratch_operands = 4 : i64, tpu.core_type = #tpu.core_type<tc>, window_params = [{transform_indices = @transform_0, window_bounds = array<i64: 1, 16, 16>}, {pipeline_mode = #tpu.pipeline_mode<synchronous>, transform_indices = @transform_1, window_bounds = array<i64: 16, 100>}, {pipeline_mode = #tpu.pipeline_mode<synchronous>, transform_indices = @transform_2, window_bounds = array<i64: 8, 144>}, {pipeline_mode = #tpu.pipeline_mode<synchronous>, transform_indices = @transform_3, window_bounds = array<i64: 8, 2>}, {pipeline_mode = #tpu.pipeline_mode<synchronous>, transform_indices = @transform_4, window_bounds = array<i64: 78, 64>}, {pipeline_mode = #tpu.pipeline_mode<synchronous>, transform_indices = @transform_5, window_bounds = array<i64: 64, 324>}, {pipeline_mode = #tpu.pipeline_mode<synchronous>, transform_indices = @transform_6, window_bounds = array<i64: 4, 72>}, {pipeline_mode = #tpu.pipeline_mode<synchronous>, transform_indices = @transform_7, window_bounds = array<i64: 4, 2>}, {pipeline_mode = #tpu.pipeline_mode<synchronous>, transform_indices = @transform_8, window_bounds = array<i64: 286, 256>}, {transform_indices = @transform_9, window_bounds = array<i64: 1, 4, 256>}]} {
    %c0 = arith.constant 0 : index
    %c0_0 = arith.constant 0 : index
    %c0_1 = arith.constant 0 : index
    %0 = vector.load %arg1[%c0, %c0_0, %c0_1] : memref<1x16x16xf32, #tpu.memory_space<vmem>>, vector<1x16x16xf32>
    %1 = vector.shape_cast %0 : vector<1x16x16xf32> to vector<16x16xf32>
    %c0_2 = arith.constant 0 : index
    %c0_3 = arith.constant 0 : index
    %2 = vector.load %arg2[%c0_2, %c0_3] : memref<16x100xf32, #tpu.memory_space<vmem>>, vector<16x100xf32>
    %cst = arith.constant dense<0.000000e+00> : vector<16x100xf32>
    %3 = tpu.matmul %1, %2, %cst {dimension_numbers = #tpu.dot_dimension_numbers<[1], [0], [0], [1], [0, 0, 1, 1], [], []>} : vector<16x16xf32>, vector<16x100xf32>, vector<16x100xf32> -> vector<16x100xf32>
    %c0_4 = arith.constant 0 : index
    %c0_5 = arith.constant 0 : index
    %4 = vector.load %arg11[%c0_4, %c0_5] : memref<16x100xf32, #tpu.memory_space<vmem>>, vector<16x100xf32>
    tpu.vector_store %arg11[%c0_4, %c0_5], %3 {strides = array<i32>} : memref<16x100xf32, #tpu.memory_space<vmem>>, vector<16x100xf32>,
    %c0_6 = arith.constant 0 : index
    %c0_7 = arith.constant 0 : index
    %5 = vector.load %arg11[%c0_6, %c0_7] : memref<16x100xf32, #tpu.memory_space<vmem>>, vector<16x78xf32>
    %c0_8 = arith.constant 0 : index
    %c0_9 = arith.constant 0 : index
    %6 = vector.load %arg12[%c0_8, %c0_9] : memref<144x78xf32, #tpu.memory_space<vmem>>, vector<16x78xf32>
    tpu.vector_store %arg12[%c0_8, %c0_9], %5 {strides = array<i32>} : memref<144x78xf32, #tpu.memory_space<vmem>>, vector<16x78xf32>,
    %c0_10 = arith.constant 0 : index
    %c1 = arith.constant 1 : index
    %7 = vector.load %arg11[%c0_10, %c1] : memref<16x100xf32, #tpu.memory_space<vmem>>, vector<16x78xf32>
    %c16 = arith.constant 16 : index
    %c0_11 = arith.constant 0 : index
    %8 = vector.load %arg12[%c16, %c0_11] : memref<144x78xf32, #tpu.memory_space<vmem>>, vector<16x78xf32>
    tpu.vector_store %arg12[%c16, %c0_11], %7 {strides = array<i32>} : memref<144x78xf32, #tpu.memory_space<vmem>>, vector<16x78xf32>,
    %c0_12 = arith.constant 0 : index
    %c2 = arith.constant 2 : index
    %9 = vector.load %arg11[%c0_12, %c2] : memref<16x100xf32, #tpu.memory_space<vmem>>, vector<16x78xf32>
    %c32 = arith.constant 32 : index
    %c0_13 = arith.constant 0 : index
    %10 = vector.load %arg12[%c32, %c0_13] : memref<144x78xf32, #tpu.memory_space<vmem>>, vector<16x78xf32>
    tpu.vector_store %arg12[%c32, %c0_13], %9 {strides = array<i32>} : memref<144x78xf32, #tpu.memory_space<vmem>>, vector<16x78xf32>,
    %c0_14 = arith.constant 0 : index
    %c10 = arith.constant 10 : index
    %11 = vector.load %arg11[%c0_14, %c10] : memref<16x100xf32, #tpu.memory_space<vmem>>, vector<16x78xf32>
    %c48 = arith.constant 48 : index
    %c0_15 = arith.constant 0 : index
    %12 = vector.load %arg12[%c48, %c0_15] : memref<144x78xf32, #tpu.memory_space<vmem>>, vector<16x78xf32>
    tpu.vector_store %arg12[%c48, %c0_15], %11 {strides = array<i32>} : memref<144x78xf32, #tpu.memory_space<vmem>>, vector<16x78xf32>,
    %c0_16 = arith.constant 0 : index
    %c11 = arith.constant 11 : index
    %13 = vector.load %arg11[%c0_16, %c11] : memref<16x100xf32, #tpu.memory_space<vmem>>, vector<16x78xf32>
    %c64 = arith.constant 64 : index
    %c0_17 = arith.constant 0 : index
    %14 = vector.load %arg12[%c64, %c0_17] : memref<144x78xf32, #tpu.memory_space<vmem>>, vector<16x78xf32>
    tpu.vector_store %arg12[%c64, %c0_17], %13 {strides = array<i32>} : memref<144x78xf32, #tpu.memory_space<vmem>>, vector<16x78xf32>,
    %c0_18 = arith.constant 0 : index
    %c12 = arith.constant 12 : index
    %15 = vector.load %arg11[%c0_18, %c12] : memref<16x100xf32, #tpu.memory_space<vmem>>, vector<16x78xf32>
    %c80 = arith.constant 80 : index
    %c0_19 = arith.constant 0 : index
    %16 = vector.load %arg12[%c80, %c0_19] : memref<144x78xf32, #tpu.memory_space<vmem>>, vector<16x78xf32>
    tpu.vector_store %arg12[%c80, %c0_19], %15 {strides = array<i32>} : memref<144x78xf32, #tpu.memory_space<vmem>>, vector<16x78xf32>,
    %c0_20 = arith.constant 0 : index
    %c20 = arith.constant 20 : index
    %17 = vector.load %arg11[%c0_20, %c20] : memref<16x100xf32, #tpu.memory_space<vmem>>, vector<16x78xf32>
    %c96 = arith.constant 96 : index
    %c0_21 = arith.constant 0 : index
    %18 = vector.load %arg12[%c96, %c0_21] : memref<144x78xf32, #tpu.memory_space<vmem>>, vector<16x78xf32>
    tpu.vector_store %arg12[%c96, %c0_21], %17 {strides = array<i32>} : memref<144x78xf32, #tpu.memory_space<vmem>>, vector<16x78xf32>,
    %c0_22 = arith.constant 0 : index
    %c21 = arith.constant 21 : index
    %19 = vector.load %arg11[%c0_22, %c21] : memref<16x100xf32, #tpu.memory_space<vmem>>, vector<16x78xf32>
    %c112 = arith.constant 112 : index
    %c0_23 = arith.constant 0 : index
    %20 = vector.load %arg12[%c112, %c0_23] : memref<144x78xf32, #tpu.memory_space<vmem>>, vector<16x78xf32>
    tpu.vector_store %arg12[%c112, %c0_23], %19 {strides = array<i32>} : memref<144x78xf32, #tpu.memory_space<vmem>>, vector<16x78xf32>,
    %c0_24 = arith.constant 0 : index
    %c22 = arith.constant 22 : index
    %21 = vector.load %arg11[%c0_24, %c22] : memref<16x100xf32, #tpu.memory_space<vmem>>, vector<16x78xf32>
    %c128 = arith.constant 128 : index
    %c0_25 = arith.constant 0 : index
    %22 = vector.load %arg12[%c128, %c0_25] : memref<144x78xf32, #tpu.memory_space<vmem>>, vector<16x78xf32>
    tpu.vector_store %arg12[%c128, %c0_25], %21 {strides = array<i32>} : memref<144x78xf32, #tpu.memory_space<vmem>>, vector<16x78xf32>,
    %c0_26 = arith.constant 0 : index
    %c0_27 = arith.constant 0 : index
    %23 = vector.load %arg3[%c0_26, %c0_27] : memref<8x144xbf16, #tpu.memory_space<vmem>>, vector<8x144xbf16>
    %c0_28 = arith.constant 0 : index
    %c0_29 = arith.constant 0 : index
    %24 = vector.load %arg12[%c0_28, %c0_29] : memref<144x78xf32, #tpu.memory_space<vmem>>, vector<144x78xf32>
    %25 = arith.truncf %24 : vector<144x78xf32> to vector<144x78xbf16>
    %cst_30 = arith.constant dense<0.000000e+00> : vector<8x78xf32>
    %26 = tpu.matmul %23, %25, %cst_30 {dimension_numbers = #tpu.dot_dimension_numbers<[1], [0], [0], [1], [0, 0, 1, 1], [], []>} : vector<8x144xbf16>, vector<144x78xbf16>, vector<8x78xf32> -> vector<8x78xf32>
    %c0_31 = arith.constant 0 : index
    %c0_32 = arith.constant 0 : index
    %27 = vector.load %arg4[%c0_31, %c0_32] : memref<8x2xf32, #tpu.memory_space<vmem>>, vector<8x1xf32>
    %28 = vector.broadcast %27 : vector<8x1xf32> to vector<8x78xf32>
    %29 = arith.mulf %26, %28 : vector<8x78xf32>
    %c0_33 = arith.constant 0 : index
    %c1_34 = arith.constant 1 : index
    %30 = vector.load %arg4[%c0_33, %c1_34] : memref<8x2xf32, #tpu.memory_space<vmem>>, vector<8x1xf32>
    %31 = vector.broadcast %30 : vector<8x1xf32> to vector<8x78xf32>
    %32 = arith.addf %29, %31 : vector<8x78xf32>
    %cst_35 = arith.constant 0.000000e+00 : f32
    %33 = vector.broadcast %cst_35 : f32 to vector<8x78xf32>
    %34 = arith.maximumf %32, %33 : vector<8x78xf32>
    %c0_36 = arith.constant 0 : index
    %c0_37 = arith.constant 0 : index
    %35 = vector.load %arg5[%c0_36, %c0_37] : memref<78x64xf32, #tpu.memory_space<vmem>>, vector<78x64xf32>
    %cst_38 = arith.constant dense<0.000000e+00> : vector<8x64xf32>
    %36 = tpu.matmul %34, %35, %cst_38 {dimension_numbers = #tpu.dot_dimension_numbers<[1], [0], [0], [1], [0, 0, 1, 1], [], []>} : vector<8x78xf32>, vector<78x64xf32>, vector<8x64xf32> -> vector<8x64xf32>
    %c0_39 = arith.constant 0 : index
    %c0_40 = arith.constant 0 : index
    %37 = vector.load %arg6[%c0_39, %c0_40] : memref<64x324xf32, #tpu.memory_space<vmem>>, vector<64x324xf32>
    %cst_41 = arith.constant dense<0.000000e+00> : vector<8x324xf32>
    %38 = tpu.matmul %36, %37, %cst_41 {dimension_numbers = #tpu.dot_dimension_numbers<[1], [0], [0], [1], [0, 0, 1, 1], [], []>} : vector<8x64xf32>, vector<64x324xf32>, vector<8x324xf32> -> vector<8x324xf32>
    %c0_42 = arith.constant 0 : index
    %c0_43 = arith.constant 0 : index
    %39 = vector.load %arg13[%c0_42, %c0_43] : memref<8x324xf32, #tpu.memory_space<vmem>>, vector<8x324xf32>
    tpu.vector_store %arg13[%c0_42, %c0_43], %38 {strides = array<i32>} : memref<8x324xf32, #tpu.memory_space<vmem>>, vector<8x324xf32>,
    %c0_44 = arith.constant 0 : index
    %c0_45 = arith.constant 0 : index
    %40 = vector.load %arg13[%c0_44, %c0_45] : memref<8x324xf32, #tpu.memory_space<vmem>>, vector<8x286xf32>
    %c0_46 = arith.constant 0 : index
    %c0_47 = arith.constant 0 : index
    %41 = vector.load %arg14[%c0_46, %c0_47] : memref<72x286xf32, #tpu.memory_space<vmem>>, vector<8x286xf32>
    tpu.vector_store %arg14[%c0_46, %c0_47], %40 {strides = array<i32>} : memref<72x286xf32, #tpu.memory_space<vmem>>, vector<8x286xf32>,
    %c0_48 = arith.constant 0 : index
    %c1_49 = arith.constant 1 : index
    %42 = vector.load %arg13[%c0_48, %c1_49] : memref<8x324xf32, #tpu.memory_space<vmem>>, vector<8x286xf32>
    %c8 = arith.constant 8 : index
    %c0_50 = arith.constant 0 : index
    %43 = vector.load %arg14[%c8, %c0_50] : memref<72x286xf32, #tpu.memory_space<vmem>>, vector<8x286xf32>
    tpu.vector_store %arg14[%c8, %c0_50], %42 {strides = array<i32>} : memref<72x286xf32, #tpu.memory_space<vmem>>, vector<8x286xf32>,
    %c0_51 = arith.constant 0 : index
    %c2_52 = arith.constant 2 : index
    %44 = vector.load %arg13[%c0_51, %c2_52] : memref<8x324xf32, #tpu.memory_space<vmem>>, vector<8x286xf32>
    %c16_53 = arith.constant 16 : index
    %c0_54 = arith.constant 0 : index
    %45 = vector.load %arg14[%c16_53, %c0_54] : memref<72x286xf32, #tpu.memory_space<vmem>>, vector<8x286xf32>
    tpu.vector_store %arg14[%c16_53, %c0_54], %44 {strides = array<i32>} : memref<72x286xf32, #tpu.memory_space<vmem>>, vector<8x286xf32>,
    %c0_55 = arith.constant 0 : index
    %c18 = arith.constant 18 : index
    %46 = vector.load %arg13[%c0_55, %c18] : memref<8x324xf32, #tpu.memory_space<vmem>>, vector<8x286xf32>
    %c24 = arith.constant 24 : index
    %c0_56 = arith.constant 0 : index
    %47 = vector.load %arg14[%c24, %c0_56] : memref<72x286xf32, #tpu.memory_space<vmem>>, vector<8x286xf32>
    tpu.vector_store %arg14[%c24, %c0_56], %46 {strides = array<i32>} : memref<72x286xf32, #tpu.memory_space<vmem>>, vector<8x286xf32>,
    %c0_57 = arith.constant 0 : index
    %c19 = arith.constant 19 : index
    %48 = vector.load %arg13[%c0_57, %c19] : memref<8x324xf32, #tpu.memory_space<vmem>>, vector<8x286xf32>
    %c32_58 = arith.constant 32 : index
    %c0_59 = arith.constant 0 : index
    %49 = vector.load %arg14[%c32_58, %c0_59] : memref<72x286xf32, #tpu.memory_space<vmem>>, vector<8x286xf32>
    tpu.vector_store %arg14[%c32_58, %c0_59], %48 {strides = array<i32>} : memref<72x286xf32, #tpu.memory_space<vmem>>, vector<8x286xf32>,
    %c0_60 = arith.constant 0 : index
    %c20_61 = arith.constant 20 : index
    %50 = vector.load %arg13[%c0_60, %c20_61] : memref<8x324xf32, #tpu.memory_space<vmem>>, vector<8x286xf32>
    %c40 = arith.constant 40 : index
    %c0_62 = arith.constant 0 : index
    %51 = vector.load %arg14[%c40, %c0_62] : memref<72x286xf32, #tpu.memory_space<vmem>>, vector<8x286xf32>
    tpu.vector_store %arg14[%c40, %c0_62], %50 {strides = array<i32>} : memref<72x286xf32, #tpu.memory_space<vmem>>, vector<8x286xf32>,
    %c0_63 = arith.constant 0 : index
    %c36 = arith.constant 36 : index
    %52 = vector.load %arg13[%c0_63, %c36] : memref<8x324xf32, #tpu.memory_space<vmem>>, vector<8x286xf32>
    %c48_64 = arith.constant 48 : index
    %c0_65 = arith.constant 0 : index
    %53 = vector.load %arg14[%c48_64, %c0_65] : memref<72x286xf32, #tpu.memory_space<vmem>>, vector<8x286xf32>
    tpu.vector_store %arg14[%c48_64, %c0_65], %52 {strides = array<i32>} : memref<72x286xf32, #tpu.memory_space<vmem>>, vector<8x286xf32>,
    %c0_66 = arith.constant 0 : index
    %c37 = arith.constant 37 : index
    %54 = vector.load %arg13[%c0_66, %c37] : memref<8x324xf32, #tpu.memory_space<vmem>>, vector<8x286xf32>
    %c56 = arith.constant 56 : index
    %c0_67 = arith.constant 0 : index
    %55 = vector.load %arg14[%c56, %c0_67] : memref<72x286xf32, #tpu.memory_space<vmem>>, vector<8x286xf32>
    tpu.vector_store %arg14[%c56, %c0_67], %54 {strides = array<i32>} : memref<72x286xf32, #tpu.memory_space<vmem>>, vector<8x286xf32>,
    %c0_68 = arith.constant 0 : index
    %c38 = arith.constant 38 : index
    %56 = vector.load %arg13[%c0_68, %c38] : memref<8x324xf32, #tpu.memory_space<vmem>>, vector<8x286xf32>
    %c64_69 = arith.constant 64 : index
    %c0_70 = arith.constant 0 : index
    %57 = vector.load %arg14[%c64_69, %c0_70] : memref<72x286xf32, #tpu.memory_space<vmem>>, vector<8x286xf32>
    tpu.vector_store %arg14[%c64_69, %c0_70], %56 {strides = array<i32>} : memref<72x286xf32, #tpu.memory_space<vmem>>, vector<8x286xf32>,
    %c0_71 = arith.constant 0 : index
    %c0_72 = arith.constant 0 : index
    %58 = vector.load %arg7[%c0_71, %c0_72] : memref<4x72xbf16, #tpu.memory_space<vmem>>, vector<4x72xbf16>
    %c0_73 = arith.constant 0 : index
    %c0_74 = arith.constant 0 : index
    %59 = vector.load %arg14[%c0_73, %c0_74] : memref<72x286xf32, #tpu.memory_space<vmem>>, vector<72x286xf32>
    %60 = arith.truncf %59 : vector<72x286xf32> to vector<72x286xbf16>
    %cst_75 = arith.constant dense<0.000000e+00> : vector<4x286xf32>
    %61 = tpu.matmul %58, %60, %cst_75 {dimension_numbers = #tpu.dot_dimension_numbers<[1], [0], [0], [1], [0, 0, 1, 1], [], []>} : vector<4x72xbf16>, vector<72x286xbf16>, vector<4x286xf32> -> vector<4x286xf32>
    %c0_76 = arith.constant 0 : index
    %c0_77 = arith.constant 0 : index
    %62 = vector.load %arg8[%c0_76, %c0_77] : memref<4x2xf32, #tpu.memory_space<vmem>>, vector<4x1xf32>
    %63 = vector.broadcast %62 : vector<4x1xf32> to vector<4x286xf32>
    %64 = arith.mulf %61, %63 : vector<4x286xf32>
    %c0_78 = arith.constant 0 : index
    %c1_79 = arith.constant 1 : index
    %65 = vector.load %arg8[%c0_78, %c1_79] : memref<4x2xf32, #tpu.memory_space<vmem>>, vector<4x1xf32>
    %66 = vector.broadcast %65 : vector<4x1xf32> to vector<4x286xf32>
    %67 = arith.addf %64, %66 : vector<4x286xf32>
    %cst_80 = arith.constant 0.000000e+00 : f32
    %68 = vector.broadcast %cst_80 : f32 to vector<4x286xf32>
    %69 = arith.maximumf %67, %68 : vector<4x286xf32>
    %c0_81 = arith.constant 0 : index
    %c0_82 = arith.constant 0 : index
    %70 = vector.load %arg9[%c0_81, %c0_82] : memref<286x256xf32, #tpu.memory_space<vmem>>, vector<286x256xf32>
    %cst_83 = arith.constant dense<0.000000e+00> : vector<4x256xf32>
    %71 = tpu.matmul %69, %70, %cst_83 {dimension_numbers = #tpu.dot_dimension_numbers<[1], [0], [0], [1], [0, 0, 1, 1], [], []>} : vector<4x286xf32>, vector<286x256xf32>, vector<4x256xf32> -> vector<4x256xf32>
    %c0_84 = arith.constant 0 : index
    %c0_85 = arith.constant 0 : index
    %c0_86 = arith.constant 0 : index
    %72 = vector.load %arg10[%c0_84, %c0_85, %c0_86] : memref<1x4x256xf32, #tpu.memory_space<vmem>>, vector<1x4x256xf32>
    %73 = vector.shape_cast %72 : vector<1x4x256xf32> to vector<4x256xf32>
    %74 = vector.shape_cast %71 : vector<4x256xf32> to vector<1x4x256xf32>
    tpu.vector_store %arg10[%c0_84, %c0_85, %c0_86], %74 {strides = array<i32>} : memref<1x4x256xf32, #tpu.memory_space<vmem>>, vector<1x4x256xf32>,
    return
  }
  func.func @transform_0(%arg0: i32) -> (i32, i32, i32) {
    %c0_i32 = arith.constant 0 : i32
    %c0_i32_0 = arith.constant 0 : i32
    %c0_i32_1 = arith.constant 0 : i32
    return %arg0, %c0_i32, %c0_i32_0 : i32, i32, i32
  }
  func.func @transform_1(%arg0: i32) -> (i32, i32) {
    %c0_i32 = arith.constant 0 : i32
    %c0_i32_0 = arith.constant 0 : i32
    %c0_i32_1 = arith.constant 0 : i32
    return %c0_i32, %c0_i32_0 : i32, i32
  }
  func.func @transform_2(%arg0: i32) -> (i32, i32) {
    %c0_i32 = arith.constant 0 : i32
    %c0_i32_0 = arith.constant 0 : i32
    %c0_i32_1 = arith.constant 0 : i32
    return %c0_i32, %c0_i32_0 : i32, i32
  }
  func.func @transform_3(%arg0: i32) -> (i32, i32) {
    %c0_i32 = arith.constant 0 : i32
    %c0_i32_0 = arith.constant 0 : i32
    %c0_i32_1 = arith.constant 0 : i32
    return %c0_i32, %c0_i32_0 : i32, i32
  }
  func.func @transform_4(%arg0: i32) -> (i32, i32) {
    %c0_i32 = arith.constant 0 : i32
    %c0_i32_0 = arith.constant 0 : i32
    %c0_i32_1 = arith.constant 0 : i32
    return %c0_i32, %c0_i32_0 : i32, i32
  }
  func.func @transform_5(%arg0: i32) -> (i32, i32) {
    %c0_i32 = arith.constant 0 : i32
    %c0_i32_0 = arith.constant 0 : i32
    %c0_i32_1 = arith.constant 0 : i32
    return %c0_i32, %c0_i32_0 : i32, i32
  }
  func.func @transform_6(%arg0: i32) -> (i32, i32) {
    %c0_i32 = arith.constant 0 : i32
    %c0_i32_0 = arith.constant 0 : i32
    %c0_i32_1 = arith.constant 0 : i32
    return %c0_i32, %c0_i32_0 : i32, i32
  }
  func.func @transform_7(%arg0: i32) -> (i32, i32) {
    %c0_i32 = arith.constant 0 : i32
    %c0_i32_0 = arith.constant 0 : i32
    %c0_i32_1 = arith.constant 0 : i32
    return %c0_i32, %c0_i32_0 : i32, i32
  }
  func.func @transform_8(%arg0: i32) -> (i32, i32) {
    %c0_i32 = arith.constant 0 : i32
    %c0_i32_0 = arith.constant 0 : i32
    %c0_i32_1 = arith.constant 0 : i32
    return %c0_i32, %c0_i32_0 : i32, i32
  }
  func.func @transform_9(%arg0: i32) -> (i32, i32, i32) {
    %c0_i32 = arith.constant 0 : i32
    %c0_i32_0 = arith.constant 0 : i32
    %c0_i32_1 = arith.constant 0 : i32
    return %arg0, %c0_i32, %c0_i32_0 : i32, i32, i32
  }
}

</mosaic_0001>

<llo_original>
// kernel: _lambda_.4
$region0: #{_lambda_.4}
  #allocation0 [shape = 'u32[]', space=smem, size = 0x4, offset = 0x4, fixed_abs, tag = 'smem constant byte address 0x4 - core index']
  #allocation1 [shape = 'u32[72,128]{1,0:T(1,128)}', space=vmem, size = 0x9000, scoped, tag = 'internal scratch']
  %s0 = inlined_call_operand.vmem [shape: f32[2,1,256], index: 0, kind: input, shape index: {}]
  %s1 = inlined_call_operand.hbm [shape: bf16[256,32], index: 1, kind: input, shape index: {}]
  %s2 = inlined_call_operand.hbm [shape: f32[2,32], index: 2, kind: input, shape index: {}]
  %s3 = inlined_call_operand.vmem [shape: bf16[32,256], index: 3, kind: input, shape index: {}]
  %s4 = inlined_call_operand.hbm [shape: f32[2,256], index: 4, kind: input, shape index: {}]
  %s5 = inlined_call_operand.vmem [shape: f32[2,1,256], index: 5, kind: output, shape index: {}]
  %s6 = sld [smem:[#allocation0]]
  $region65: #{_lambda_.4} parent=0
    _
  %s8 = ssub.s32 1, %s6
  %s9 = scalar_select 0, %s8, %s6
  $region1: #{_lambda_.4} parent=0
    #allocation2 [shape = 'u8[65536]{0}', space=vmem, size = 0x10000, scoped, tag = 'input window, operand 1, single buffered']
    #allocation3 [shape = 's32[2]{0}', space=sflag, size = 0x8, scoped, tag = 'scoped memory for _lambda_.4']
    #allocation4 [shape = 'u8[1024]{0}', space=vmem, size = 0x400, scoped, tag = 'input window, operand 2, single buffered']
    #allocation5 [shape = 's32[1]{0}', space=sflag, size = 0x4, scoped, tag = 'scoped memory for _lambda_.4']
    #allocation6 [shape = 'u8[2048]{0}', space=vmem, size = 0x800, scoped, tag = 'input window, operand 4, single buffered']
    %10 = vsyncpa [#allocation3], 0
    %11 = vsyncpa [#allocation5], 0
    loop: start=0, step=1, limit=4
    $region2: #{_lambda_.4} parent=1 // loop_pre_header
      _
    $region3: #{_lambda_.4} parent=1 // loop_header
      %s13 = sphi 0, %s17
      %p14 = scmp.ge.s32.totalorder %s13, 4
      %s23 = sphi 0, %s25
      %s26 = sphi 0, %s23
      %s27 = sphi 0, %s26
      %s43 = sphi 0, %s27
      %s47 = sphi 0, %s47
      %s49 = sphi 0, %s47
      %s50 = sphi 0, %s49
      %s64 = sphi 0, %s50
      %s68 = sphi 0, %s68
      %s70 = sphi 0, %s68
      %s71 = sphi 0, %s70
      %s85 = sphi 0, %s71
      %s89 = sphi 0, %s89
      %s91 = sphi 0, %s89
      %s92 = sphi 0, %s91
      %s106 = sphi 0, %s92
      %s110 = sphi 0, %s110
      %s112 = sphi 0, %s110
      %s113 = sphi 0, %s112
      %s127 = sphi 0, %s113
      %s133 = sphi 0, %s135
      %s136 = sphi 0, %s133
      %s137 = sphi 0, %s136
      %s153 = sphi 0, %s137
    $region4: #{_lambda_.4} parent=1 // loop_header_branch
      %16 = sbr.rel (%p14) target = $region8
    $region5: #{_lambda_.4} parent=1 // loop_body
      %s18 = ssub.s32 %s13, 1
      %s19 = ssub.s32 %s13, 2
      %s20 = sadd.s32 %s13, 1
      %s21 = ssub.s32 %s13, %s20
      %p22 = scmp.eq.s32.totalorder %s21, 0
      %s24 = sadd.s32 %s23, 1
      %s25 = scalar_select %p22, %s23, %s24
      %p28 = pneg %p22
      %p29 = scmp.eq.s32.totalorder %s13, 1
      %p30 = por %p28, %p29
      %p31 = scmp.ne.s32.totalorder %s23, %s26
      %p32 = scmp.eq.s32.totalorder %s13, 0
      %p33 = por %p31, %p32
      %p34 = scmp.ne.s32.totalorder %s23, %s26
      %p35 = scmp.eq.s32.totalorder %s18, 1
      %p36 = por %p34, %p35
      %p37 = scmp.ne.s32.totalorder %s26, %s27
      %p38 = scmp.eq.s32.totalorder %s18, 0
      %p39 = por %p37, %p38
      %p40 = scmp.ne.s32.totalorder %s26, %s27
      %p41 = scmp.eq.s32.totalorder %s19, 1
      %p42 = por %p40, %p41
      %p44 = scmp.ne.s32.totalorder %s27, %s43
      %p45 = scmp.eq.s32.totalorder %s19, 0
      %p46 = por %p44, %p45
      %s48 = sadd.s32 %s47, 1
      %p51 = scmp.eq.s32.totalorder %s13, 1
      %p52 = scmp.ne.s32.totalorder %s47, %s49
      %p53 = scmp.eq.s32.totalorder %s13, 0
      %p54 = por %p52, %p53
      %p55 = scmp.ne.s32.totalorder %s47, %s49
      %p56 = scmp.eq.s32.totalorder %s18, 1
      %p57 = por %p55, %p56
      %p58 = scmp.ne.s32.totalorder %s49, %s50
      %p59 = scmp.eq.s32.totalorder %s18, 0
      %p60 = por %p58, %p59
      %p61 = scmp.ne.s32.totalorder %s49, %s50
      %p62 = scmp.eq.s32.totalorder %s19, 1
      %p63 = por %p61, %p62
      %p65 = scmp.ne.s32.totalorder %s50, %s64
      %p66 = scmp.eq.s32.totalorder %s19, 0
      %p67 = por %p65, %p66
      %s69 = sadd.s32 %s68, 1
      %p72 = scmp.eq.s32.totalorder %s13, 1
      %p73 = scmp.ne.s32.totalorder %s68, %s70
      %p74 = scmp.eq.s32.totalorder %s13, 0
      %p75 = por %p73, %p74
      %p76 = scmp.ne.s32.totalorder %s68, %s70
      %p77 = scmp.eq.s32.totalorder %s18, 1
      %p78 = por %p76, %p77
      %p79 = scmp.ne.s32.totalorder %s70, %s71
      %p80 = scmp.eq.s32.totalorder %s18, 0
      %p81 = por %p79, %p80
      %p82 = scmp.ne.s32.totalorder %s70, %s71
      %p83 = scmp.eq.s32.totalorder %s19, 1
      %p84 = por %p82, %p83
      %p86 = scmp.ne.s32.totalorder %s71, %s85
      %p87 = scmp.eq.s32.totalorder %s19, 0
      %p88 = por %p86, %p87
      %s90 = sadd.s32 %s89, 1
      %p93 = scmp.eq.s32.totalorder %s13, 1
      %p94 = scmp.ne.s32.totalorder %s89, %s91
      %p95 = scmp.eq.s32.totalorder %s13, 0
      %p96 = por %p94, %p95
      %p97 = scmp.ne.s32.totalorder %s89, %s91
      %p98 = scmp.eq.s32.totalorder %s18, 1
      %p99 = por %p97, %p98
      %p100 = scmp.ne.s32.totalorder %s91, %s92
      %p101 = scmp.eq.s32.totalorder %s18, 0
      %p102 = por %p100, %p101
      %p103 = scmp.ne.s32.totalorder %s91, %s92
      %p104 = scmp.eq.s32.totalorder %s19, 1
      %p105 = por %p103, %p104
      %p107 = scmp.ne.s32.totalorder %s92, %s106
      %p108 = scmp.eq.s32.totalorder %s19, 0
      %p109 = por %p107, %p108
      %s111 = sadd.s32 %s110, 1
      %p114 = scmp.eq.s32.totalorder %s13, 1
      %p115 = scmp.ne.s32.totalorder %s110, %s112
      %p116 = scmp.eq.s32.totalorder %s13, 0
      %p117 = por %p115, %p116
      %p118 = scmp.ne.s32.totalorder %s110, %s112
      %p119 = scmp.eq.s32.totalorder %s18, 1
      %p120 = por %p118, %p119
      %p121 = scmp.ne.s32.totalorder %s112, %s113
      %p122 = scmp.eq.s32.totalorder %s18, 0
      %p123 = por %p121, %p122
      %p124 = scmp.ne.s32.totalorder %s112, %s113
      %p125 = scmp.eq.s32.totalorder %s19, 1
      %p126 = por %p124, %p125
      %p128 = scmp.ne.s32.totalorder %s113, %s127
      %p129 = scmp.eq.s32.totalorder %s19, 0
      %p130 = por %p128, %p129
      %s131 = ssub.s32 %s13, %s20
      %p132 = scmp.eq.s32.totalorder %s131, 0
      %s134 = sadd.s32 %s133, 1
      %s135 = scalar_select %p132, %s133, %s134
      %p138 = pneg %p132
      %p139 = scmp.eq.s32.totalorder %s13, 1
      %p140 = por %p138, %p139
      %p141 = scmp.ne.s32.totalorder %s133, %s136
      %p142 = scmp.eq.s32.totalorder %s13, 0
      %p143 = por %p141, %p142
      %p144 = scmp.ne.s32.totalorder %s133, %s136
      %p145 = scmp.eq.s32.totalorder %s18, 1
      %p146 = por %p144, %p145
      %p147 = scmp.ne.s32.totalorder %s136, %s137
      %p148 = scmp.eq.s32.totalorder %s18, 0
      %p149 = por %p147, %p148
      %p150 = scmp.ne.s32.totalorder %s136, %s137
      %p151 = scmp.eq.s32.totalorder %s19, 1
      %p152 = por %p150, %p151
      %p154 = scmp.ne.s32.totalorder %s137, %s153
      %p155 = scmp.eq.s32.totalorder %s19, 0
      %p156 = por %p154, %p155
      %p157 = scmp.le.s32.totalorder 1, %s13
      %p158 = scmp.lt.s32.totalorder %s13, 3
      %p159 = pnand %p157, %p158
      %p160 = pneg %p159
      // Predicated region
      $region9: #{_lambda_.4} parent=5 // pred_check
        _
      $region10: #{_lambda_.4} parent=5 // pred_check_branch
        %162 = sbr.rel (%p159) target = $region12
      $region11: #{_lambda_.4} parent=5 // pred_region
        %s163 = ssub.s32 %s13, 1
        // Predicated region
        $region13: #{_lambda_.4} parent=11 // pred_check
          %p164 = pneg %p60
        $region14: #{_lambda_.4} parent=11 // pred_check_branch
          %166 = sbr.rel (%p164) target = $region16
        $region15: #{_lambda_.4} parent=11 // pred_region
          %168 = vsyncadd [#allocation3], 0
          %s169 = sshll.u32 %s1, 4
          %s170 = int_to_ptr.hbm [resolvable:$true] %s169
          %s171 = sshll.u32 [#allocation2], 4
          %s172 = int_to_ptr.vmem [resolvable:$true] %s171
          %177 = dma.hbm_to_vmem [thread:$0]  %s170, 2048, %s172, [#allocation3], 64, 64, 4
        $region16: #{_lambda_.4} parent=11 // pred_fallthru
          _
        // Predicated region
        $region17: #{_lambda_.4} parent=11 // pred_check
          %p178 = pneg %p81
        $region18: #{_lambda_.4} parent=11 // pred_check_branch
          %180 = sbr.rel (%p178) target = $region20
        $region19: #{_lambda_.4} parent=11 // pred_region
          %182 = vsyncadd [#allocation5], 0
          %s184 = sshll.u32 %s2, 4
          %s185 = int_to_ptr.hbm [resolvable:$true] %s184
          %s186 = sshll.u32 [#allocation4], 4
          %s187 = int_to_ptr.vmem [resolvable:$true] %s186
          %189 = dma.hbm_to_vmem [thread:$0]  %s185, 32, %s187, [#allocation5]
        $region20: #{_lambda_.4} parent=11 // pred_fallthru
          _
        // Predicated region
        $region21: #{_lambda_.4} parent=11 // pred_check
          %p190 = pneg %p102
        $region22: #{_lambda_.4} parent=11 // pred_check_branch
          %192 = sbr.rel (%p190) target = $region24
        $region23: #{_lambda_.4} parent=11 // pred_region
          _
        $region24: #{_lambda_.4} parent=11 // pred_fallthru
          _
        // Predicated region
        $region25: #{_lambda_.4} parent=11 // pred_check
          %p193 = pneg %p123
        $region26: #{_lambda_.4} parent=11 // pred_check_branch
          %195 = sbr.rel (%p193) target = $region28
        $region27: #{_lambda_.4} parent=11 // pred_region
          %197 = vsyncadd [#allocation5], 0
          %s199 = sshll.u32 %s4, 4
          %s200 = int_to_ptr.hbm [resolvable:$true] %s199
          %s201 = sshll.u32 [#allocation6], 4
          %s202 = int_to_ptr.vmem [resolvable:$true] %s201
          %204 = dma.hbm_to_vmem [thread:$0]  %s200, 64, %s202, [#allocation5]
        $region28: #{_lambda_.4} parent=11 // pred_fallthru
          _
      $region12: #{_lambda_.4} parent=5 // pred_fallthru
        _
      %p205 = scmp.lt.s32.totalorder %s13, 2
      // Predicated region
      $region29: #{_lambda_.4} parent=5 // pred_check
        %p206 = pneg %p205
      $region30: #{_lambda_.4} parent=5 // pred_check_branch
        %208 = sbr.rel (%p206) target = $region32
      $region31: #{_lambda_.4} parent=5 // pred_region
        // Predicated region
        $region33: #{_lambda_.4} parent=31 // pred_check
          %p209 = pneg %p33
        $region34: #{_lambda_.4} parent=31 // pred_check_branch
          %211 = sbr.rel (%p209) target = $region36
        $region35: #{_lambda_.4} parent=31 // pred_region
          %p212 = scmp.lt.s32.totalorder %s13, 1
          %s213 = scalar_select %p212, %s13, 1
          %s214 = smul.addr %s213, 2
          %s215 = scalar_lea.vmem %s0, %s214
        $region36: #{_lambda_.4} parent=31 // pred_fallthru
          _
      $region32: #{_lambda_.4} parent=5 // pred_fallthru
        _
      %p216 = scmp.le.s32.totalorder 1, %s13
      %p217 = scmp.lt.s32.totalorder %s13, 3
      %p218 = pnand %p216, %p217
      %p219 = pneg %p218
      // Predicated region
      $region37: #{_lambda_.4} parent=5 // pred_check
        _
      $region38: #{_lambda_.4} parent=5 // pred_check_branch
        %221 = sbr.rel (%p218) target = $region40
      $region39: #{_lambda_.4} parent=5 // pred_region
        %s222 = ssub.s32 %s13, 1
        // Predicated region
        $region41: #{_lambda_.4} parent=39 // pred_check
          %p223 = pneg %p60
        $region42: #{_lambda_.4} parent=39 // pred_check_branch
          %225 = sbr.rel (%p223) target = $region44
        $region43: #{_lambda_.4} parent=39 // pred_region
          %227 = dma.done [#allocation3], 2048
        $region44: #{_lambda_.4} parent=39 // pred_fallthru
          _
        // Predicated region
        $region45: #{_lambda_.4} parent=39 // pred_check
          %p228 = pneg %p81
        $region46: #{_lambda_.4} parent=39 // pred_check_branch
          %230 = sbr.rel (%p228) target = $region48
        $region47: #{_lambda_.4} parent=39 // pred_region
          %232 = dma.done [#allocation5], 32
        $region48: #{_lambda_.4} parent=39 // pred_fallthru
          _
        // Predicated region
        $region49: #{_lambda_.4} parent=39 // pred_check
          %p233 = pneg %p123
        $region50: #{_lambda_.4} parent=39 // pred_check_branch
          %235 = sbr.rel (%p233) target = $region52
        $region51: #{_lambda_.4} parent=39 // pred_region
          %237 = dma.done [#allocation5], 64
        $region52: #{_lambda_.4} parent=39 // pred_fallthru
          _
        %p238 = scmp.lt.s32.totalorder %s18, 1
        %s239 = scalar_select %p238, %s18, 1
        %s240 = smul.addr %s239, 2
        %s241 = scalar_lea.vmem %s0, %s240
        %p242 = pneg %p39
        %p243 = pneg %p36
        %p244 = pneg %p60
        %p245 = pneg %p57
        %p246 = pneg %p81
        %p247 = pneg %p78
        %p248 = pneg %p102
        %p249 = pneg %p99
        %p250 = pneg %p123
        %p251 = pneg %p120
        %p252 = pneg %p149
        %p253 = pneg %p146
        %p254 = scmp.lt.s32.totalorder %s18, 1
        %s255 = scalar_select %p254, %s18, 1
        %s256 = smul.addr %s255, 2
        %s257 = scalar_lea.vmem %s5, %s256
        %p258 = scmp.lt.s32.totalorder %s18, 1
        %s259 = scalar_select %p258, %s18, 1
        %s260 = smul.addr %s259, 2
        %s261 = scalar_lea.vmem %s0, %s260
        %p262 = scmp.lt.s32.totalorder %s18, 1
        %s263 = scalar_select %p262, %s18, 1
        %s264 = smul.addr %s263, 2
        %s265 = scalar_lea.vmem %s5, %s264
        %v267 = vld [vmem:[%s261] sm:$0x3]
        %v269 = vperm.slane %v267, 0
        %v270 = vperm.slane %v267, 1
        %v273 = vpack.c.bf16 %v269, %v269
        %v274 = vpack.c.bf16 %v270, %v270
        %v275 = vld [vmem:[#allocation2] sm:$0xf]
        %v276 = vld [vmem:[#allocation2 + $0x4] sm:$0xf]
        %v277 = vld [vmem:[#allocation2 + $0x8] sm:$0xf]
        %v278 = vld [vmem:[#allocation2 + $0xc] sm:$0xf]
        %v279 = vld [vmem:[#allocation2 + $0x10] sm:$0xf]
        %v280 = vld [vmem:[#allocation2 + $0x14] sm:$0xf]
        %v281 = vld [vmem:[#allocation2 + $0x18] sm:$0xf]
        %v282 = vld [vmem:[#allocation2 + $0x1c] sm:$0xf]
        %v283 = vld [vmem:[#allocation2 + $0x20] sm:$0xf]
        %v284 = vld [vmem:[#allocation2 + $0x24] sm:$0xf]
        %v285 = vld [vmem:[#allocation2 + $0x28] sm:$0xf]
        %v286 = vld [vmem:[#allocation2 + $0x2c] sm:$0xf]
        %v287 = vld [vmem:[#allocation2 + $0x30] sm:$0xf]
        %v288 = vld [vmem:[#allocation2 + $0x34] sm:$0xf]
        %v289 = vld [vmem:[#allocation2 + $0x38] sm:$0xf]
        %v290 = vld [vmem:[#allocation2 + $0x3c] sm:$0xf]
        %v291 = vld [vmem:[#allocation2 + $0x40] sm:$0xf]
        %v292 = vld [vmem:[#allocation2 + $0x44] sm:$0xf]
        %v293 = vld [vmem:[#allocation2 + $0x48] sm:$0xf]
        %v294 = vld [vmem:[#allocation2 + $0x4c] sm:$0xf]
        %v295 = vld [vmem:[#allocation2 + $0x50] sm:$0xf]
        %v296 = vld [vmem:[#allocation2 + $0x54] sm:$0xf]
        %v297 = vld [vmem:[#allocation2 + $0x58] sm:$0xf]
        %v298 = vld [vmem:[#allocation2 + $0x5c] sm:$0xf]
        %v299 = vld [vmem:[#allocation2 + $0x60] sm:$0xf]
        %v300 = vld [vmem:[#allocation2 + $0x64] sm:$0xf]
        %v301 = vld [vmem:[#allocation2 + $0x68] sm:$0xf]
        %v302 = vld [vmem:[#allocation2 + $0x6c] sm:$0xf]
        %v303 = vld [vmem:[#allocation2 + $0x70] sm:$0xf]
        %v304 = vld [vmem:[#allocation2 + $0x74] sm:$0xf]
        %v305 = vld [vmem:[#allocation2 + $0x78] sm:$0xf]
        %v306 = vld [vmem:[#allocation2 + $0x7c] sm:$0xf]
        %v339 = vunpack.c.l.b16 %v275
        %v340 = vunpack.c.l.b16 %v276
        %v341 = vunpack.c.l.b16 %v277
        %v342 = vunpack.c.l.b16 %v278
        %v343 = vunpack.c.l.b16 %v279
        %v344 = vunpack.c.l.b16 %v280
        %v345 = vunpack.c.l.b16 %v281
        %v346 = vunpack.c.l.b16 %v282
        %v347 = vunpack.c.l.b16 %v283
        %v348 = vunpack.c.l.b16 %v284
        %v349 = vunpack.c.l.b16 %v285
        %v350 = vunpack.c.l.b16 %v286
        %v351 = vunpack.c.l.b16 %v287
        %v352 = vunpack.c.l.b16 %v288
        %v353 = vunpack.c.l.b16 %v289
        %v354 = vunpack.c.l.b16 %v290
        %v355 = vunpack.c.l.b16 %v291
        %v356 = vunpack.c.l.b16 %v292
        %v357 = vunpack.c.l.b16 %v293
        %v358 = vunpack.c.l.b16 %v294
        %v359 = vunpack.c.l.b16 %v295
        %v360 = vunpack.c.l.b16 %v296
        %v361 = vunpack.c.l.b16 %v297
        %v362 = vunpack.c.l.b16 %v298
        %v363 = vunpack.c.l.b16 %v299
        %v364 = vunpack.c.l.b16 %v300
        %v365 = vunpack.c.l.b16 %v301
        %v366 = vunpack.c.l.b16 %v302
        %v367 = vunpack.c.l.b16 %v303
        %v368 = vunpack.c.l.b16 %v304
        %v369 = vunpack.c.l.b16 %v305
        %v370 = vunpack.c.l.b16 %v306
        %v371 = vpack.c.b16 %v340, %v339
        %v372 = vpack.c.b16 %v342, %v341
        %v373 = vpack.c.b16 %v344, %v343
        %v374 = vpack.c.b16 %v346, %v345
        %v375 = vpack.c.b16 %v348, %v347
        %v376 = vpack.c.b16 %v350, %v349
        %v377 = vpack.c.b16 %v352, %v351
        %v378 = vpack.c.b16 %v354, %v353
        %v379 = vpack.c.b16 %v356, %v355
        %v380 = vpack.c.b16 %v358, %v357
        %v381 = vpack.c.b16 %v360, %v359
        %v382 = vpack.c.b16 %v362, %v361
        %v383 = vpack.c.b16 %v364, %v363
        %v384 = vpack.c.b16 %v366, %v365
        %v385 = vpack.c.b16 %v368, %v367
        %v386 = vpack.c.b16 %v370, %v369
        %403 = vmatpush.bf16.msra.mxu0 %v378
        %404 = vmatpush.bf16.msra.mxu0 %v377
        %405 = vmatpush.bf16.msra.mxu0 %v376
        %406 = vmatpush.bf16.msra.mxu0 %v375
        %407 = vmatpush.bf16.msra.mxu0 %v374
        %408 = vmatpush.bf16.msra.mxu0 %v373
        %409 = vmatpush.bf16.msra.mxu0 %v372
        %410 = vmatpush.bf16.msra.mxu0 %v371
        %411 = vmatmul.bf16.gmra.mxu0 %v273
        %v412 = vpop.f32.mrf.mxu0
        %v413 = vadd.f32 0.0, %v412
        %v414 = vpop.f32.mrf.mxu0
        %415 = vdwg.mxu0
        %416 = vmatpush.bf16.msra.mxu0 %v386
        %417 = vmatpush.bf16.msra.mxu0 %v385
        %418 = vmatpush.bf16.msra.mxu0 %v384
        %419 = vmatpush.bf16.msra.mxu0 %v383
        %420 = vmatpush.bf16.msra.mxu0 %v382
        %421 = vmatpush.bf16.msra.mxu0 %v381
        %422 = vmatpush.bf16.msra.mxu0 %v380
        %423 = vmatpush.bf16.msra.mxu0 %v379
        %424 = vmatmul.bf16.gmra.mxu0 %v274
        %v425 = vpop.f32.mrf.mxu0
        %v426 = vadd.f32 %v413, %v425
        %v427 = vpop.f32.mrf.mxu0
        %428 = vdwg.mxu0
        %v429 = vld [vmem:[#allocation4] sm:$0x1]
        %v430 = vmul.f32 %v426, %v429
        %v431 = vld [vmem:[#allocation4 + $0x1] sm:$0x1]
        %v432 = vadd.f32 %v430, %v431
        %v433 = vmax.f32 %v432, 0.0
        %v434 = vpack.c.bf16 %v433, %v433
        %v435 = vld [vmem:[%s3] sm:$0xff]
        %v436 = vld [vmem:[%s3 + $0x8] sm:$0xff]
        %v437 = vld [vmem:[%s3 + $0x10] sm:$0xff]
        %v438 = vld [vmem:[%s3 + $0x18] sm:$0xff]
        %v443 = vunpack.c.l.b16 %v435
        %v444 = vunpack.c.h.b16 %v435
        %v445 = vunpack.c.l.b16 %v436
        %v446 = vunpack.c.h.b16 %v436
        %v447 = vunpack.c.l.b16 %v437
        %v448 = vunpack.c.h.b16 %v437
        %v449 = vunpack.c.l.b16 %v438
        %v450 = vunpack.c.h.b16 %v438
        %v451 = vpack.c.b16 %v445, %v443
        %v452 = vpack.c.b16 %v446, %v444
        %v453 = vpack.c.b16 %v449, %v447
        %v454 = vpack.c.b16 %v450, %v448
        %vm459 = vcmask 261120
        %v461 = vsel %vm459, %v434, 0
        %463 = vmatpush.bf16.msra.mxu0 0
        %464 = vmatpush.bf16.msra.mxu0 0
        %465 = vmatpush.bf16.msra.mxu0 0
        %466 = vmatpush.bf16.msra.mxu0 0
        %467 = vmatpush.bf16.msra.mxu0 0
        %468 = vmatpush.bf16.msra.mxu0 0
        %469 = vmatpush.bf16.msra.mxu0 %v453
        %470 = vmatpush.bf16.msra.mxu0 %v451
        %471 = vmatmul.bf16.gmra.mxu0 %v461
        %v472 = vpop.f32.mrf.mxu0
        %v473 = vadd.f32 0.0, %v472
        %v474 = vpop.f32.mrf.mxu0
        %475 = vdwg.mxu0
        %476 = vmatpush.bf16.msra.mxu0 0
        %477 = vmatpush.bf16.msra.mxu0 0
        %478 = vmatpush.bf16.msra.mxu0 0
        %479 = vmatpush.bf16.msra.mxu0 0
        %480 = vmatpush.bf16.msra.mxu0 0
        %481 = vmatpush.bf16.msra.mxu0 0
        %482 = vmatpush.bf16.msra.mxu0 %v454
        %483 = vmatpush.bf16.msra.mxu0 %v452
        %484 = vmatmul.bf16.gmra.mxu0 %v461
        %v485 = vpop.f32.mrf.mxu0
        %v486 = vadd.f32 0.0, %v485
        %v487 = vpop.f32.mrf.mxu0
        %488 = vdwg.mxu0
        %v489 = vld [vmem:[#allocation6] ss:$2 sm:$0x3]
        %v491 = vperm.slane %v489, 0
        %v492 = vperm.slane %v489, 1
        %v495 = vmul.f32 %v473, %v491
        %v496 = vmul.f32 %v486, %v492
        %s497 = scalar_lea.vmem [#allocation6], 1
        %v498 = vld [vmem:[%s497] ss:$2 sm:$0x3]
        %v500 = vperm.slane %v498, 0
        %v501 = vperm.slane %v498, 1
        %v504 = vadd.f32 %v495, %v500
        %v505 = vadd.f32 %v496, %v501
        %v506 = vmax.f32 %v504, 0.0
        %v507 = vmax.f32 %v505, 0.0
        %v510 = vrot.slane %v507, 7
        %vm511 = vcmask 1040384
        %v512 = vsel %vm511, %v506, %v510
        %v514 = vlaneseq
        %vm515 = vcmp.ge.s32.totalorder %v514, 0
        %vm516 = vcmp.lt.s32.totalorder %v514, 256
        %vm517 = vmand %vm515, %vm516
        %518 = vst.msk [vmem:[%s265] sm:$0x3] %vm517, %v512
        %p519 = scmp.lt.s32.totalorder %s18, 1
        %s520 = scalar_select %p519, %s18, 1
        %s521 = smul.addr %s520, 2
        %s522 = scalar_lea.vmem %s5, %s521
        // Predicated region
        $region53: #{_lambda_.4} parent=39 // pred_check
          %p523 = pneg %p146
        $region54: #{_lambda_.4} parent=39 // pred_check_branch
          %525 = sbr.rel (%p523) target = $region56
        $region55: #{_lambda_.4} parent=39 // pred_region
          _
        $region56: #{_lambda_.4} parent=39 // pred_fallthru
          _
      $region40: #{_lambda_.4} parent=5 // pred_fallthru
        _
      %p526 = scmp.le.s32.totalorder 2, %s13
      // Predicated region
      $region57: #{_lambda_.4} parent=5 // pred_check
        %p527 = pneg %p526
      $region58: #{_lambda_.4} parent=5 // pred_check_branch
        %529 = sbr.rel (%p527) target = $region60
      $region59: #{_lambda_.4} parent=5 // pred_region
        %s530 = ssub.s32 %s13, 2
        // Predicated region
        $region61: #{_lambda_.4} parent=59 // pred_check
          %p531 = pneg %p152
        $region62: #{_lambda_.4} parent=59 // pred_check_branch
          %533 = sbr.rel (%p531) target = $region64
        $region63: #{_lambda_.4} parent=59 // pred_region
          %p534 = scmp.lt.s32.totalorder %s19, 1
          %s535 = scalar_select %p534, %s19, 1
          %s536 = smul.addr %s535, 2
          %s537 = scalar_lea.vmem %s5, %s536
        $region64: #{_lambda_.4} parent=59 // pred_fallthru
          _
      $region60: #{_lambda_.4} parent=5 // pred_fallthru
        _
    $region6: #{_lambda_.4} parent=1 // loop_footer
      %s17 = sadd.s32 1, %s13
    $region7: #{_lambda_.4} parent=1 // loop_footer_branch
      %12 = sbr.rel target = $region3
    $region8: #{_lambda_.4} parent=1 // loop_exit
      _
    %538 = vsyncpa [#allocation3], 1
    %s539 = scalar_lea.sflag [#allocation3], 1
    %540 = vsyncpa %s539, 1
    %541 = vsyncpa [#allocation5], 1

// kernel: _lambda_.3
$region0: #{_lambda_.3}
  #allocation0 [shape = 'u32[]', space=smem, size = 0x4, offset = 0x4, fixed_abs, tag = 'smem constant byte address 0x4 - core index']
  #allocation1 [shape = 'u32[72,128]{1,0:T(1,128)}', space=vmem, size = 0x9000, scoped, tag = 'internal scratch']
  #allocation2 [shape = 'f32[4,324]{1,0:T(4,128)}', space=vmem, size = 0x1800, scoped, tag = 'scratch operand']
  #allocation3 [shape = 'f32[36,286]{1,0:T(8,128)}', space=vmem, size = 0xf000, scoped, tag = 'scratch operand']
  #allocation4 [shape = 'f32[8,286]{1,0:T(8,128)}', space=vmem, size = 0x3000, scoped, tag = 'scratch operand']
  #allocation5 [shape = 'f32[8,100]{1,0:T(8,128)}', space=vmem, size = 0x1000, scoped, tag = 'scratch operand']
  #allocation6 [shape = 'f32[72,78]{1,0:T(8,128)}', space=vmem, size = 0x9000, scoped, tag = 'scratch operand']
  #allocation7 [shape = 'f32[16,78]{1,0:T(8,128)}', space=vmem, size = 0x2000, scoped, tag = 'scratch operand']
  %s0 = inlined_call_operand.vmem [shape: f32[2,4,256], index: 0, kind: input, shape index: {}]
  %s1 = inlined_call_operand.hbm [shape: f32[256,324], index: 1, kind: input, shape index: {}]
  %s2 = inlined_call_operand.hbm [shape: bf16[8,36], index: 2, kind: input, shape index: {}]
  %s3 = inlined_call_operand.hbm [shape: f32[8,2], index: 3, kind: input, shape index: {}]
  %s4 = inlined_call_operand.hbm [shape: f32[267,64], index: 4, kind: input, shape index: {}]
  %s5 = inlined_call_operand.hbm [shape: f32[64,100], index: 5, kind: input, shape index: {}]
  %s6 = inlined_call_operand.hbm [shape: bf16[16,72], index: 6, kind: input, shape index: {}]
  %s7 = inlined_call_operand.vmem [shape: f32[16,2], index: 7, kind: input, shape index: {}]
  %s8 = inlined_call_operand.hbm [shape: f32[67,16], index: 8, kind: input, shape index: {}]
  %s9 = inlined_call_operand.vmem [shape: f32[2,16,16], index: 9, kind: output, shape index: {}]
  %s10 = sld [smem:[#allocation0]]
  $region97: #{_lambda_.3} parent=0
    _
  %s12 = ssub.s32 1, %s10
  %s13 = scalar_select 0, %s12, %s10
  $region1: #{_lambda_.3} parent=0
    #allocation8 [shape = 'u8[393216]{0}', space=vmem, size = 0x60000, scoped, tag = 'input window, operand 1, single buffered']
    #allocation9 [shape = 's32[2]{0}', space=sflag, size = 0x8, scoped, tag = 'scoped memory for _lambda_.3']
    #allocation10 [shape = 'u8[2048]{0}', space=vmem, size = 0x800, scoped, tag = 'input window, operand 2, single buffered']
    #allocation11 [shape = 's32[1]{0}', space=sflag, size = 0x4, scoped, tag = 'scoped memory for _lambda_.3']
    #allocation12 [shape = 'u8[4096]{0}', space=vmem, size = 0x1000, scoped, tag = 'input window, operand 3, single buffered']
    #allocation13 [shape = 'u8[139264]{0}', space=vmem, size = 0x22000, scoped, tag = 'input window, operand 4, single buffered']
    #allocation14 [shape = 's32[1]{0}', space=sflag, size = 0x4, scoped, tag = 'scoped memory for _lambda_.3']
    #allocation15 [shape = 'u8[32768]{0}', space=vmem, size = 0x8000, scoped, tag = 'input window, operand 5, single buffered']
    #allocation16 [shape = 'u8[4096]{0}', space=vmem, size = 0x1000, scoped, tag = 'input window, operand 6, single buffered']
    #allocation17 [shape = 's32[1]{0}', space=sflag, size = 0x4, scoped, tag = 'scoped memory for _lambda_.3']
    #allocation18 [shape = 'u8[36864]{0}', space=vmem, size = 0x9000, scoped, tag = 'input window, operand 8, single buffered']
    %14 = vsyncpa [#allocation9], 0
    %15 = vsyncpa [#allocation11], 0
    %16 = vsyncpa [#allocation14], 0
    %17 = vsyncpa [#allocation17], 0
    loop: start=0, step=1, limit=4
    $region2: #{_lambda_.3} parent=1 // loop_pre_header
      _
    $region3: #{_lambda_.3} parent=1 // loop_header
      %s19 = sphi 0, %s23
      %p20 = scmp.ge.s32.totalorder %s19, 4
      %s29 = sphi 0, %s31
      %s32 = sphi 0, %s29
      %s33 = sphi 0, %s32
      %s49 = sphi 0, %s33
      %s53 = sphi 0, %s53
      %s55 = sphi 0, %s53
      %s56 = sphi 0, %s55
      %s70 = sphi 0, %s56
      %s74 = sphi 0, %s74
      %s76 = sphi 0, %s74
      %s77 = sphi 0, %s76
      %s91 = sphi 0, %s77
      %s95 = sphi 0, %s95
      %s97 = sphi 0, %s95
      %s98 = sphi 0, %s97
      %s112 = sphi 0, %s98
      %s116 = sphi 0, %s116
      %s118 = sphi 0, %s116
      %s119 = sphi 0, %s118
      %s133 = sphi 0, %s119
      %s137 = sphi 0, %s137
      %s139 = sphi 0, %s137
      %s140 = sphi 0, %s139
      %s154 = sphi 0, %s140
      %s158 = sphi 0, %s158
      %s160 = sphi 0, %s158
      %s161 = sphi 0, %s160
      %s175 = sphi 0, %s161
      %s179 = sphi 0, %s179
      %s181 = sphi 0, %s179
      %s182 = sphi 0, %s181
      %s196 = sphi 0, %s182
      %s200 = sphi 0, %s200
      %s202 = sphi 0, %s200
      %s203 = sphi 0, %s202
      %s217 = sphi 0, %s203
      %s223 = sphi 0, %s225
      %s226 = sphi 0, %s223
      %s227 = sphi 0, %s226
      %s243 = sphi 0, %s227
    $region4: #{_lambda_.3} parent=1 // loop_header_branch
      %22 = sbr.rel (%p20) target = $region8
    $region5: #{_lambda_.3} parent=1 // loop_body
      %s24 = ssub.s32 %s19, 1
      %s25 = ssub.s32 %s19, 2
      %s26 = sadd.s32 %s19, 1
      %s27 = ssub.s32 %s19, %s26
      %p28 = scmp.eq.s32.totalorder %s27, 0
      %s30 = sadd.s32 %s29, 1
      %s31 = scalar_select %p28, %s29, %s30
      %p34 = pneg %p28
      %p35 = scmp.eq.s32.totalorder %s19, 1
      %p36 = por %p34, %p35
      %p37 = scmp.ne.s32.totalorder %s29, %s32
      %p38 = scmp.eq.s32.totalorder %s19, 0
      %p39 = por %p37, %p38
      %p40 = scmp.ne.s32.totalorder %s29, %s32
      %p41 = scmp.eq.s32.totalorder %s24, 1
      %p42 = por %p40, %p41
      %p43 = scmp.ne.s32.totalorder %s32, %s33
      %p44 = scmp.eq.s32.totalorder %s24, 0
      %p45 = por %p43, %p44
      %p46 = scmp.ne.s32.totalorder %s32, %s33
      %p47 = scmp.eq.s32.totalorder %s25, 1
      %p48 = por %p46, %p47
      %p50 = scmp.ne.s32.totalorder %s33, %s49
      %p51 = scmp.eq.s32.totalorder %s25, 0
      %p52 = por %p50, %p51
      %s54 = sadd.s32 %s53, 1
      %p57 = scmp.eq.s32.totalorder %s19, 1
      %p58 = scmp.ne.s32.totalorder %s53, %s55
      %p59 = scmp.eq.s32.totalorder %s19, 0
      %p60 = por %p58, %p59
      %p61 = scmp.ne.s32.totalorder %s53, %s55
      %p62 = scmp.eq.s32.totalorder %s24, 1
      %p63 = por %p61, %p62
      %p64 = scmp.ne.s32.totalorder %s55, %s56
      %p65 = scmp.eq.s32.totalorder %s24, 0
      %p66 = por %p64, %p65
      %p67 = scmp.ne.s32.totalorder %s55, %s56
      %p68 = scmp.eq.s32.totalorder %s25, 1
      %p69 = por %p67, %p68
      %p71 = scmp.ne.s32.totalorder %s56, %s70
      %p72 = scmp.eq.s32.totalorder %s25, 0
      %p73 = por %p71, %p72
      %s75 = sadd.s32 %s74, 1
      %p78 = scmp.eq.s32.totalorder %s19, 1
      %p79 = scmp.ne.s32.totalorder %s74, %s76
      %p80 = scmp.eq.s32.totalorder %s19, 0
      %p81 = por %p79, %p80
      %p82 = scmp.ne.s32.totalorder %s74, %s76
      %p83 = scmp.eq.s32.totalorder %s24, 1
      %p84 = por %p82, %p83
      %p85 = scmp.ne.s32.totalorder %s76, %s77
      %p86 = scmp.eq.s32.totalorder %s24, 0
      %p87 = por %p85, %p86
      %p88 = scmp.ne.s32.totalorder %s76, %s77
      %p89 = scmp.eq.s32.totalorder %s25, 1
      %p90 = por %p88, %p89
      %p92 = scmp.ne.s32.totalorder %s77, %s91
      %p93 = scmp.eq.s32.totalorder %s25, 0
      %p94 = por %p92, %p93
      %s96 = sadd.s32 %s95, 1
      %p99 = scmp.eq.s32.totalorder %s19, 1
      %p100 = scmp.ne.s32.totalorder %s95, %s97
      %p101 = scmp.eq.s32.totalorder %s19, 0
      %p102 = por %p100, %p101
      %p103 = scmp.ne.s32.totalorder %s95, %s97
      %p104 = scmp.eq.s32.totalorder %s24, 1
      %p105 = por %p103, %p104
      %p106 = scmp.ne.s32.totalorder %s97, %s98
      %p107 = scmp.eq.s32.totalorder %s24, 0
      %p108 = por %p106, %p107
      %p109 = scmp.ne.s32.totalorder %s97, %s98
      %p110 = scmp.eq.s32.totalorder %s25, 1
      %p111 = por %p109, %p110
      %p113 = scmp.ne.s32.totalorder %s98, %s112
      %p114 = scmp.eq.s32.totalorder %s25, 0
      %p115 = por %p113, %p114
      %s117 = sadd.s32 %s116, 1
      %p120 = scmp.eq.s32.totalorder %s19, 1
      %p121 = scmp.ne.s32.totalorder %s116, %s118
      %p122 = scmp.eq.s32.totalorder %s19, 0
      %p123 = por %p121, %p122
      %p124 = scmp.ne.s32.totalorder %s116, %s118
      %p125 = scmp.eq.s32.totalorder %s24, 1
      %p126 = por %p124, %p125
      %p127 = scmp.ne.s32.totalorder %s118, %s119
      %p128 = scmp.eq.s32.totalorder %s24, 0
      %p129 = por %p127, %p128
      %p130 = scmp.ne.s32.totalorder %s118, %s119
      %p131 = scmp.eq.s32.totalorder %s25, 1
      %p132 = por %p130, %p131
      %p134 = scmp.ne.s32.totalorder %s119, %s133
      %p135 = scmp.eq.s32.totalorder %s25, 0
      %p136 = por %p134, %p135
      %s138 = sadd.s32 %s137, 1
      %p141 = scmp.eq.s32.totalorder %s19, 1
      %p142 = scmp.ne.s32.totalorder %s137, %s139
      %p143 = scmp.eq.s32.totalorder %s19, 0
      %p144 = por %p142, %p143
      %p145 = scmp.ne.s32.totalorder %s137, %s139
      %p146 = scmp.eq.s32.totalorder %s24, 1
      %p147 = por %p145, %p146
      %p148 = scmp.ne.s32.totalorder %s139, %s140
      %p149 = scmp.eq.s32.totalorder %s24, 0
      %p150 = por %p148, %p149
      %p151 = scmp.ne.s32.totalorder %s139, %s140
      %p152 = scmp.eq.s32.totalorder %s25, 1
      %p153 = por %p151, %p152
      %p155 = scmp.ne.s32.totalorder %s140, %s154
      %p156 = scmp.eq.s32.totalorder %s25, 0
      %p157 = por %p155, %p156
      %s159 = sadd.s32 %s158, 1
      %p162 = scmp.eq.s32.totalorder %s19, 1
      %p163 = scmp.ne.s32.totalorder %s158, %s160
      %p164 = scmp.eq.s32.totalorder %s19, 0
      %p165 = por %p163, %p164
      %p166 = scmp.ne.s32.totalorder %s158, %s160
      %p167 = scmp.eq.s32.totalorder %s24, 1
      %p168 = por %p166, %p167
      %p169 = scmp.ne.s32.totalorder %s160, %s161
      %p170 = scmp.eq.s32.totalorder %s24, 0
      %p171 = por %p169, %p170
      %p172 = scmp.ne.s32.totalorder %s160, %s161
      %p173 = scmp.eq.s32.totalorder %s25, 1
      %p174 = por %p172, %p173
      %p176 = scmp.ne.s32.totalorder %s161, %s175
      %p177 = scmp.eq.s32.totalorder %s25, 0
      %p178 = por %p176, %p177
      %s180 = sadd.s32 %s179, 1
      %p183 = scmp.eq.s32.totalorder %s19, 1
      %p184 = scmp.ne.s32.totalorder %s179, %s181
      %p185 = scmp.eq.s32.totalorder %s19, 0
      %p186 = por %p184, %p185
      %p187 = scmp.ne.s32.totalorder %s179, %s181
      %p188 = scmp.eq.s32.totalorder %s24, 1
      %p189 = por %p187, %p188
      %p190 = scmp.ne.s32.totalorder %s181, %s182
      %p191 = scmp.eq.s32.totalorder %s24, 0
      %p192 = por %p190, %p191
      %p193 = scmp.ne.s32.totalorder %s181, %s182
      %p194 = scmp.eq.s32.totalorder %s25, 1
      %p195 = por %p193, %p194
      %p197 = scmp.ne.s32.totalorder %s182, %s196
      %p198 = scmp.eq.s32.totalorder %s25, 0
      %p199 = por %p197, %p198
      %s201 = sadd.s32 %s200, 1
      %p204 = scmp.eq.s32.totalorder %s19, 1
      %p205 = scmp.ne.s32.totalorder %s200, %s202
      %p206 = scmp.eq.s32.totalorder %s19, 0
      %p207 = por %p205, %p206
      %p208 = scmp.ne.s32.totalorder %s200, %s202
      %p209 = scmp.eq.s32.totalorder %s24, 1
      %p210 = por %p208, %p209
      %p211 = scmp.ne.s32.totalorder %s202, %s203
      %p212 = scmp.eq.s32.totalorder %s24, 0
      %p213 = por %p211, %p212
      %p214 = scmp.ne.s32.totalorder %s202, %s203
      %p215 = scmp.eq.s32.totalorder %s25, 1
      %p216 = por %p214, %p215
      %p218 = scmp.ne.s32.totalorder %s203, %s217
      %p219 = scmp.eq.s32.totalorder %s25, 0
      %p220 = por %p218, %p219
      %s221 = ssub.s32 %s19, %s26
      %p222 = scmp.eq.s32.totalorder %s221, 0
      %s224 = sadd.s32 %s223, 1
      %s225 = scalar_select %p222, %s223, %s224
      %p228 = pneg %p222
      %p229 = scmp.eq.s32.totalorder %s19, 1
      %p230 = por %p228, %p229
      %p231 = scmp.ne.s32.totalorder %s223, %s226
      %p232 = scmp.eq.s32.totalorder %s19, 0
      %p233 = por %p231, %p232
      %p234 = scmp.ne.s32.totalorder %s223, %s226
      %p235 = scmp.eq.s32.totalorder %s24, 1
      %p236 = por %p234, %p235
      %p237 = scmp.ne.s32.totalorder %s226, %s227
      %p238 = scmp.eq.s32.totalorder %s24, 0
      %p239 = por %p237, %p238
      %p240 = scmp.ne.s32.totalorder %s226, %s227
      %p241 = scmp.eq.s32.totalorder %s25, 1
      %p242 = por %p240, %p241
      %p244 = scmp.ne.s32.totalorder %s227, %s243
      %p245 = scmp.eq.s32.totalorder %s25, 0
      %p246 = por %p244, %p245
      %p247 = scmp.le.s32.totalorder 1, %s19
      %p248 = scmp.lt.s32.totalorder %s19, 3
      %p249 = pnand %p247, %p248
      %p250 = pneg %p249
      // Predicated region
      $region9: #{_lambda_.3} parent=5 // pred_check
        _
      $region10: #{_lambda_.3} parent=5 // pred_check_branch
        %252 = sbr.rel (%p249) target = $region12
      $region11: #{_lambda_.3} parent=5 // pred_region
        %s253 = ssub.s32 %s19, 1
        // Predicated region
        $region13: #{_lambda_.3} parent=11 // pred_check
          %p254 = pneg %p66
        $region14: #{_lambda_.3} parent=11 // pred_check_branch
          %256 = sbr.rel (%p254) target = $region16
        $region15: #{_lambda_.3} parent=11 // pred_region
          %258 = vsyncadd [#allocation9], 0
          %s259 = sshll.u32 %s1, 4
          %s260 = int_to_ptr.hbm [resolvable:$true] %s259
          %s261 = sshll.u32 [#allocation8], 4
          %s262 = int_to_ptr.vmem [resolvable:$true] %s261
          %267 = dma.hbm_to_vmem [thread:$0]  %s260, 12288, %s262, [#allocation9], 384, 384, 24
        $region16: #{_lambda_.3} parent=11 // pred_fallthru
          _
        // Predicated region
        $region17: #{_lambda_.3} parent=11 // pred_check
          %p268 = pneg %p87
        $region18: #{_lambda_.3} parent=11 // pred_check_branch
          %270 = sbr.rel (%p268) target = $region20
        $region19: #{_lambda_.3} parent=11 // pred_region
          %272 = vsyncadd [#allocation11], 0
          %s274 = sshll.u32 %s2, 4
          %s275 = int_to_ptr.hbm [resolvable:$true] %s274
          %s276 = sshll.u32 [#allocation10], 4
          %s277 = int_to_ptr.vmem [resolvable:$true] %s276
          %279 = dma.hbm_to_vmem [thread:$0]  %s275, 64, %s277, [#allocation11]
        $region20: #{_lambda_.3} parent=11 // pred_fallthru
          _
        // Predicated region
        $region21: #{_lambda_.3} parent=11 // pred_check
          %p280 = pneg %p108
        $region22: #{_lambda_.3} parent=11 // pred_check_branch
          %282 = sbr.rel (%p280) target = $region24
        $region23: #{_lambda_.3} parent=11 // pred_region
          %284 = vsyncadd [#allocation11], 0
          %s286 = sshll.u32 %s3, 4
          %s287 = int_to_ptr.hbm [resolvable:$true] %s286
          %s288 = sshll.u32 [#allocation12], 4
          %s289 = int_to_ptr.vmem [resolvable:$true] %s288
          %291 = dma.hbm_to_vmem [thread:$0]  %s287, 128, %s289, [#allocation11]
        $region24: #{_lambda_.3} parent=11 // pred_fallthru
          _
        // Predicated region
        $region25: #{_lambda_.3} parent=11 // pred_check
          %p292 = pneg %p129
        $region26: #{_lambda_.3} parent=11 // pred_check_branch
          %294 = sbr.rel (%p292) target = $region28
        $region27: #{_lambda_.3} parent=11 // pred_region
          %296 = vsyncadd [#allocation14], 0
          %s297 = sshll.u32 %s4, 4
          %s298 = int_to_ptr.hbm [resolvable:$true] %s297
          %s299 = sshll.u32 [#allocation13], 4
          %s300 = int_to_ptr.vmem [resolvable:$true] %s299
          %305 = dma.hbm_to_vmem [thread:$0]  %s298, 4352, %s300, [#allocation14], 128, 128, 8
        $region28: #{_lambda_.3} parent=11 // pred_fallthru
          _
        // Predicated region
        $region29: #{_lambda_.3} parent=11 // pred_check
          %p306 = pneg %p150
        $region30: #{_lambda_.3} parent=11 // pred_check_branch
          %308 = sbr.rel (%p306) target = $region32
        $region31: #{_lambda_.3} parent=11 // pred_region
          %310 = vsyncadd [#allocation14], 0
          %s311 = sshll.u32 %s5, 4
          %s312 = int_to_ptr.hbm [resolvable:$true] %s311
          %s313 = sshll.u32 [#allocation15], 4
          %s314 = int_to_ptr.vmem [resolvable:$true] %s313
          %319 = dma.hbm_to_vmem [thread:$0]  %s312, 1024, %s314, [#allocation14], 128, 128, 8
        $region32: #{_lambda_.3} parent=11 // pred_fallthru
          _
        // Predicated region
        $region33: #{_lambda_.3} parent=11 // pred_check
          %p320 = pneg %p171
        $region34: #{_lambda_.3} parent=11 // pred_check_branch
          %322 = sbr.rel (%p320) target = $region36
        $region35: #{_lambda_.3} parent=11 // pred_region
          %324 = vsyncadd [#allocation17], 0
          %s325 = sshll.u32 %s6, 4
          %s326 = int_to_ptr.hbm [resolvable:$true] %s325
          %s327 = sshll.u32 [#allocation16], 4
          %s328 = int_to_ptr.vmem [resolvable:$true] %s327
          %333 = dma.hbm_to_vmem [thread:$0]  %s326, 128, %s328, [#allocation17], 64, 64, 4
        $region36: #{_lambda_.3} parent=11 // pred_fallthru
          _
        // Predicated region
        $region37: #{_lambda_.3} parent=11 // pred_check
          %p334 = pneg %p192
        $region38: #{_lambda_.3} parent=11 // pred_check_branch
          %336 = sbr.rel (%p334) target = $region40
        $region39: #{_lambda_.3} parent=11 // pred_region
          _
        $region40: #{_lambda_.3} parent=11 // pred_fallthru
          _
        // Predicated region
        $region41: #{_lambda_.3} parent=11 // pred_check
          %p337 = pneg %p213
        $region42: #{_lambda_.3} parent=11 // pred_check_branch
          %339 = sbr.rel (%p337) target = $region44
        $region43: #{_lambda_.3} parent=11 // pred_region
          %341 = vsyncadd [#allocation17], 0
          %s342 = sshll.u32 %s8, 4
          %s343 = int_to_ptr.hbm [resolvable:$true] %s342
          %s344 = sshll.u32 [#allocation18], 4
          %s345 = int_to_ptr.vmem [resolvable:$true] %s344
          %350 = dma.hbm_to_vmem [thread:$0]  %s343, 1152, %s345, [#allocation17], 128, 128, 8
        $region44: #{_lambda_.3} parent=11 // pred_fallthru
          _
      $region12: #{_lambda_.3} parent=5 // pred_fallthru
        _
      %p351 = scmp.lt.s32.totalorder %s19, 2
      // Predicated region
      $region45: #{_lambda_.3} parent=5 // pred_check
        %p352 = pneg %p351
      $region46: #{_lambda_.3} parent=5 // pred_check_branch
        %354 = sbr.rel (%p352) target = $region48
      $region47: #{_lambda_.3} parent=5 // pred_region
        // Predicated region
        $region49: #{_lambda_.3} parent=47 // pred_check
          %p355 = pneg %p39
        $region50: #{_lambda_.3} parent=47 // pred_check_branch
          %357 = sbr.rel (%p355) target = $region52
        $region51: #{_lambda_.3} parent=47 // pred_region
          %p358 = scmp.lt.s32.totalorder %s19, 1
          %s359 = scalar_select %p358, %s19, 1
          %s360 = smul.addr %s359, 2
          %s361 = smul.addr %s360, 4
          %s362 = scalar_lea.vmem %s0, %s361
        $region52: #{_lambda_.3} parent=47 // pred_fallthru
          _
      $region48: #{_lambda_.3} parent=5 // pred_fallthru
        _
      %p363 = scmp.le.s32.totalorder 1, %s19
      %p364 = scmp.lt.s32.totalorder %s19, 3
      %p365 = pnand %p363, %p364
      %p366 = pneg %p365
      // Predicated region
      $region53: #{_lambda_.3} parent=5 // pred_check
        _
      $region54: #{_lambda_.3} parent=5 // pred_check_branch
        %368 = sbr.rel (%p365) target = $region56
      $region55: #{_lambda_.3} parent=5 // pred_region
        %s369 = ssub.s32 %s19, 1
        // Predicated region
        $region57: #{_lambda_.3} parent=55 // pred_check
          %p370 = pneg %p66
        $region58: #{_lambda_.3} parent=55 // pred_check_branch
          %372 = sbr.rel (%p370) target = $region60
        $region59: #{_lambda_.3} parent=55 // pred_region
          %374 = dma.done [#allocation9], 12288
        $region60: #{_lambda_.3} parent=55 // pred_fallthru
          _
        // Predicated region
        $region61: #{_lambda_.3} parent=55 // pred_check
          %p375 = pneg %p87
        $region62: #{_lambda_.3} parent=55 // pred_check_branch
          %377 = sbr.rel (%p375) target = $region64
        $region63: #{_lambda_.3} parent=55 // pred_region
          %379 = dma.done [#allocation11], 64
        $region64: #{_lambda_.3} parent=55 // pred_fallthru
          _
        // Predicated region
        $region65: #{_lambda_.3} parent=55 // pred_check
          %p380 = pneg %p108
        $region66: #{_lambda_.3} parent=55 // pred_check_branch
          %382 = sbr.rel (%p380) target = $region68
        $region67: #{_lambda_.3} parent=55 // pred_region
          %384 = dma.done [#allocation11], 128
        $region68: #{_lambda_.3} parent=55 // pred_fallthru
          _
        // Predicated region
        $region69: #{_lambda_.3} parent=55 // pred_check
          %p385 = pneg %p129
        $region70: #{_lambda_.3} parent=55 // pred_check_branch
          %387 = sbr.rel (%p385) target = $region72
        $region71: #{_lambda_.3} parent=55 // pred_region
          %389 = dma.done [#allocation14], 4352
        $region72: #{_lambda_.3} parent=55 // pred_fallthru
          _
        // Predicated region
        $region73: #{_lambda_.3} parent=55 // pred_check
          %p390 = pneg %p150
        $region74: #{_lambda_.3} parent=55 // pred_check_branch
          %392 = sbr.rel (%p390) target = $region76
        $region75: #{_lambda_.3} parent=55 // pred_region
          %394 = dma.done [#allocation14], 1024
        $region76: #{_lambda_.3} parent=55 // pred_fallthru
          _
        // Predicated region
        $region77: #{_lambda_.3} parent=55 // pred_check
          %p395 = pneg %p171
        $region78: #{_lambda_.3} parent=55 // pred_check_branch
          %397 = sbr.rel (%p395) target = $region80
        $region79: #{_lambda_.3} parent=55 // pred_region
          %399 = dma.done [#allocation17], 128
        $region80: #{_lambda_.3} parent=55 // pred_fallthru
          _
        // Predicated region
        $region81: #{_lambda_.3} parent=55 // pred_check
          %p400 = pneg %p213
        $region82: #{_lambda_.3} parent=55 // pred_check_branch
          %402 = sbr.rel (%p400) target = $region84
        $region83: #{_lambda_.3} parent=55 // pred_region
          %404 = dma.done [#allocation17], 1152
        $region84: #{_lambda_.3} parent=55 // pred_fallthru
          _
        %p405 = scmp.lt.s32.totalorder %s24, 1
        %s406 = scalar_select %p405, %s24, 1
        %s407 = smul.addr %s406, 2
        %s408 = smul.addr %s407, 4
        %s409 = scalar_lea.vmem %s0, %s408
        %p410 = pneg %p45
        %p411 = pneg %p42
        %p412 = pneg %p66
        %p413 = pneg %p63
        %p414 = pneg %p87
        %p415 = pneg %p84
        %p416 = pneg %p108
        %p417 = pneg %p105
        %p418 = pneg %p129
        %p419 = pneg %p126
        %p420 = pneg %p150
        %p421 = pneg %p147
        %p422 = pneg %p171
        %p423 = pneg %p168
        %p424 = pneg %p192
        %p425 = pneg %p189
        %p426 = pneg %p213
        %p427 = pneg %p210
        %p428 = pneg %p239
        %p429 = pneg %p236
        %p430 = scmp.lt.s32.totalorder %s24, 1
        %s431 = scalar_select %p430, %s24, 1
        %s432 = smul.addr %s431, 2
        %s433 = smul.addr %s432, 8
        %s434 = scalar_lea.vmem %s9, %s433
        %p435 = scmp.lt.s32.totalorder %s24, 1
        %s436 = scalar_select %p435, %s24, 1
        %s437 = smul.addr %s436, 2
        %s438 = smul.addr %s437, 4
        %s439 = scalar_lea.vmem %s0, %s438
        %p440 = scmp.lt.s32.totalorder %s24, 1
        %s441 = scalar_select %p440, %s24, 1
        %s442 = smul.addr %s441, 2
        %s443 = smul.addr %s442, 8
        %s444 = scalar_lea.vmem %s9, %s443
        %v446 = vld [vmem:[%s439] sm:$0xff]
        %v447 = vld [vmem:[#allocation8] sm:$0xff]
        %v448 = vld [vmem:[#allocation8 + $0x8] sm:$0xff]
        %v449 = vld [vmem:[#allocation8 + $0x10] sm:$0xff]
        %v450 = vld [vmem:[#allocation8 + $0x18] sm:$0xff]
        %v451 = vld [vmem:[#allocation8 + $0x20] sm:$0xff]
        %v452 = vld [vmem:[#allocation8 + $0x28] sm:$0xff]
        %v453 = vld [vmem:[#allocation8 + $0x30] sm:$0xff]
        %v454 = vld [vmem:[#allocation8 + $0x38] sm:$0xff]
        %v455 = vld [vmem:[#allocation8 + $0x40] sm:$0xff]
        %v456 = vld [vmem:[#allocation8 + $0x48] sm:$0xff]
        %v457 = vld [vmem:[#allocation8 + $0x50] sm:$0xff]
        %v458 = vld [vmem:[#allocation8 + $0x58] sm:$0xff]
        %v459 = vld [vmem:[#allocation8 + $0x60] sm:$0xff]
        %v460 = vld [vmem:[#allocation8 + $0x68] sm:$0xff]
        %v461 = vld [vmem:[#allocation8 + $0x70] sm:$0xff]
        %v462 = vld [vmem:[#allocation8 + $0x78] sm:$0xff]
        %v463 = vld [vmem:[#allocation8 + $0x80] sm:$0xff]
        %v464 = vld [vmem:[#allocation8 + $0x88] sm:$0xff]
        %v465 = vld [vmem:[#allocation8 + $0x90] sm:$0xff]
        %v466 = vld [vmem:[#allocation8 + $0x98] sm:$0xff]
        %v467 = vld [vmem:[#allocation8 + $0xa0] sm:$0xff]
        %v468 = vld [vmem:[#allocation8 + $0xa8] sm:$0xff]
        %v469 = vld [vmem:[#allocation8 + $0xb0] sm:$0xff]
        %v470 = vld [vmem:[#allocation8 + $0xb8] sm:$0xff]
        %v471 = vld [vmem:[#allocation8 + $0xc0] sm:$0xff]
        %v472 = vld [vmem:[#allocation8 + $0xc8] sm:$0xff]
        %v473 = vld [vmem:[#allocation8 + $0xd0] sm:$0xff]
        %v474 = vld [vmem:[#allocation8 + $0xd8] sm:$0xff]
        %v475 = vld [vmem:[#allocation8 + $0xe0] sm:$0xff]
        %v476 = vld [vmem:[#allocation8 + $0xe8] sm:$0xff]
        %v477 = vld [vmem:[#allocation8 + $0xf0] sm:$0xff]
        %v478 = vld [vmem:[#allocation8 + $0xf8] sm:$0xff]
        %v479 = vld [vmem:[#allocation8 + $0x100] sm:$0xff]
        %v480 = vld [vmem:[#allocation8 + $0x108] sm:$0xff]
        %v481 = vld [vmem:[#allocation8 + $0x110] sm:$0xff]
        %v482 = vld [vmem:[#allocation8 + $0x118] sm:$0xff]
        %v483 = vld [vmem:[#allocation8 + $0x120] sm:$0xff]
        %v484 = vld [vmem:[#allocation8 + $0x128] sm:$0xff]
        %v485 = vld [vmem:[#allocation8 + $0x130] sm:$0xff]
        %v486 = vld [vmem:[#allocation8 + $0x138] sm:$0xff]
        %v487 = vld [vmem:[#allocation8 + $0x140] sm:$0xff]
        %v488 = vld [vmem:[#allocation8 + $0x148] sm:$0xff]
        %v489 = vld [vmem:[#allocation8 + $0x150] sm:$0xff]
        %v490 = vld [vmem:[#allocation8 + $0x158] sm:$0xff]
        %v491 = vld [vmem:[#allocation8 + $0x160] sm:$0xff]
        %v492 = vld [vmem:[#allocation8 + $0x168] sm:$0xff]
        %v493 = vld [vmem:[#allocation8 + $0x170] sm:$0xff]
        %v494 = vld [vmem:[#allocation8 + $0x178] sm:$0xff]
        %v495 = vld [vmem:[#allocation8 + $0x180] sm:$0xff]
        %v496 = vld [vmem:[#allocation8 + $0x188] sm:$0xff]
        %v497 = vld [vmem:[#allocation8 + $0x190] sm:$0xff]
        %v498 = vld [vmem:[#allocation8 + $0x198] sm:$0xff]
        %v499 = vld [vmem:[#allocation8 + $0x1a0] sm:$0xff]
        %v500 = vld [vmem:[#allocation8 + $0x1a8] sm:$0xff]
        %v501 = vld [vmem:[#allocation8 + $0x1b0] sm:$0xff]
        %v502 = vld [vmem:[#allocation8 + $0x1b8] sm:$0xff]
        %v503 = vld [vmem:[#allocation8 + $0x1c0] sm:$0xff]
        %v504 = vld [vmem:[#allocation8 + $0x1c8] sm:$0xff]
        %v505 = vld [vmem:[#allocation8 + $0x1d0] sm:$0xff]
        %v506 = vld [vmem:[#allocation8 + $0x1d8] sm:$0xff]
        %v507 = vld [vmem:[#allocation8 + $0x1e0] sm:$0xff]
        %v508 = vld [vmem:[#allocation8 + $0x1e8] sm:$0xff]
        %v509 = vld [vmem:[#allocation8 + $0x1f0] sm:$0xff]
        %v510 = vld [vmem:[#allocation8 + $0x1f8] sm:$0xff]
        %v511 = vld [vmem:[#allocation8 + $0x200] sm:$0xff]
        %v512 = vld [vmem:[#allocation8 + $0x208] sm:$0xff]
        %v513 = vld [vmem:[#allocation8 + $0x210] sm:$0xff]
        %v514 = vld [vmem:[#allocation8 + $0x218] sm:$0xff]
        %v515 = vld [vmem:[#allocation8 + $0x220] sm:$0xff]
        %v516 = vld [vmem:[#allocation8 + $0x228] sm:$0xff]
        %v517 = vld [vmem:[#allocation8 + $0x230] sm:$0xff]
        %v518 = vld [vmem:[#allocation8 + $0x238] sm:$0xff]
        %v519 = vld [vmem:[#allocation8 + $0x240] sm:$0xff]
        %v520 = vld [vmem:[#allocation8 + $0x248] sm:$0xff]
        %v521 = vld [vmem:[#allocation8 + $0x250] sm:$0xff]
        %v522 = vld [vmem:[#allocation8 + $0x258] sm:$0xff]
        %v523 = vld [vmem:[#allocation8 + $0x260] sm:$0xff]
        %v524 = vld [vmem:[#allocation8 + $0x268] sm:$0xff]
        %v525 = vld [vmem:[#allocation8 + $0x270] sm:$0xff]
        %v526 = vld [vmem:[#allocation8 + $0x278] sm:$0xff]
        %v527 = vld [vmem:[#allocation8 + $0x280] sm:$0xff]
        %v528 = vld [vmem:[#allocation8 + $0x288] sm:$0xff]
        %v529 = vld [vmem:[#allocation8 + $0x290] sm:$0xff]
        %v530 = vld [vmem:[#allocation8 + $0x298] sm:$0xff]
        %v531 = vld [vmem:[#allocation8 + $0x2a0] sm:$0xff]
        %v532 = vld [vmem:[#allocation8 + $0x2a8] sm:$0xff]
        %v533 = vld [vmem:[#allocation8 + $0x2b0] sm:$0xff]
        %v534 = vld [vmem:[#allocation8 + $0x2b8] sm:$0xff]
        %v535 = vld [vmem:[#allocation8 + $0x2c0] sm:$0xff]
        %v536 = vld [vmem:[#allocation8 + $0x2c8] sm:$0xff]
        %v537 = vld [vmem:[#allocation8 + $0x2d0] sm:$0xff]
        %v538 = vld [vmem:[#allocation8 + $0x2d8] sm:$0xff]
        %v539 = vld [vmem:[#allocation8 + $0x2e0] sm:$0xff]
        %v540 = vld [vmem:[#allocation8 + $0x2e8] sm:$0xff]
        %v541 = vld [vmem:[#allocation8 + $0x2f0] sm:$0xff]
        %v542 = vld [vmem:[#allocation8 + $0x2f8] sm:$0xff]
        %544 = vst [vmem:[#allocation1] ss:$2 sm:$0xff] %v446
        %v545 = vld.sshfl [vmem:[#allocation1] sm:$0xff pattern:$0x75316420]
        %v546 = vld.sshfl [vmem:[#allocation1 + $0x8] sm:$0xff pattern:$0x75316420]
        %549 = vmatpush.msra.mxu0 %v492
        %550 = vmatpush.msra.mxu0 %v489
        %551 = vmatpush.msra.mxu0 %v486
        %552 = vmatpush.msra.mxu0 %v483
        %553 = vmatpush.msra.mxu0 %v480
        %554 = vmatpush.msra.mxu0 %v477
        %555 = vmatpush.msra.mxu0 %v474
        %556 = vmatpush.msra.mxu0 %v471
        %557 = vmatpush.msra.mxu0 %v468
        %558 = vmatpush.msra.mxu0 %v465
        %559 = vmatpush.msra.mxu0 %v462
        %560 = vmatpush.msra.mxu0 %v459
        %561 = vmatpush.msra.mxu0 %v456
        %562 = vmatpush.msra.mxu0 %v453
        %563 = vmatpush.msra.mxu0 %v450
        %564 = vmatpush.msra.mxu0 %v447
        %565 = vmatmul.f32.gmra.mxu0 %v545
        %v566 = vpop.f32.mrf.mxu0
        %v567 = vadd.f32 0.0, %v566
        %568 = vdwg.mxu0
        %569 = vmatpush.msra.mxu0 %v540
        %570 = vmatpush.msra.mxu0 %v537
        %571 = vmatpush.msra.mxu0 %v534
        %572 = vmatpush.msra.mxu0 %v531
        %573 = vmatpush.msra.mxu0 %v528
        %574 = vmatpush.msra.mxu0 %v525
        %575 = vmatpush.msra.mxu0 %v522
        %576 = vmatpush.msra.mxu0 %v519
        %577 = vmatpush.msra.mxu0 %v516
        %578 = vmatpush.msra.mxu0 %v513
        %579 = vmatpush.msra.mxu0 %v510
        %580 = vmatpush.msra.mxu0 %v507
        %581 = vmatpush.msra.mxu0 %v504
        %582 = vmatpush.msra.mxu0 %v501
        %583 = vmatpush.msra.mxu0 %v498
        %584 = vmatpush.msra.mxu0 %v495
        %585 = vmatmul.f32.gmra.mxu0 %v546
        %v586 = vpop.f32.mrf.mxu0
        %v587 = vadd.f32 %v567, %v586
        %588 = vdwg.mxu0
        %589 = vmatpush.msra.mxu0 %v493
        %590 = vmatpush.msra.mxu0 %v490
        %591 = vmatpush.msra.mxu0 %v487
        %592 = vmatpush.msra.mxu0 %v484
        %593 = vmatpush.msra.mxu0 %v481
        %594 = vmatpush.msra.mxu0 %v478
        %595 = vmatpush.msra.mxu0 %v475
        %596 = vmatpush.msra.mxu0 %v472
        %597 = vmatpush.msra.mxu0 %v469
        %598 = vmatpush.msra.mxu0 %v466
        %599 = vmatpush.msra.mxu0 %v463
        %600 = vmatpush.msra.mxu0 %v460
        %601 = vmatpush.msra.mxu0 %v457
        %602 = vmatpush.msra.mxu0 %v454
        %603 = vmatpush.msra.mxu0 %v451
        %604 = vmatpush.msra.mxu0 %v448
        %605 = vmatmul.f32.gmra.mxu0 %v545
        %v606 = vpop.f32.mrf.mxu0
        %v607 = vadd.f32 0.0, %v606
        %608 = vdwg.mxu0
        %609 = vmatpush.msra.mxu0 %v541
        %610 = vmatpush.msra.mxu0 %v538
        %611 = vmatpush.msra.mxu0 %v535
        %612 = vmatpush.msra.mxu0 %v532
        %613 = vmatpush.msra.mxu0 %v529
        %614 = vmatpush.msra.mxu0 %v526
        %615 = vmatpush.msra.mxu0 %v523
        %616 = vmatpush.msra.mxu0 %v520
        %617 = vmatpush.msra.mxu0 %v517
        %618 = vmatpush.msra.mxu0 %v514
        %619 = vmatpush.msra.mxu0 %v511
        %620 = vmatpush.msra.mxu0 %v508
        %621 = vmatpush.msra.mxu0 %v505
        %622 = vmatpush.msra.mxu0 %v502
        %623 = vmatpush.msra.mxu0 %v499
        %624 = vmatpush.msra.mxu0 %v496
        %625 = vmatmul.f32.gmra.mxu0 %v546
        %v626 = vpop.f32.mrf.mxu0
        %v627 = vadd.f32 %v607, %v626
        %628 = vdwg.mxu0
        %629 = vmatpush.msra.mxu0 %v494
        %630 = vmatpush.msra.mxu0 %v491
        %631 = vmatpush.msra.mxu0 %v488
        %632 = vmatpush.msra.mxu0 %v485
        %633 = vmatpush.msra.mxu0 %v482
        %634 = vmatpush.msra.mxu0 %v479
        %635 = vmatpush.msra.mxu0 %v476
        %636 = vmatpush.msra.mxu0 %v473
        %637 = vmatpush.msra.mxu0 %v470
        %638 = vmatpush.msra.mxu0 %v467
        %639 = vmatpush.msra.mxu0 %v464
        %640 = vmatpush.msra.mxu0 %v461
        %641 = vmatpush.msra.mxu0 %v458
        %642 = vmatpush.msra.mxu0 %v455
        %643 = vmatpush.msra.mxu0 %v452
        %644 = vmatpush.msra.mxu0 %v449
        %645 = vmatmul.f32.gmra.mxu0 %v545
        %v646 = vpop.f32.mrf.mxu0
        %v647 = vadd.f32 0.0, %v646
        %648 = vdwg.mxu0
        %649 = vmatpush.msra.mxu0 %v542
        %650 = vmatpush.msra.mxu0 %v539
        %651 = vmatpush.msra.mxu0 %v536
        %652 = vmatpush.msra.mxu0 %v533
        %653 = vmatpush.msra.mxu0 %v530
        %654 = vmatpush.msra.mxu0 %v527
        %655 = vmatpush.msra.mxu0 %v524
        %656 = vmatpush.msra.mxu0 %v521
        %657 = vmatpush.msra.mxu0 %v518
        %658 = vmatpush.msra.mxu0 %v515
        %659 = vmatpush.msra.mxu0 %v512
        %660 = vmatpush.msra.mxu0 %v509
        %661 = vmatpush.msra.mxu0 %v506
        %662 = vmatpush.msra.mxu0 %v503
        %663 = vmatpush.msra.mxu0 %v500
        %664 = vmatpush.msra.mxu0 %v497
        %665 = vmatmul.f32.gmra.mxu0 %v546
        %v666 = vpop.f32.mrf.mxu0
        %v667 = vadd.f32 %v647, %v666
        %668 = vdwg.mxu0
        %v671 = vrot.slane %v627, 4
        %vm672 = vcmask 1043456
        %v673 = vsel %vm672, %v587, %v671
        %675 = vst [vmem:[#allocation2] sm:$0xff] %v673
        %vm676 = vcmask 551936
        %677 = vst.msk [vmem:[#allocation2 + $0x8] sm:$0xf] %vm676, %v667
        %v678 = vld [vmem:[#allocation2] sm:$0xff]
        %v679 = vld [vmem:[#allocation2 + $0x8] sm:$0xf]
        %682 = vst [vmem:[#allocation1] ss:$2 sm:$0xff] %v678
        %s683 = scalar_lea.vmem [#allocation1], 16
        %684 = vst [vmem:[%s683] ss:$2 sm:$0xff] %v679
        %v685 = vld.sshfl [vmem:[#allocation1] sm:$0xff pattern:$0x75316420]
        %v686 = vld.sshfl [vmem:[#allocation1 + $0x8] sm:$0xff pattern:$0x75316420]
        %v687 = vld.sshfl [vmem:[#allocation1 + $0x10] sm:$0xff pattern:$0x75316420]
        %691 = vst [vmem:[#allocation3] sm:$0xf] %v685
        %692 = vst [vmem:[#allocation3 + $0x8] sm:$0xf] %v686
        %vm693 = vcmask 240640
        %694 = vst.msk [vmem:[#allocation3 + $0x10] sm:$0xf] %vm693, %v687
        %v695 = vld [vmem:[#allocation2] sm:$0xff]
        %v696 = vld [vmem:[#allocation2 + $0x8] sm:$0xf]
        %s699 = scalar_lea.vmem [#allocation1], 1
        %700 = vst [vmem:[%s699] ss:$2 sm:$0xff] %v695
        %s701 = scalar_lea.vmem [#allocation1], 17
        %702 = vst [vmem:[%s701] ss:$2 sm:$0xff] %v696
        %v703 = vld.sshfl [vmem:[#allocation1] sm:$0xff pattern:$0x75316420]
        %v704 = vld.sshfl [vmem:[#allocation1 + $0x8] sm:$0xff pattern:$0x75316420]
        %v705 = vld.sshfl [vmem:[#allocation1 + $0x10] sm:$0xff pattern:$0x75316420]
        %706 = vrot.lane.b32.xlu0 %v703, 127
        %v707 = vpop.permute.xlu0 %706
        %708 = vrot.lane.b32.xlu0 %v704, 127
        %v709 = vpop.permute.xlu0 %708
        %710 = vrot.lane.b32.xlu0 %v705, 127
        %v711 = vpop.permute.xlu0 %710
        %vm712 = vcmask 1039360
        %v713 = vsel %vm712, %v707, %v709
        %v714 = vsel %vm712, %v709, %v711
        %718 = vst [vmem:[#allocation3] sm:$0xf0] %v713
        %719 = vst [vmem:[#allocation3 + $0x8] sm:$0xf0] %v714
        %vm720 = vcmask 244740
        %721 = vst.msk [vmem:[#allocation3 + $0x10] sm:$0xf0] %vm720, %v711
        %v722 = vld [vmem:[#allocation2] sm:$0xff]
        %v723 = vld [vmem:[#allocation2 + $0x8] sm:$0xf]
        %726 = vst [vmem:[#allocation1] ss:$2 sm:$0xff] %v722
        %s727 = scalar_lea.vmem [#allocation1], 16
        %728 = vst [vmem:[%s727] ss:$2 sm:$0xff] %v723
        %v729 = vld.sshfl [vmem:[#allocation1] sm:$0xff pattern:$0x75316420]
        %v730 = vld.sshfl [vmem:[#allocation1 + $0x8] sm:$0xff pattern:$0x75316420]
        %v731 = vld.sshfl [vmem:[#allocation1 + $0x10] sm:$0xff pattern:$0x75316420]
        %732 = vrot.lane.b32.xlu0 %v729, 126
        %v733 = vpop.permute.xlu0 %732
        %734 = vrot.lane.b32.xlu0 %v730, 126
        %v735 = vpop.permute.xlu0 %734
        %736 = vrot.lane.b32.xlu0 %v731, 126
        %v737 = vpop.permute.xlu0 %736
        %vm738 = vcmask 1031168
        %v739 = vsel %vm738, %v733, %v735
        %v740 = vsel %vm738, %v735, %v737
        %744 = vst [vmem:[#allocation3 + $0x18] sm:$0xf] %v739
        %745 = vst [vmem:[#allocation3 + $0x20] sm:$0xf] %v740
        %746 = vst.msk [vmem:[#allocation3 + $0x28] sm:$0xf] %vm693, %v737
        %v747 = vld [vmem:[#allocation2] sm:$0xff]
        %v748 = vld [vmem:[#allocation2 + $0x8] sm:$0xf]
        %s751 = scalar_lea.vmem [#allocation1], 1
        %752 = vst [vmem:[%s751] ss:$2 sm:$0xff] %v747
        %s753 = scalar_lea.vmem [#allocation1], 17
        %754 = vst [vmem:[%s753] ss:$2 sm:$0xff] %v748
        %v755 = vld.sshfl [vmem:[#allocation1] sm:$0xff pattern:$0x75316420]
        %v756 = vld.sshfl [vmem:[#allocation1 + $0x8] sm:$0xff pattern:$0x75316420]
        %v757 = vld.sshfl [vmem:[#allocation1 + $0x10] sm:$0xff pattern:$0x75316420]
        %758 = vrot.lane.b32.xlu0 %v755, 110
        %v759 = vpop.permute.xlu0 %758
        %760 = vrot.lane.b32.xlu0 %v756, 110
        %v761 = vpop.permute.xlu0 %760
        %762 = vrot.lane.b32.xlu0 %v757, 110
        %v763 = vpop.permute.xlu0 %762
        %vm764 = vcmask 900096
        %v765 = vsel %vm764, %v759, %v761
        %v766 = vsel %vm764, %v761, %v763
        %770 = vst [vmem:[#allocation3 + $0x18] sm:$0xf0] %v765
        %771 = vst [vmem:[#allocation3 + $0x20] sm:$0xf0] %v766
        %772 = vst.msk [vmem:[#allocation3 + $0x28] sm:$0xf0] %vm720, %v763
        %v773 = vld [vmem:[#allocation2] sm:$0xff]
        %v774 = vld [vmem:[#allocation2 + $0x8] sm:$0xf]
        %777 = vst [vmem:[#allocation1] ss:$2 sm:$0xff] %v773
        %s778 = scalar_lea.vmem [#allocation1], 16
        %779 = vst [vmem:[%s778] ss:$2 sm:$0xff] %v774
        %v780 = vld.sshfl [vmem:[#allocation1] sm:$0xff pattern:$0x75316420]
        %v781 = vld.sshfl [vmem:[#allocation1 + $0x8] sm:$0xff pattern:$0x75316420]
        %v782 = vld.sshfl [vmem:[#allocation1 + $0x10] sm:$0xff pattern:$0x75316420]
        %783 = vrot.lane.b32.xlu0 %v780, 109
        %v784 = vpop.permute.xlu0 %783
        %785 = vrot.lane.b32.xlu0 %v781, 109
        %v786 = vpop.permute.xlu0 %785
        %787 = vrot.lane.b32.xlu0 %v782, 109
        %v788 = vpop.permute.xlu0 %787
        %vm789 = vcmask 891904
        %v790 = vsel %vm789, %v784, %v786
        %v791 = vsel %vm789, %v786, %v788
        %795 = vst [vmem:[#allocation3 + $0x30] sm:$0xf] %v790
        %796 = vst [vmem:[#allocation3 + $0x38] sm:$0xf] %v791
        %797 = vst.msk [vmem:[#allocation3 + $0x40] sm:$0xf] %vm693, %v788
        %v798 = vld [vmem:[#allocation2] sm:$0xff]
        %v799 = vld [vmem:[#allocation2 + $0x8] sm:$0xf]
        %s802 = scalar_lea.vmem [#allocation1], 1
        %803 = vst [vmem:[%s802] ss:$2 sm:$0xff] %v798
        %s804 = scalar_lea.vmem [#allocation1], 17
        %805 = vst [vmem:[%s804] ss:$2 sm:$0xff] %v799
        %v806 = vld.sshfl [vmem:[#allocation1] sm:$0xff pattern:$0x75316420]
        %v807 = vld.sshfl [vmem:[#allocation1 + $0x8] sm:$0xff pattern:$0x75316420]
        %v808 = vld.sshfl [vmem:[#allocation1 + $0x10] sm:$0xff pattern:$0x75316420]
        %809 = vrot.lane.b32.xlu0 %v806, 108
        %v810 = vpop.permute.xlu0 %809
        %811 = vrot.lane.b32.xlu0 %v807, 108
        %v812 = vpop.permute.xlu0 %811
        %813 = vrot.lane.b32.xlu0 %v808, 108
        %v814 = vpop.permute.xlu0 %813
        %vm815 = vcmask 883712
        %v816 = vsel %vm815, %v810, %v812
        %v817 = vsel %vm815, %v812, %v814
        %821 = vst [vmem:[#allocation3 + $0x30] sm:$0xf0] %v816
        %822 = vst [vmem:[#allocation3 + $0x38] sm:$0xf0] %v817
        %823 = vst.msk [vmem:[#allocation3 + $0x40] sm:$0xf0] %vm720, %v814
        %v824 = vld [vmem:[#allocation2] sm:$0xff]
        %v825 = vld [vmem:[#allocation2 + $0x8] sm:$0xf]
        %828 = vst [vmem:[#allocation1] ss:$2 sm:$0xff] %v824
        %s829 = scalar_lea.vmem [#allocation1], 16
        %830 = vst [vmem:[%s829] ss:$2 sm:$0xff] %v825
        %v831 = vld.sshfl [vmem:[#allocation1] sm:$0xff pattern:$0x75316420]
        %v832 = vld.sshfl [vmem:[#allocation1 + $0x8] sm:$0xff pattern:$0x75316420]
        %v833 = vld.sshfl [vmem:[#allocation1 + $0x10] sm:$0xff pattern:$0x75316420]
        %834 = vrot.lane.b32.xlu0 %v831, 92
        %v835 = vpop.permute.xlu0 %834
        %836 = vrot.lane.b32.xlu0 %v832, 92
        %v837 = vpop.permute.xlu0 %836
        %838 = vrot.lane.b32.xlu0 %v833, 92
        %v839 = vpop.permute.xlu0 %838
        %vm840 = vcmask 752640
        %v841 = vsel %vm840, %v835, %v837
        %v842 = vsel %vm840, %v837, %v839
        %846 = vst [vmem:[#allocation3 + $0x48] sm:$0xf] %v841
        %847 = vst [vmem:[#allocation3 + $0x50] sm:$0xf] %v842
        %848 = vst.msk [vmem:[#allocation3 + $0x58] sm:$0xf] %vm693, %v839
        %v849 = vld [vmem:[#allocation2] sm:$0xff]
        %v850 = vld [vmem:[#allocation2 + $0x8] sm:$0xf]
        %s853 = scalar_lea.vmem [#allocation1], 1
        %854 = vst [vmem:[%s853] ss:$2 sm:$0xff] %v849
        %s855 = scalar_lea.vmem [#allocation1], 17
        %856 = vst [vmem:[%s855] ss:$2 sm:$0xff] %v850
        %v857 = vld.sshfl [vmem:[#allocation1] sm:$0xff pattern:$0x75316420]
        %v858 = vld.sshfl [vmem:[#allocation1 + $0x8] sm:$0xff pattern:$0x75316420]
        %v859 = vld.sshfl [vmem:[#allocation1 + $0x10] sm:$0xff pattern:$0x75316420]
        %860 = vrot.lane.b32.xlu0 %v857, 91
        %v861 = vpop.permute.xlu0 %860
        %862 = vrot.lane.b32.xlu0 %v858, 91
        %v863 = vpop.permute.xlu0 %862
        %864 = vrot.lane.b32.xlu0 %v859, 91
        %v865 = vpop.permute.xlu0 %864
        %vm866 = vcmask 744448
        %v867 = vsel %vm866, %v861, %v863
        %v868 = vsel %vm866, %v863, %v865
        %872 = vst [vmem:[#allocation3 + $0x48] sm:$0xf0] %v867
        %873 = vst [vmem:[#allocation3 + $0x50] sm:$0xf0] %v868
        %874 = vst.msk [vmem:[#allocation3 + $0x58] sm:$0xf0] %vm720, %v865
        %v875 = vld [vmem:[#allocation2] sm:$0xff]
        %v876 = vld [vmem:[#allocation2 + $0x8] sm:$0xf]
        %879 = vst [vmem:[#allocation1] ss:$2 sm:$0xff] %v875
        %s880 = scalar_lea.vmem [#allocation1], 16
        %881 = vst [vmem:[%s880] ss:$2 sm:$0xff] %v876
        %v882 = vld.sshfl [vmem:[#allocation1] sm:$0xff pattern:$0x75316420]
        %v883 = vld.sshfl [vmem:[#allocation1 + $0x8] sm:$0xff pattern:$0x75316420]
        %v884 = vld.sshfl [vmem:[#allocation1 + $0x10] sm:$0xff pattern:$0x75316420]
        %885 = vrot.lane.b32.xlu0 %v882, 90
        %v886 = vpop.permute.xlu0 %885
        %887 = vrot.lane.b32.xlu0 %v883, 90
        %v888 = vpop.permute.xlu0 %887
        %889 = vrot.lane.b32.xlu0 %v884, 90
        %v890 = vpop.permute.xlu0 %889
        %vm891 = vcmask 736256
        %v892 = vsel %vm891, %v886, %v888
        %v893 = vsel %vm891, %v888, %v890
        %897 = vst [vmem:[#allocation3 + $0x60] sm:$0xf] %v892
        %898 = vst [vmem:[#allocation3 + $0x68] sm:$0xf] %v893
        %899 = vst.msk [vmem:[#allocation3 + $0x70] sm:$0xf] %vm693, %v890
        %v900 = vld [vmem:[#allocation10] sm:$0xf]
        %v901 = vld [vmem:[#allocation3] sm:$0xff]
        %v902 = vld [vmem:[#allocation3 + $0x8] sm:$0xff]
        %v903 = vld [vmem:[#allocation3 + $0x10] sm:$0xff]
        %v904 = vld [vmem:[#allocation3 + $0x18] sm:$0xff]
        %v905 = vld [vmem:[#allocation3 + $0x20] sm:$0xff]
        %v906 = vld [vmem:[#allocation3 + $0x28] sm:$0xff]
        %v907 = vld [vmem:[#allocation3 + $0x30] sm:$0xff]
        %v908 = vld [vmem:[#allocation3 + $0x38] sm:$0xff]
        %v909 = vld [vmem:[#allocation3 + $0x40] sm:$0xff]
        %v910 = vld [vmem:[#allocation3 + $0x48] sm:$0xff]
        %v911 = vld [vmem:[#allocation3 + $0x50] sm:$0xff]
        %v912 = vld [vmem:[#allocation3 + $0x58] sm:$0xff]
        %v913 = vld [vmem:[#allocation3 + $0x60] sm:$0xf]
        %v914 = vld [vmem:[#allocation3 + $0x68] sm:$0xf]
        %v915 = vld [vmem:[#allocation3 + $0x70] sm:$0xf]
        %v916 = vpack.c.bf16 %v904, %v901
        %v917 = vpack.c.bf16 %v905, %v902
        %v918 = vpack.c.bf16 %v906, %v903
        %v919 = vpack.c.bf16 %v910, %v907
        %v920 = vpack.c.bf16 %v911, %v908
        %v921 = vpack.c.bf16 %v912, %v909
        %v922 = vpack.c.bf16 %v913, %v913
        %v923 = vpack.c.bf16 %v914, %v914
        %v924 = vpack.c.bf16 %v915, %v915
        %vm925 = vcmask 293888
        %v927 = vsel %vm925, %v900, 0
        %vm929 = vcmask 1041408
        %v931 = vsel %vm929, %v922, 0
        %v934 = vsel %vm929, %v923, 0
        %v937 = vsel %vm929, %v924, 0
        %939 = vmatpush.bf16.msra.mxu0 0
        %940 = vmatpush.bf16.msra.mxu0 0
        %941 = vmatpush.bf16.msra.mxu0 0
        %942 = vmatpush.bf16.msra.mxu0 0
        %943 = vmatpush.bf16.msra.mxu0 0
        %944 = vmatpush.bf16.msra.mxu0 %v931
        %945 = vmatpush.bf16.msra.mxu0 %v919
        %946 = vmatpush.bf16.msra.mxu0 %v916
        %947 = vmatmul.bf16.gmra.mxu0 %v927
        %v948 = vpop.f32.mrf.mxu0
        %v949 = vadd.f32 0.0, %v948
        %v950 = vpop.f32.mrf.mxu0
        %951 = vdwg.mxu0
        %952 = vmatpush.bf16.msra.mxu0 0
        %953 = vmatpush.bf16.msra.mxu0 0
        %954 = vmatpush.bf16.msra.mxu0 0
        %955 = vmatpush.bf16.msra.mxu0 0
        %956 = vmatpush.bf16.msra.mxu0 0
        %957 = vmatpush.bf16.msra.mxu0 %v934
        %958 = vmatpush.bf16.msra.mxu0 %v920
        %959 = vmatpush.bf16.msra.mxu0 %v917
        %960 = vmatmul.bf16.gmra.mxu0 %v927
        %v961 = vpop.f32.mrf.mxu0
        %v962 = vadd.f32 0.0, %v961
        %v963 = vpop.f32.mrf.mxu0
        %964 = vdwg.mxu0
        %965 = vmatpush.bf16.msra.mxu0 0
        %966 = vmatpush.bf16.msra.mxu0 0
        %967 = vmatpush.bf16.msra.mxu0 0
        %968 = vmatpush.bf16.msra.mxu0 0
        %969 = vmatpush.bf16.msra.mxu0 0
        %970 = vmatpush.bf16.msra.mxu0 %v937
        %971 = vmatpush.bf16.msra.mxu0 %v921
        %972 = vmatpush.bf16.msra.mxu0 %v918
        %973 = vmatmul.bf16.gmra.mxu0 %v927
        %v974 = vpop.f32.mrf.mxu0
        %v975 = vadd.f32 0.0, %v974
        %v976 = vpop.f32.mrf.mxu0
        %977 = vdwg.mxu0
        %v978 = vld [vmem:[#allocation12] sm:$0xff]
        %980 = vset.pattern.permute.xlu0 0
        %981 = vperm.xlu0 %980, %v978
        %v982 = vpop.permute.xlu0 %981
        %v984 = vmul.f32 %v949, %v982
        %v985 = vmul.f32 %v962, %v982
        %v986 = vmul.f32 %v975, %v982
        %987 = vset.pattern.permute.xlu0 1
        %988 = vperm.xlu0 %987, %v978
        %v989 = vpop.permute.xlu0 %988
        %v991 = vadd.f32 %v984, %v989
        %v992 = vadd.f32 %v985, %v989
        %v993 = vadd.f32 %v986, %v989
        %v994 = vmax.f32 %v991, 0.0
        %v995 = vmax.f32 %v992, 0.0
        %v996 = vmax.f32 %v993, 0.0
        %997 = vst [vmem:[#allocation4] sm:$0xff] %v994
        %998 = vst [vmem:[#allocation4 + $0x8] sm:$0xff] %v995
        %vm999 = vcmask 244736
        %1000 = vst.msk [vmem:[#allocation4 + $0x10] sm:$0xff] %vm999, %v996
        %v1001 = vld [vmem:[#allocation4] sm:$0xff]
        %v1002 = vld [vmem:[#allocation4 + $0x8] sm:$0xff]
        %v1003 = vld [vmem:[#allocation4 + $0x10] sm:$0xff]
        %1007 = vrot.lane.b32.xlu0 %v1001, 127
        %v1008 = vpop.permute.xlu0 %1007
        %1009 = vrot.lane.b32.xlu0 %v1002, 127
        %v1010 = vpop.permute.xlu0 %1009
        %1011 = vrot.lane.b32.xlu0 %v1003, 127
        %v1012 = vpop.permute.xlu0 %1011
        %v1013 = vsel %vm712, %v1008, %v1010
        %v1014 = vsel %vm712, %v1010, %v1012
        %v1018 = vmax.f32 %v1001, %v1013
        %v1019 = vmax.f32 %v1002, %v1014
        %v1020 = vmax.f32 %v1003, %v1012
        %1021 = vrot.lane.b32.xlu0 %v1001, 110
        %v1022 = vpop.permute.xlu0 %1021
        %1023 = vrot.lane.b32.xlu0 %v1002, 110
        %v1024 = vpop.permute.xlu0 %1023
        %1025 = vrot.lane.b32.xlu0 %v1003, 110
        %v1026 = vpop.permute.xlu0 %1025
        %v1027 = vsel %vm764, %v1022, %v1024
        %v1028 = vsel %vm764, %v1024, %v1026
        %v1032 = vmax.f32 %v1018, %v1027
        %v1033 = vmax.f32 %v1019, %v1028
        %v1034 = vmax.f32 %v1020, %v1026
        %1035 = vrot.lane.b32.xlu0 %v1001, 109
        %v1036 = vpop.permute.xlu0 %1035
        %1037 = vrot.lane.b32.xlu0 %v1002, 109
        %v1038 = vpop.permute.xlu0 %1037
        %1039 = vrot.lane.b32.xlu0 %v1003, 109
        %v1040 = vpop.permute.xlu0 %1039
        %v1041 = vsel %vm789, %v1036, %v1038
        %v1042 = vsel %vm789, %v1038, %v1040
        %v1046 = vmax.f32 %v1032, %v1041
        %v1047 = vmax.f32 %v1033, %v1042
        %v1048 = vmax.f32 %v1034, %v1040
        %v1049 = vld [vmem:[#allocation13] sm:$0xff]
        %v1050 = vld [vmem:[#allocation13 + $0x8] sm:$0xff]
        %v1051 = vld [vmem:[#allocation13 + $0x10] sm:$0xff]
        %v1052 = vld [vmem:[#allocation13 + $0x18] sm:$0xff]
        %v1053 = vld [vmem:[#allocation13 + $0x20] sm:$0xff]
        %v1054 = vld [vmem:[#allocation13 + $0x28] sm:$0xff]
        %v1055 = vld [vmem:[#allocation13 + $0x30] sm:$0xff]
        %v1056 = vld [vmem:[#allocation13 + $0x38] sm:$0xff]
        %v1057 = vld [vmem:[#allocation13 + $0x40] sm:$0xff]
        %v1058 = vld [vmem:[#allocation13 + $0x48] sm:$0xff]
        %v1059 = vld [vmem:[#allocation13 + $0x50] sm:$0xff]
        %v1060 = vld [vmem:[#allocation13 + $0x58] sm:$0xff]
        %v1061 = vld [vmem:[#allocation13 + $0x60] sm:$0xff]
        %v1062 = vld [vmem:[#allocation13 + $0x68] sm:$0xff]
        %v1063 = vld [vmem:[#allocation13 + $0x70] sm:$0xff]
        %v1064 = vld [vmem:[#allocation13 + $0x78] sm:$0xff]
        %v1065 = vld [vmem:[#allocation13 + $0x80] sm:$0xff]
        %v1066 = vld [vmem:[#allocation13 + $0x88] sm:$0xff]
        %v1067 = vld [vmem:[#allocation13 + $0x90] sm:$0xff]
        %v1068 = vld [vmem:[#allocation13 + $0x98] sm:$0xff]
        %v1069 = vld [vmem:[#allocation13 + $0xa0] sm:$0xff]
        %v1070 = vld [vmem:[#allocation13 + $0xa8] sm:$0xff]
        %v1071 = vld [vmem:[#allocation13 + $0xb0] sm:$0xff]
        %v1072 = vld [vmem:[#allocation13 + $0xb8] sm:$0xff]
        %v1073 = vld [vmem:[#allocation13 + $0xc0] sm:$0xff]
        %v1074 = vld [vmem:[#allocation13 + $0xc8] sm:$0xff]
        %v1075 = vld [vmem:[#allocation13 + $0xd0] sm:$0xff]
        %v1076 = vld [vmem:[#allocation13 + $0xd8] sm:$0xff]
        %v1077 = vld [vmem:[#allocation13 + $0xe0] sm:$0xff]
        %v1078 = vld [vmem:[#allocation13 + $0xe8] sm:$0xff]
        %v1079 = vld [vmem:[#allocation13 + $0xf0] sm:$0xff]
        %v1080 = vld [vmem:[#allocation13 + $0xf8] sm:$0xff]
        %v1081 = vld [vmem:[#allocation13 + $0x100] sm:$0xff]
        %v1082 = vld [vmem:[#allocation13 + $0x108] sm:$0x7]
        %vm1083 = vcmask 89088
        %v1085 = vsel %vm1083, %v1048, 0
        %vm1087 = vcmask 1042432
        %v1089 = vsel %vm1087, %v1082, 0
        %1091 = vmatpush.msra.mxu0 %v1064
        %1092 = vmatpush.msra.mxu0 %v1063
        %1093 = vmatpush.msra.mxu0 %v1062
        %1094 = vmatpush.msra.mxu0 %v1061
        %1095 = vmatpush.msra.mxu0 %v1060
        %1096 = vmatpush.msra.mxu0 %v1059
        %1097 = vmatpush.msra.mxu0 %v1058
        %1098 = vmatpush.msra.mxu0 %v1057
        %1099 = vmatpush.msra.mxu0 %v1056
        %1100 = vmatpush.msra.mxu0 %v1055
        %1101 = vmatpush.msra.mxu0 %v1054
        %1102 = vmatpush.msra.mxu0 %v1053
        %1103 = vmatpush.msra.mxu0 %v1052
        %1104 = vmatpush.msra.mxu0 %v1051
        %1105 = vmatpush.msra.mxu0 %v1050
        %1106 = vmatpush.msra.mxu0 %v1049
        %1107 = vmatmul.f32.gmra.mxu0 %v1046
        %v1108 = vpop.f32.mrf.mxu0
        %v1109 = vadd.f32 0.0, %v1108
        %1110 = vdwg.mxu0
        %1111 = vmatpush.msra.mxu0 %v1080
        %1112 = vmatpush.msra.mxu0 %v1079
        %1113 = vmatpush.msra.mxu0 %v1078
        %1114 = vmatpush.msra.mxu0 %v1077
        %1115 = vmatpush.msra.mxu0 %v1076
        %1116 = vmatpush.msra.mxu0 %v1075
        %1117 = vmatpush.msra.mxu0 %v1074
        %1118 = vmatpush.msra.mxu0 %v1073
        %1119 = vmatpush.msra.mxu0 %v1072
        %1120 = vmatpush.msra.mxu0 %v1071
        %1121 = vmatpush.msra.mxu0 %v1070
        %1122 = vmatpush.msra.mxu0 %v1069
        %1123 = vmatpush.msra.mxu0 %v1068
        %1124 = vmatpush.msra.mxu0 %v1067
        %1125 = vmatpush.msra.mxu0 %v1066
        %1126 = vmatpush.msra.mxu0 %v1065
        %1127 = vmatmul.f32.gmra.mxu0 %v1047
        %v1128 = vpop.f32.mrf.mxu0
        %v1129 = vadd.f32 %v1109, %v1128
        %1130 = vdwg.mxu0
        %1131 = vmatpush.msra.mxu0 0.0
        %1132 = vmatpush.msra.mxu0 0.0
        %1133 = vmatpush.msra.mxu0 0.0
        %1134 = vmatpush.msra.mxu0 0.0
        %1135 = vmatpush.msra.mxu0 0.0
        %1136 = vmatpush.msra.mxu0 0.0
        %1137 = vmatpush.msra.mxu0 0.0
        %1138 = vmatpush.msra.mxu0 0.0
        %1139 = vmatpush.msra.mxu0 0.0
        %1140 = vmatpush.msra.mxu0 0.0
        %1141 = vmatpush.msra.mxu0 0.0
        %1142 = vmatpush.msra.mxu0 0.0
        %1143 = vmatpush.msra.mxu0 0.0
        %1144 = vmatpush.msra.mxu0 0.0
        %1145 = vmatpush.msra.mxu0 %v1089
        %1146 = vmatpush.msra.mxu0 %v1081
        %1147 = vmatmul.f32.gmra.mxu0 %v1085
        %v1148 = vpop.f32.mrf.mxu0
        %v1149 = vadd.f32 %v1129, %v1148
        %1150 = vdwg.mxu0
        %v1151 = vld [vmem:[#allocation15] sm:$0xff]
        %v1152 = vld [vmem:[#allocation15 + $0x8] sm:$0xff]
        %v1153 = vld [vmem:[#allocation15 + $0x10] sm:$0xff]
        %v1154 = vld [vmem:[#allocation15 + $0x18] sm:$0xff]
        %v1155 = vld [vmem:[#allocation15 + $0x20] sm:$0xff]
        %v1156 = vld [vmem:[#allocation15 + $0x28] sm:$0xff]
        %v1157 = vld [vmem:[#allocation15 + $0x30] sm:$0xff]
        %v1158 = vld [vmem:[#allocation15 + $0x38] sm:$0xff]
        %vm1159 = vcmask 523264
        %v1161 = vsel %vm1159, %v1149, 0
        %1163 = vmatpush.msra.mxu0 0.0
        %1164 = vmatpush.msra.mxu0 0.0
        %1165 = vmatpush.msra.mxu0 0.0
        %1166 = vmatpush.msra.mxu0 0.0
        %1167 = vmatpush.msra.mxu0 0.0
        %1168 = vmatpush.msra.mxu0 0.0
        %1169 = vmatpush.msra.mxu0 0.0
        %1170 = vmatpush.msra.mxu0 0.0
        %1171 = vmatpush.msra.mxu0 %v1158
        %1172 = vmatpush.msra.mxu0 %v1157
        %1173 = vmatpush.msra.mxu0 %v1156
        %1174 = vmatpush.msra.mxu0 %v1155
        %1175 = vmatpush.msra.mxu0 %v1154
        %1176 = vmatpush.msra.mxu0 %v1153
        %1177 = vmatpush.msra.mxu0 %v1152
        %1178 = vmatpush.msra.mxu0 %v1151
        %1179 = vmatmul.f32.gmra.mxu0 %v1161
        %v1180 = vpop.f32.mrf.mxu0
        %v1181 = vadd.f32 0.0, %v1180
        %1182 = vdwg.mxu0
        %vm1183 = vcmask 818176
        %1184 = vst.msk [vmem:[#allocation5] sm:$0xff] %vm1183, %v1181
        %v1185 = vld [vmem:[#allocation5] sm:$0xff]
        %vm1186 = vcmask 637952
        %1187 = vst.msk [vmem:[#allocation6] sm:$0xff] %vm1186, %v1185
        %v1188 = vld [vmem:[#allocation5] sm:$0xff]
        %1190 = vrot.lane.b32.xlu0 %v1188, 127
        %v1191 = vpop.permute.xlu0 %1190
        %1193 = vst.msk [vmem:[#allocation6 + $0x8] sm:$0xff] %vm1186, %v1191
        %v1194 = vld [vmem:[#allocation5] sm:$0xff]
        %1196 = vrot.lane.b32.xlu0 %v1194, 126
        %v1197 = vpop.permute.xlu0 %1196
        %1199 = vst.msk [vmem:[#allocation6 + $0x10] sm:$0xff] %vm1186, %v1197
        %v1200 = vld [vmem:[#allocation5] sm:$0xff]
        %1202 = vrot.lane.b32.xlu0 %v1200, 118
        %v1203 = vpop.permute.xlu0 %1202
        %1205 = vst.msk [vmem:[#allocation6 + $0x18] sm:$0xff] %vm1186, %v1203
        %v1206 = vld [vmem:[#allocation5] sm:$0xff]
        %1208 = vrot.lane.b32.xlu0 %v1206, 117
        %v1209 = vpop.permute.xlu0 %1208
        %1211 = vst.msk [vmem:[#allocation6 + $0x20] sm:$0xff] %vm1186, %v1209
        %v1212 = vld [vmem:[#allocation5] sm:$0xff]
        %1214 = vrot.lane.b32.xlu0 %v1212, 116
        %v1215 = vpop.permute.xlu0 %1214
        %1217 = vst.msk [vmem:[#allocation6 + $0x28] sm:$0xff] %vm1186, %v1215
        %v1218 = vld [vmem:[#allocation5] sm:$0xff]
        %1220 = vrot.lane.b32.xlu0 %v1218, 108
        %v1221 = vpop.permute.xlu0 %1220
        %1223 = vst.msk [vmem:[#allocation6 + $0x30] sm:$0xff] %vm1186, %v1221
        %v1224 = vld [vmem:[#allocation5] sm:$0xff]
        %1226 = vrot.lane.b32.xlu0 %v1224, 107
        %v1227 = vpop.permute.xlu0 %1226
        %1229 = vst.msk [vmem:[#allocation6 + $0x38] sm:$0xff] %vm1186, %v1227
        %v1230 = vld [vmem:[#allocation5] sm:$0xff]
        %1232 = vrot.lane.b32.xlu0 %v1230, 106
        %v1233 = vpop.permute.xlu0 %1232
        %1235 = vst.msk [vmem:[#allocation6 + $0x40] sm:$0xff] %vm1186, %v1233
        %v1236 = vld [vmem:[#allocation16] sm:$0xf]
        %v1237 = vld [vmem:[#allocation16 + $0x4] sm:$0xf]
        %v1238 = vld [vmem:[#allocation6] sm:$0xff]
        %v1239 = vld [vmem:[#allocation6 + $0x8] sm:$0xff]
        %v1240 = vld [vmem:[#allocation6 + $0x10] sm:$0xff]
        %v1241 = vld [vmem:[#allocation6 + $0x18] sm:$0xff]
        %v1242 = vld [vmem:[#allocation6 + $0x20] sm:$0xff]
        %v1243 = vld [vmem:[#allocation6 + $0x28] sm:$0xff]
        %v1244 = vld [vmem:[#allocation6 + $0x30] sm:$0xff]
        %v1245 = vld [vmem:[#allocation6 + $0x38] sm:$0xff]
        %v1246 = vld [vmem:[#allocation6 + $0x40] sm:$0xff]
        %v1247 = vpack.c.bf16 %v1239, %v1238
        %v1248 = vpack.c.bf16 %v1241, %v1240
        %v1249 = vpack.c.bf16 %v1243, %v1242
        %v1250 = vpack.c.bf16 %v1245, %v1244
        %v1251 = vpack.c.bf16 %v1246, %v1246
        %v1254 = vunpack.c.l.b16 %v1236
        %v1255 = vunpack.c.l.b16 %v1237
        %v1256 = vpack.c.b16 %v1255, %v1254
        %vm1257 = vcmask 588800
        %v1259 = vsel %vm1257, %v1256, 0
        %v1262 = vsel %vm672, %v1251, 0
        %1264 = vmatpush.bf16.msra.mxu0 0
        %1265 = vmatpush.bf16.msra.mxu0 0
        %1266 = vmatpush.bf16.msra.mxu0 0
        %1267 = vmatpush.bf16.msra.mxu0 %v1262
        %1268 = vmatpush.bf16.msra.mxu0 %v1250
        %1269 = vmatpush.bf16.msra.mxu0 %v1249
        %1270 = vmatpush.bf16.msra.mxu0 %v1248
        %1271 = vmatpush.bf16.msra.mxu0 %v1247
        %1272 = vmatmul.bf16.gmra.mxu0 %v1259
        %v1273 = vpop.f32.mrf.mxu0
        %v1274 = vadd.f32 0.0, %v1273
        %v1275 = vpop.f32.mrf.mxu0
        %v1276 = vadd.f32 0.0, %v1275
        %1277 = vdwg.mxu0
        %v1278 = vld [vmem:[%s7] sm:$0xff]
        %v1279 = vld [vmem:[%s7 + $0x8] sm:$0xff]
        %1281 = vset.pattern.permute.xlu0 0
        %1282 = vperm.xlu0 %1281, %v1278
        %v1283 = vpop.permute.xlu0 %1282
        %1286 = vset.pattern.permute.xlu0 0
        %1287 = vperm.xlu0 %1286, %v1279
        %v1288 = vpop.permute.xlu0 %1287
        %v1290 = vmul.f32 %v1274, %v1283
        %v1291 = vmul.f32 %v1276, %v1288
        %1292 = vset.pattern.permute.xlu0 1
        %1293 = vperm.xlu0 %1292, %v1278
        %v1294 = vpop.permute.xlu0 %1293
        %1296 = vset.pattern.permute.xlu0 1
        %1297 = vperm.xlu0 %1296, %v1279
        %v1298 = vpop.permute.xlu0 %1297
        %v1300 = vadd.f32 %v1290, %v1294
        %v1301 = vadd.f32 %v1291, %v1298
        %v1302 = vmax.f32 %v1300, 0.0
        %v1303 = vmax.f32 %v1301, 0.0
        %1304 = vst.msk [vmem:[#allocation7] sm:$0xff] %vm1186, %v1302
        %1305 = vst.msk [vmem:[#allocation7 + $0x8] sm:$0xff] %vm1186, %v1303
        %v1306 = vld [vmem:[#allocation7] sm:$0xff]
        %v1307 = vld [vmem:[#allocation7 + $0x8] sm:$0xff]
        %1310 = vrot.lane.b32.xlu0 %v1306, 127
        %v1311 = vpop.permute.xlu0 %1310
        %1312 = vrot.lane.b32.xlu0 %v1307, 127
        %v1313 = vpop.permute.xlu0 %1312
        %v1316 = vmax.f32 %v1306, %v1311
        %v1317 = vmax.f32 %v1307, %v1313
        %1318 = vrot.lane.b32.xlu0 %v1306, 118
        %v1319 = vpop.permute.xlu0 %1318
        %1320 = vrot.lane.b32.xlu0 %v1307, 118
        %v1321 = vpop.permute.xlu0 %1320
        %v1324 = vmax.f32 %v1316, %v1319
        %v1325 = vmax.f32 %v1317, %v1321
        %1326 = vrot.lane.b32.xlu0 %v1306, 117
        %v1327 = vpop.permute.xlu0 %1326
        %1328 = vrot.lane.b32.xlu0 %v1307, 117
        %v1329 = vpop.permute.xlu0 %1328
        %v1332 = vmax.f32 %v1324, %v1327
        %v1333 = vmax.f32 %v1325, %v1329
        %v1334 = vld [vmem:[#allocation18] sm:$0xff]
        %v1335 = vld [vmem:[#allocation18 + $0x8] sm:$0xff]
        %v1336 = vld [vmem:[#allocation18 + $0x10] sm:$0xff]
        %v1337 = vld [vmem:[#allocation18 + $0x18] sm:$0xff]
        %v1338 = vld [vmem:[#allocation18 + $0x20] sm:$0xff]
        %v1339 = vld [vmem:[#allocation18 + $0x28] sm:$0xff]
        %v1340 = vld [vmem:[#allocation18 + $0x30] sm:$0xff]
        %v1341 = vld [vmem:[#allocation18 + $0x38] sm:$0xff]
        %v1342 = vld [vmem:[#allocation18 + $0x40] sm:$0x7]
        %vm1343 = vcmask 547840
        %v1345 = vsel %vm1343, %v1332, 0
        %v1348 = vsel %vm1343, %v1333, 0
        %v1351 = vsel %vm1087, %v1342, 0
        %1353 = vmatpush.msra.mxu0 0.0
        %1354 = vmatpush.msra.mxu0 0.0
        %1355 = vmatpush.msra.mxu0 0.0
        %1356 = vmatpush.msra.mxu0 0.0
        %1357 = vmatpush.msra.mxu0 0.0
        %1358 = vmatpush.msra.mxu0 0.0
        %1359 = vmatpush.msra.mxu0 0.0
        %1360 = vmatpush.msra.mxu0 %v1351
        %1361 = vmatpush.msra.mxu0 %v1341
        %1362 = vmatpush.msra.mxu0 %v1340
        %1363 = vmatpush.msra.mxu0 %v1339
        %1364 = vmatpush.msra.mxu0 %v1338
        %1365 = vmatpush.msra.mxu0 %v1337
        %1366 = vmatpush.msra.mxu0 %v1336
        %1367 = vmatpush.msra.mxu0 %v1335
        %1368 = vmatpush.msra.mxu0 %v1334
        %1369 = vmatmul.f32.gmra.mxu0 %v1345
        %v1370 = vpop.f32.mrf.mxu0
        %v1371 = vadd.f32 0.0, %v1370
        %1372 = vmatmul.f32.gmra.mxu0 %v1348
        %v1373 = vpop.f32.mrf.mxu0
        %v1374 = vadd.f32 0.0, %v1373
        %1375 = vdwg.mxu0
        %vm1376 = vcmask 130048
        %1377 = vst.msk [vmem:[%s444] sm:$0xff] %vm1376, %v1371
        %1378 = vst.msk [vmem:[%s444 + $0x8] sm:$0xff] %vm1376, %v1374
        %p1379 = scmp.lt.s32.totalorder %s24, 1
        %s1380 = scalar_select %p1379, %s24, 1
        %s1381 = smul.addr %s1380, 2
        %s1382 = smul.addr %s1381, 8
        %s1383 = scalar_lea.vmem %s9, %s1382
        // Predicated region
        $region85: #{_lambda_.3} parent=55 // pred_check
          %p1384 = pneg %p236
        $region86: #{_lambda_.3} parent=55 // pred_check_branch
          %1386 = sbr.rel (%p1384) target = $region88
        $region87: #{_lambda_.3} parent=55 // pred_region
          _
        $region88: #{_lambda_.3} parent=55 // pred_fallthru
          _
      $region56: #{_lambda_.3} parent=5 // pred_fallthru
        _
      %p1387 = scmp.le.s32.totalorder 2, %s19
      // Predicated region
      $region89: #{_lambda_.3} parent=5 // pred_check
        %p1388 = pneg %p1387
      $region90: #{_lambda_.3} parent=5 // pred_check_branch
        %1390 = sbr.rel (%p1388) target = $region92
      $region91: #{_lambda_.3} parent=5 // pred_region
        %s1391 = ssub.s32 %s19, 2
        // Predicated region
        $region93: #{_lambda_.3} parent=91 // pred_check
          %p1392 = pneg %p242
        $region94: #{_lambda_.3} parent=91 // pred_check_branch
          %1394 = sbr.rel (%p1392) target = $region96
        $region95: #{_lambda_.3} parent=91 // pred_region
          %p1395 = scmp.lt.s32.totalorder %s25, 1
          %s1396 = scalar_select %p1395, %s25, 1
          %s1397 = smul.addr %s1396, 2
          %s1398 = smul.addr %s1397, 8
          %s1399 = scalar_lea.vmem %s9, %s1398
        $region96: #{_lambda_.3} parent=91 // pred_fallthru
          _
      $region92: #{_lambda_.3} parent=5 // pred_fallthru
        _
    $region6: #{_lambda_.3} parent=1 // loop_footer
      %s23 = sadd.s32 1, %s19
    $region7: #{_lambda_.3} parent=1 // loop_footer_branch
      %18 = sbr.rel target = $region3
    $region8: #{_lambda_.3} parent=1 // loop_exit
      _
    %1400 = vsyncpa [#allocation9], 1
    %s1401 = scalar_lea.sflag [#allocation9], 1
    %1402 = vsyncpa %s1401, 1
    %1403 = vsyncpa [#allocation11], 1
    %1404 = vsyncpa [#allocation14], 1
    %1405 = vsyncpa [#allocation17], 1

// kernel: _lambda_.5
$region0: #{_lambda_.5}
  #allocation0 [shape = 'u32[]', space=smem, size = 0x4, offset = 0x4, fixed_abs, tag = 'smem constant byte address 0x4 - core index']
  #allocation1 [shape = 'u32[72,128]{1,0:T(1,128)}', space=vmem, size = 0x9000, scoped, tag = 'internal scratch']
  #allocation2 [shape = 'f32[16,100]{1,0:T(8,128)}', space=vmem, size = 0x2000, scoped, tag = 'scratch operand']
  #allocation3 [shape = 'f32[144,78]{1,0:T(8,128)}', space=vmem, size = 0x12000, scoped, tag = 'scratch operand']
  #allocation4 [shape = 'f32[8,324]{1,0:T(8,128)}', space=vmem, size = 0x3000, scoped, tag = 'scratch operand']
  #allocation5 [shape = 'f32[72,286]{1,0:T(8,128)}', space=vmem, size = 0x1b000, scoped, tag = 'scratch operand']
  %s0 = inlined_call_operand.vmem [shape: f32[2,16,16], index: 0, kind: input, shape index: {}]
  %s1 = inlined_call_operand.hbm [shape: f32[16,100], index: 1, kind: input, shape index: {}]
  %s2 = inlined_call_operand.hbm [shape: bf16[8,144], index: 2, kind: input, shape index: {}]
  %s3 = inlined_call_operand.hbm [shape: f32[8,2], index: 3, kind: input, shape index: {}]
  %s4 = inlined_call_operand.hbm [shape: f32[78,64], index: 4, kind: input, shape index: {}]
  %s5 = inlined_call_operand.vmem [shape: f32[64,324], index: 5, kind: input, shape index: {}]
  %s6 = inlined_call_operand.hbm [shape: bf16[4,72], index: 6, kind: input, shape index: {}]
  %s7 = inlined_call_operand.hbm [shape: f32[4,2], index: 7, kind: input, shape index: {}]
  %s8 = inlined_call_operand.hbm [shape: f32[286,256], index: 8, kind: input, shape index: {}]
  %s9 = inlined_call_operand.vmem [shape: f32[2,4,256], index: 9, kind: output, shape index: {}]
  %s10 = sld [smem:[#allocation0]]
  $region97: #{_lambda_.5} parent=0
    _
  %s12 = ssub.s32 1, %s10
  %s13 = scalar_select 0, %s12, %s10
  $region1: #{_lambda_.5} parent=0
    #allocation6 [shape = 'u8[8192]{0}', space=vmem, size = 0x2000, scoped, tag = 'input window, operand 1, single buffered']
    #allocation7 [shape = 's32[2]{0}', space=sflag, size = 0x8, scoped, tag = 'scoped memory for _lambda_.5']
    #allocation8 [shape = 'u8[4096]{0}', space=vmem, size = 0x1000, scoped, tag = 'input window, operand 2, single buffered']
    #allocation9 [shape = 's32[1]{0}', space=sflag, size = 0x4, scoped, tag = 'scoped memory for _lambda_.5']
    #allocation10 [shape = 'u8[4096]{0}', space=vmem, size = 0x1000, scoped, tag = 'input window, operand 3, single buffered']
    #allocation11 [shape = 'u8[40960]{0}', space=vmem, size = 0xa000, scoped, tag = 'input window, operand 4, single buffered']
    #allocation12 [shape = 's32[1]{0}', space=sflag, size = 0x4, scoped, tag = 'scoped memory for _lambda_.5']
    #allocation13 [shape = 'u8[1024]{0}', space=vmem, size = 0x400, scoped, tag = 'input window, operand 6, single buffered']
    #allocation14 [shape = 'u8[2048]{0}', space=vmem, size = 0x800, scoped, tag = 'input window, operand 7, single buffered']
    #allocation15 [shape = 's32[1]{0}', space=sflag, size = 0x4, scoped, tag = 'scoped memory for _lambda_.5']
    #allocation16 [shape = 'u8[294912]{0}', space=vmem, size = 0x48000, scoped, tag = 'input window, operand 8, single buffered']
    %14 = vsyncpa [#allocation7], 0
    %15 = vsyncpa [#allocation9], 0
    %16 = vsyncpa [#allocation12], 0
    %17 = vsyncpa [#allocation15], 0
    loop: start=0, step=1, limit=4
    $region2: #{_lambda_.5} parent=1 // loop_pre_header
      _
    $region3: #{_lambda_.5} parent=1 // loop_header
      %s19 = sphi 0, %s23
      %p20 = scmp.ge.s32.totalorder %s19, 4
      %s29 = sphi 0, %s31
      %s32 = sphi 0, %s29
      %s33 = sphi 0, %s32
      %s49 = sphi 0, %s33
      %s53 = sphi 0, %s53
      %s55 = sphi 0, %s53
      %s56 = sphi 0, %s55
      %s70 = sphi 0, %s56
      %s74 = sphi 0, %s74
      %s76 = sphi 0, %s74
      %s77 = sphi 0, %s76
      %s91 = sphi 0, %s77
      %s95 = sphi 0, %s95
      %s97 = sphi 0, %s95
      %s98 = sphi 0, %s97
      %s112 = sphi 0, %s98
      %s116 = sphi 0, %s116
      %s118 = sphi 0, %s116
      %s119 = sphi 0, %s118
      %s133 = sphi 0, %s119
      %s137 = sphi 0, %s137
      %s139 = sphi 0, %s137
      %s140 = sphi 0, %s139
      %s154 = sphi 0, %s140
      %s158 = sphi 0, %s158
      %s160 = sphi 0, %s158
      %s161 = sphi 0, %s160
      %s175 = sphi 0, %s161
      %s179 = sphi 0, %s179
      %s181 = sphi 0, %s179
      %s182 = sphi 0, %s181
      %s196 = sphi 0, %s182
      %s200 = sphi 0, %s200
      %s202 = sphi 0, %s200
      %s203 = sphi 0, %s202
      %s217 = sphi 0, %s203
      %s223 = sphi 0, %s225
      %s226 = sphi 0, %s223
      %s227 = sphi 0, %s226
      %s243 = sphi 0, %s227
    $region4: #{_lambda_.5} parent=1 // loop_header_branch
      %22 = sbr.rel (%p20) target = $region8
    $region5: #{_lambda_.5} parent=1 // loop_body
      %s24 = ssub.s32 %s19, 1
      %s25 = ssub.s32 %s19, 2
      %s26 = sadd.s32 %s19, 1
      %s27 = ssub.s32 %s19, %s26
      %p28 = scmp.eq.s32.totalorder %s27, 0
      %s30 = sadd.s32 %s29, 1
      %s31 = scalar_select %p28, %s29, %s30
      %p34 = pneg %p28
      %p35 = scmp.eq.s32.totalorder %s19, 1
      %p36 = por %p34, %p35
      %p37 = scmp.ne.s32.totalorder %s29, %s32
      %p38 = scmp.eq.s32.totalorder %s19, 0
      %p39 = por %p37, %p38
      %p40 = scmp.ne.s32.totalorder %s29, %s32
      %p41 = scmp.eq.s32.totalorder %s24, 1
      %p42 = por %p40, %p41
      %p43 = scmp.ne.s32.totalorder %s32, %s33
      %p44 = scmp.eq.s32.totalorder %s24, 0
      %p45 = por %p43, %p44
      %p46 = scmp.ne.s32.totalorder %s32, %s33
      %p47 = scmp.eq.s32.totalorder %s25, 1
      %p48 = por %p46, %p47
      %p50 = scmp.ne.s32.totalorder %s33, %s49
      %p51 = scmp.eq.s32.totalorder %s25, 0
      %p52 = por %p50, %p51
      %s54 = sadd.s32 %s53, 1
      %p57 = scmp.eq.s32.totalorder %s19, 1
      %p58 = scmp.ne.s32.totalorder %s53, %s55
      %p59 = scmp.eq.s32.totalorder %s19, 0
      %p60 = por %p58, %p59
      %p61 = scmp.ne.s32.totalorder %s53, %s55
      %p62 = scmp.eq.s32.totalorder %s24, 1
      %p63 = por %p61, %p62
      %p64 = scmp.ne.s32.totalorder %s55, %s56
      %p65 = scmp.eq.s32.totalorder %s24, 0
      %p66 = por %p64, %p65
      %p67 = scmp.ne.s32.totalorder %s55, %s56
      %p68 = scmp.eq.s32.totalorder %s25, 1
      %p69 = por %p67, %p68
      %p71 = scmp.ne.s32.totalorder %s56, %s70
      %p72 = scmp.eq.s32.totalorder %s25, 0
      %p73 = por %p71, %p72
      %s75 = sadd.s32 %s74, 1
      %p78 = scmp.eq.s32.totalorder %s19, 1
      %p79 = scmp.ne.s32.totalorder %s74, %s76
      %p80 = scmp.eq.s32.totalorder %s19, 0
      %p81 = por %p79, %p80
      %p82 = scmp.ne.s32.totalorder %s74, %s76
      %p83 = scmp.eq.s32.totalorder %s24, 1
      %p84 = por %p82, %p83
      %p85 = scmp.ne.s32.totalorder %s76, %s77
      %p86 = scmp.eq.s32.totalorder %s24, 0
      %p87 = por %p85, %p86
      %p88 = scmp.ne.s32.totalorder %s76, %s77
      %p89 = scmp.eq.s32.totalorder %s25, 1
      %p90 = por %p88, %p89
      %p92 = scmp.ne.s32.totalorder %s77, %s91
      %p93 = scmp.eq.s32.totalorder %s25, 0
      %p94 = por %p92, %p93
      %s96 = sadd.s32 %s95, 1
      %p99 = scmp.eq.s32.totalorder %s19, 1
      %p100 = scmp.ne.s32.totalorder %s95, %s97
      %p101 = scmp.eq.s32.totalorder %s19, 0
      %p102 = por %p100, %p101
      %p103 = scmp.ne.s32.totalorder %s95, %s97
      %p104 = scmp.eq.s32.totalorder %s24, 1
      %p105 = por %p103, %p104
      %p106 = scmp.ne.s32.totalorder %s97, %s98
      %p107 = scmp.eq.s32.totalorder %s24, 0
      %p108 = por %p106, %p107
      %p109 = scmp.ne.s32.totalorder %s97, %s98
      %p110 = scmp.eq.s32.totalorder %s25, 1
      %p111 = por %p109, %p110
      %p113 = scmp.ne.s32.totalorder %s98, %s112
      %p114 = scmp.eq.s32.totalorder %s25, 0
      %p115 = por %p113, %p114
      %s117 = sadd.s32 %s116, 1
      %p120 = scmp.eq.s32.totalorder %s19, 1
      %p121 = scmp.ne.s32.totalorder %s116, %s118
      %p122 = scmp.eq.s32.totalorder %s19, 0
      %p123 = por %p121, %p122
      %p124 = scmp.ne.s32.totalorder %s116, %s118
      %p125 = scmp.eq.s32.totalorder %s24, 1
      %p126 = por %p124, %p125
      %p127 = scmp.ne.s32.totalorder %s118, %s119
      %p128 = scmp.eq.s32.totalorder %s24, 0
      %p129 = por %p127, %p128
      %p130 = scmp.ne.s32.totalorder %s118, %s119
      %p131 = scmp.eq.s32.totalorder %s25, 1
      %p132 = por %p130, %p131
      %p134 = scmp.ne.s32.totalorder %s119, %s133
      %p135 = scmp.eq.s32.totalorder %s25, 0
      %p136 = por %p134, %p135
      %s138 = sadd.s32 %s137, 1
      %p141 = scmp.eq.s32.totalorder %s19, 1
      %p142 = scmp.ne.s32.totalorder %s137, %s139
      %p143 = scmp.eq.s32.totalorder %s19, 0
      %p144 = por %p142, %p143
      %p145 = scmp.ne.s32.totalorder %s137, %s139
      %p146 = scmp.eq.s32.totalorder %s24, 1
      %p147 = por %p145, %p146
      %p148 = scmp.ne.s32.totalorder %s139, %s140
      %p149 = scmp.eq.s32.totalorder %s24, 0
      %p150 = por %p148, %p149
      %p151 = scmp.ne.s32.totalorder %s139, %s140
      %p152 = scmp.eq.s32.totalorder %s25, 1
      %p153 = por %p151, %p152
      %p155 = scmp.ne.s32.totalorder %s140, %s154
      %p156 = scmp.eq.s32.totalorder %s25, 0
      %p157 = por %p155, %p156
      %s159 = sadd.s32 %s158, 1
      %p162 = scmp.eq.s32.totalorder %s19, 1
      %p163 = scmp.ne.s32.totalorder %s158, %s160
      %p164 = scmp.eq.s32.totalorder %s19, 0
      %p165 = por %p163, %p164
      %p166 = scmp.ne.s32.totalorder %s158, %s160
      %p167 = scmp.eq.s32.totalorder %s24, 1
      %p168 = por %p166, %p167
      %p169 = scmp.ne.s32.totalorder %s160, %s161
      %p170 = scmp.eq.s32.totalorder %s24, 0
      %p171 = por %p169, %p170
      %p172 = scmp.ne.s32.totalorder %s160, %s161
      %p173 = scmp.eq.s32.totalorder %s25, 1
      %p174 = por %p172, %p173
      %p176 = scmp.ne.s32.totalorder %s161, %s175
      %p177 = scmp.eq.s32.totalorder %s25, 0
      %p178 = por %p176, %p177
      %s180 = sadd.s32 %s179, 1
      %p183 = scmp.eq.s32.totalorder %s19, 1
      %p184 = scmp.ne.s32.totalorder %s179, %s181
      %p185 = scmp.eq.s32.totalorder %s19, 0
      %p186 = por %p184, %p185
      %p187 = scmp.ne.s32.totalorder %s179, %s181
      %p188 = scmp.eq.s32.totalorder %s24, 1
      %p189 = por %p187, %p188
      %p190 = scmp.ne.s32.totalorder %s181, %s182
      %p191 = scmp.eq.s32.totalorder %s24, 0
      %p192 = por %p190, %p191
      %p193 = scmp.ne.s32.totalorder %s181, %s182
      %p194 = scmp.eq.s32.totalorder %s25, 1
      %p195 = por %p193, %p194
      %p197 = scmp.ne.s32.totalorder %s182, %s196
      %p198 = scmp.eq.s32.totalorder %s25, 0
      %p199 = por %p197, %p198
      %s201 = sadd.s32 %s200, 1
      %p204 = scmp.eq.s32.totalorder %s19, 1
      %p205 = scmp.ne.s32.totalorder %s200, %s202
      %p206 = scmp.eq.s32.totalorder %s19, 0
      %p207 = por %p205, %p206
      %p208 = scmp.ne.s32.totalorder %s200, %s202
      %p209 = scmp.eq.s32.totalorder %s24, 1
      %p210 = por %p208, %p209
      %p211 = scmp.ne.s32.totalorder %s202, %s203
      %p212 = scmp.eq.s32.totalorder %s24, 0
      %p213 = por %p211, %p212
      %p214 = scmp.ne.s32.totalorder %s202, %s203
      %p215 = scmp.eq.s32.totalorder %s25, 1
      %p216 = por %p214, %p215
      %p218 = scmp.ne.s32.totalorder %s203, %s217
      %p219 = scmp.eq.s32.totalorder %s25, 0
      %p220 = por %p218, %p219
      %s221 = ssub.s32 %s19, %s26
      %p222 = scmp.eq.s32.totalorder %s221, 0
      %s224 = sadd.s32 %s223, 1
      %s225 = scalar_select %p222, %s223, %s224
      %p228 = pneg %p222
      %p229 = scmp.eq.s32.totalorder %s19, 1
      %p230 = por %p228, %p229
      %p231 = scmp.ne.s32.totalorder %s223, %s226
      %p232 = scmp.eq.s32.totalorder %s19, 0
      %p233 = por %p231, %p232
      %p234 = scmp.ne.s32.totalorder %s223, %s226
      %p235 = scmp.eq.s32.totalorder %s24, 1
      %p236 = por %p234, %p235
      %p237 = scmp.ne.s32.totalorder %s226, %s227
      %p238 = scmp.eq.s32.totalorder %s24, 0
      %p239 = por %p237, %p238
      %p240 = scmp.ne.s32.totalorder %s226, %s227
      %p241 = scmp.eq.s32.totalorder %s25, 1
      %p242 = por %p240, %p241
      %p244 = scmp.ne.s32.totalorder %s227, %s243
      %p245 = scmp.eq.s32.totalorder %s25, 0
      %p246 = por %p244, %p245
      %p247 = scmp.le.s32.totalorder 1, %s19
      %p248 = scmp.lt.s32.totalorder %s19, 3
      %p249 = pnand %p247, %p248
      %p250 = pneg %p249
      // Predicated region
      $region9: #{_lambda_.5} parent=5 // pred_check
        _
      $region10: #{_lambda_.5} parent=5 // pred_check_branch
        %252 = sbr.rel (%p249) target = $region12
      $region11: #{_lambda_.5} parent=5 // pred_region
        %s253 = ssub.s32 %s19, 1
        // Predicated region
        $region13: #{_lambda_.5} parent=11 // pred_check
          %p254 = pneg %p66
        $region14: #{_lambda_.5} parent=11 // pred_check_branch
          %256 = sbr.rel (%p254) target = $region16
        $region15: #{_lambda_.5} parent=11 // pred_region
          %258 = vsyncadd [#allocation7], 0
          %s259 = sshll.u32 %s1, 4
          %s260 = int_to_ptr.hbm [resolvable:$true] %s259
          %s261 = sshll.u32 [#allocation6], 4
          %s262 = int_to_ptr.vmem [resolvable:$true] %s261
          %267 = dma.hbm_to_vmem [thread:$0]  %s260, 256, %s262, [#allocation7], 128, 128, 8
        $region16: #{_lambda_.5} parent=11 // pred_fallthru
          _
        // Predicated region
        $region17: #{_lambda_.5} parent=11 // pred_check
          %p268 = pneg %p87
        $region18: #{_lambda_.5} parent=11 // pred_check_branch
          %270 = sbr.rel (%p268) target = $region20
        $region19: #{_lambda_.5} parent=11 // pred_region
          %272 = vsyncadd [#allocation9], 0
          %s274 = sshll.u32 %s2, 4
          %s275 = int_to_ptr.hbm [resolvable:$true] %s274
          %s276 = sshll.u32 [#allocation8], 4
          %s277 = int_to_ptr.vmem [resolvable:$true] %s276
          %279 = dma.hbm_to_vmem [thread:$0]  %s275, 128, %s277, [#allocation9]
        $region20: #{_lambda_.5} parent=11 // pred_fallthru
          _
        // Predicated region
        $region21: #{_lambda_.5} parent=11 // pred_check
          %p280 = pneg %p108
        $region22: #{_lambda_.5} parent=11 // pred_check_branch
          %282 = sbr.rel (%p280) target = $region24
        $region23: #{_lambda_.5} parent=11 // pred_region
          %284 = vsyncadd [#allocation9], 0
          %s286 = sshll.u32 %s3, 4
          %s287 = int_to_ptr.hbm [resolvable:$true] %s286
          %s288 = sshll.u32 [#allocation10], 4
          %s289 = int_to_ptr.vmem [resolvable:$true] %s288
          %291 = dma.hbm_to_vmem [thread:$0]  %s287, 128, %s289, [#allocation9]
        $region24: #{_lambda_.5} parent=11 // pred_fallthru
          _
        // Predicated region
        $region25: #{_lambda_.5} parent=11 // pred_check
          %p292 = pneg %p129
        $region26: #{_lambda_.5} parent=11 // pred_check_branch
          %294 = sbr.rel (%p292) target = $region28
        $region27: #{_lambda_.5} parent=11 // pred_region
          %296 = vsyncadd [#allocation12], 0
          %s297 = sshll.u32 %s4, 4
          %s298 = int_to_ptr.hbm [resolvable:$true] %s297
          %s299 = sshll.u32 [#allocation11], 4
          %s300 = int_to_ptr.vmem [resolvable:$true] %s299
          %305 = dma.hbm_to_vmem [thread:$0]  %s298, 1280, %s300, [#allocation12], 128, 128, 8
        $region28: #{_lambda_.5} parent=11 // pred_fallthru
          _
        // Predicated region
        $region29: #{_lambda_.5} parent=11 // pred_check
          %p306 = pneg %p150
        $region30: #{_lambda_.5} parent=11 // pred_check_branch
          %308 = sbr.rel (%p306) target = $region32
        $region31: #{_lambda_.5} parent=11 // pred_region
          _
        $region32: #{_lambda_.5} parent=11 // pred_fallthru
          _
        // Predicated region
        $region33: #{_lambda_.5} parent=11 // pred_check
          %p309 = pneg %p171
        $region34: #{_lambda_.5} parent=11 // pred_check_branch
          %311 = sbr.rel (%p309) target = $region36
        $region35: #{_lambda_.5} parent=11 // pred_region
          %313 = vsyncadd [#allocation12], 0
          %s315 = sshll.u32 %s6, 4
          %s316 = int_to_ptr.hbm [resolvable:$true] %s315
          %s317 = sshll.u32 [#allocation13], 4
          %s318 = int_to_ptr.vmem [resolvable:$true] %s317
          %320 = dma.hbm_to_vmem [thread:$0]  %s316, 32, %s318, [#allocation12]
        $region36: #{_lambda_.5} parent=11 // pred_fallthru
          _
        // Predicated region
        $region37: #{_lambda_.5} parent=11 // pred_check
          %p321 = pneg %p192
        $region38: #{_lambda_.5} parent=11 // pred_check_branch
          %323 = sbr.rel (%p321) target = $region40
        $region39: #{_lambda_.5} parent=11 // pred_region
          %325 = vsyncadd [#allocation15], 0
          %s327 = sshll.u32 %s7, 4
          %s328 = int_to_ptr.hbm [resolvable:$true] %s327
          %s329 = sshll.u32 [#allocation14], 4
          %s330 = int_to_ptr.vmem [resolvable:$true] %s329
          %332 = dma.hbm_to_vmem [thread:$0]  %s328, 64, %s330, [#allocation15]
        $region40: #{_lambda_.5} parent=11 // pred_fallthru
          _
        // Predicated region
        $region41: #{_lambda_.5} parent=11 // pred_check
          %p333 = pneg %p213
        $region42: #{_lambda_.5} parent=11 // pred_check_branch
          %335 = sbr.rel (%p333) target = $region44
        $region43: #{_lambda_.5} parent=11 // pred_region
          %337 = vsyncadd [#allocation15], 0
          %s338 = sshll.u32 %s8, 4
          %s339 = int_to_ptr.hbm [resolvable:$true] %s338
          %s340 = sshll.u32 [#allocation16], 4
          %s341 = int_to_ptr.vmem [resolvable:$true] %s340
          %346 = dma.hbm_to_vmem [thread:$0]  %s339, 9216, %s341, [#allocation15], 256, 256, 16
        $region44: #{_lambda_.5} parent=11 // pred_fallthru
          _
      $region12: #{_lambda_.5} parent=5 // pred_fallthru
        _
      %p347 = scmp.lt.s32.totalorder %s19, 2
      // Predicated region
      $region45: #{_lambda_.5} parent=5 // pred_check
        %p348 = pneg %p347
      $region46: #{_lambda_.5} parent=5 // pred_check_branch
        %350 = sbr.rel (%p348) target = $region48
      $region47: #{_lambda_.5} parent=5 // pred_region
        // Predicated region
        $region49: #{_lambda_.5} parent=47 // pred_check
          %p351 = pneg %p39
        $region50: #{_lambda_.5} parent=47 // pred_check_branch
          %353 = sbr.rel (%p351) target = $region52
        $region51: #{_lambda_.5} parent=47 // pred_region
          %p354 = scmp.lt.s32.totalorder %s19, 1
          %s355 = scalar_select %p354, %s19, 1
          %s356 = smul.addr %s355, 2
          %s357 = smul.addr %s356, 8
          %s358 = scalar_lea.vmem %s0, %s357
        $region52: #{_lambda_.5} parent=47 // pred_fallthru
          _
      $region48: #{_lambda_.5} parent=5 // pred_fallthru
        _
      %p359 = scmp.le.s32.totalorder 1, %s19
      %p360 = scmp.lt.s32.totalorder %s19, 3
      %p361 = pnand %p359, %p360
      %p362 = pneg %p361
      // Predicated region
      $region53: #{_lambda_.5} parent=5 // pred_check
        _
      $region54: #{_lambda_.5} parent=5 // pred_check_branch
        %364 = sbr.rel (%p361) target = $region56
      $region55: #{_lambda_.5} parent=5 // pred_region
        %s365 = ssub.s32 %s19, 1
        // Predicated region
        $region57: #{_lambda_.5} parent=55 // pred_check
          %p366 = pneg %p66
        $region58: #{_lambda_.5} parent=55 // pred_check_branch
          %368 = sbr.rel (%p366) target = $region60
        $region59: #{_lambda_.5} parent=55 // pred_region
          %370 = dma.done [#allocation7], 256
        $region60: #{_lambda_.5} parent=55 // pred_fallthru
          _
        // Predicated region
        $region61: #{_lambda_.5} parent=55 // pred_check
          %p371 = pneg %p87
        $region62: #{_lambda_.5} parent=55 // pred_check_branch
          %373 = sbr.rel (%p371) target = $region64
        $region63: #{_lambda_.5} parent=55 // pred_region
          %375 = dma.done [#allocation9], 128
        $region64: #{_lambda_.5} parent=55 // pred_fallthru
          _
        // Predicated region
        $region65: #{_lambda_.5} parent=55 // pred_check
          %p376 = pneg %p108
        $region66: #{_lambda_.5} parent=55 // pred_check_branch
          %378 = sbr.rel (%p376) target = $region68
        $region67: #{_lambda_.5} parent=55 // pred_region
          %380 = dma.done [#allocation9], 128
        $region68: #{_lambda_.5} parent=55 // pred_fallthru
          _
        // Predicated region
        $region69: #{_lambda_.5} parent=55 // pred_check
          %p381 = pneg %p129
        $region70: #{_lambda_.5} parent=55 // pred_check_branch
          %383 = sbr.rel (%p381) target = $region72
        $region71: #{_lambda_.5} parent=55 // pred_region
          %385 = dma.done [#allocation12], 1280
        $region72: #{_lambda_.5} parent=55 // pred_fallthru
          _
        // Predicated region
        $region73: #{_lambda_.5} parent=55 // pred_check
          %p386 = pneg %p171
        $region74: #{_lambda_.5} parent=55 // pred_check_branch
          %388 = sbr.rel (%p386) target = $region76
        $region75: #{_lambda_.5} parent=55 // pred_region
          %390 = dma.done [#allocation12], 32
        $region76: #{_lambda_.5} parent=55 // pred_fallthru
          _
        // Predicated region
        $region77: #{_lambda_.5} parent=55 // pred_check
          %p391 = pneg %p192
        $region78: #{_lambda_.5} parent=55 // pred_check_branch
          %393 = sbr.rel (%p391) target = $region80
        $region79: #{_lambda_.5} parent=55 // pred_region
          %395 = dma.done [#allocation15], 64
        $region80: #{_lambda_.5} parent=55 // pred_fallthru
          _
        // Predicated region
        $region81: #{_lambda_.5} parent=55 // pred_check
          %p396 = pneg %p213
        $region82: #{_lambda_.5} parent=55 // pred_check_branch
          %398 = sbr.rel (%p396) target = $region84
        $region83: #{_lambda_.5} parent=55 // pred_region
          %400 = dma.done [#allocation15], 9216
        $region84: #{_lambda_.5} parent=55 // pred_fallthru
          _
        %p401 = scmp.lt.s32.totalorder %s24, 1
        %s402 = scalar_select %p401, %s24, 1
        %s403 = smul.addr %s402, 2
        %s404 = smul.addr %s403, 8
        %s405 = scalar_lea.vmem %s0, %s404
        %p406 = pneg %p45
        %p407 = pneg %p42
        %p408 = pneg %p66
        %p409 = pneg %p63
        %p410 = pneg %p87
        %p411 = pneg %p84
        %p412 = pneg %p108
        %p413 = pneg %p105
        %p414 = pneg %p129
        %p415 = pneg %p126
        %p416 = pneg %p150
        %p417 = pneg %p147
        %p418 = pneg %p171
        %p419 = pneg %p168
        %p420 = pneg %p192
        %p421 = pneg %p189
        %p422 = pneg %p213
        %p423 = pneg %p210
        %p424 = pneg %p239
        %p425 = pneg %p236
        %p426 = scmp.lt.s32.totalorder %s24, 1
        %s427 = scalar_select %p426, %s24, 1
        %s428 = smul.addr %s427, 2
        %s429 = smul.addr %s428, 4
        %s430 = scalar_lea.vmem %s9, %s429
        %p431 = scmp.lt.s32.totalorder %s24, 1
        %s432 = scalar_select %p431, %s24, 1
        %s433 = smul.addr %s432, 2
        %s434 = smul.addr %s433, 8
        %s435 = scalar_lea.vmem %s0, %s434
        %p436 = scmp.lt.s32.totalorder %s24, 1
        %s437 = scalar_select %p436, %s24, 1
        %s438 = smul.addr %s437, 2
        %s439 = smul.addr %s438, 4
        %s440 = scalar_lea.vmem %s9, %s439
        %v442 = vld [vmem:[%s435] sm:$0xff]
        %v443 = vld [vmem:[%s435 + $0x8] sm:$0xff]
        %v444 = vld [vmem:[#allocation6] sm:$0xff]
        %v445 = vld [vmem:[#allocation6 + $0x8] sm:$0xff]
        %vm446 = vcmask 130048
        %v448 = vsel %vm446, %v442, 0
        %v451 = vsel %vm446, %v443, 0
        %453 = vmatpush.msra.mxu0 0.0
        %454 = vmatpush.msra.mxu0 0.0
        %455 = vmatpush.msra.mxu0 0.0
        %456 = vmatpush.msra.mxu0 0.0
        %457 = vmatpush.msra.mxu0 0.0
        %458 = vmatpush.msra.mxu0 0.0
        %459 = vmatpush.msra.mxu0 0.0
        %460 = vmatpush.msra.mxu0 0.0
        %461 = vmatpush.msra.mxu0 0.0
        %462 = vmatpush.msra.mxu0 0.0
        %463 = vmatpush.msra.mxu0 0.0
        %464 = vmatpush.msra.mxu0 0.0
        %465 = vmatpush.msra.mxu0 0.0
        %466 = vmatpush.msra.mxu0 0.0
        %467 = vmatpush.msra.mxu0 %v445
        %468 = vmatpush.msra.mxu0 %v444
        %469 = vmatmul.f32.gmra.mxu0 %v448
        %v470 = vpop.f32.mrf.mxu0
        %v471 = vadd.f32 0.0, %v470
        %472 = vmatmul.f32.gmra.mxu0 %v451
        %v473 = vpop.f32.mrf.mxu0
        %v474 = vadd.f32 0.0, %v473
        %475 = vdwg.mxu0
        %vm476 = vcmask 818176
        %477 = vst.msk [vmem:[#allocation2] sm:$0xff] %vm476, %v471
        %478 = vst.msk [vmem:[#allocation2 + $0x8] sm:$0xff] %vm476, %v474
        %v479 = vld [vmem:[#allocation2] sm:$0xff]
        %v480 = vld [vmem:[#allocation2 + $0x8] sm:$0xff]
        %vm481 = vcmask 637952
        %482 = vst.msk [vmem:[#allocation3] sm:$0xff] %vm481, %v479
        %483 = vst.msk [vmem:[#allocation3 + $0x8] sm:$0xff] %vm481, %v480
        %v484 = vld [vmem:[#allocation2] sm:$0xff]
        %v485 = vld [vmem:[#allocation2 + $0x8] sm:$0xff]
        %488 = vrot.lane.b32.xlu0 %v484, 127
        %v489 = vpop.permute.xlu0 %488
        %490 = vrot.lane.b32.xlu0 %v485, 127
        %v491 = vpop.permute.xlu0 %490
        %494 = vst.msk [vmem:[#allocation3 + $0x10] sm:$0xff] %vm481, %v489
        %495 = vst.msk [vmem:[#allocation3 + $0x18] sm:$0xff] %vm481, %v491
        %v496 = vld [vmem:[#allocation2] sm:$0xff]
        %v497 = vld [vmem:[#allocation2 + $0x8] sm:$0xff]
        %500 = vrot.lane.b32.xlu0 %v496, 126
        %v501 = vpop.permute.xlu0 %500
        %502 = vrot.lane.b32.xlu0 %v497, 126
        %v503 = vpop.permute.xlu0 %502
        %506 = vst.msk [vmem:[#allocation3 + $0x20] sm:$0xff] %vm481, %v501
        %507 = vst.msk [vmem:[#allocation3 + $0x28] sm:$0xff] %vm481, %v503
        %v508 = vld [vmem:[#allocation2] sm:$0xff]
        %v509 = vld [vmem:[#allocation2 + $0x8] sm:$0xff]
        %512 = vrot.lane.b32.xlu0 %v508, 118
        %v513 = vpop.permute.xlu0 %512
        %514 = vrot.lane.b32.xlu0 %v509, 118
        %v515 = vpop.permute.xlu0 %514
        %518 = vst.msk [vmem:[#allocation3 + $0x30] sm:$0xff] %vm481, %v513
        %519 = vst.msk [vmem:[#allocation3 + $0x38] sm:$0xff] %vm481, %v515
        %v520 = vld [vmem:[#allocation2] sm:$0xff]
        %v521 = vld [vmem:[#allocation2 + $0x8] sm:$0xff]
        %524 = vrot.lane.b32.xlu0 %v520, 117
        %v525 = vpop.permute.xlu0 %524
        %526 = vrot.lane.b32.xlu0 %v521, 117
        %v527 = vpop.permute.xlu0 %526
        %530 = vst.msk [vmem:[#allocation3 + $0x40] sm:$0xff] %vm481, %v525
        %531 = vst.msk [vmem:[#allocation3 + $0x48] sm:$0xff] %vm481, %v527
        %v532 = vld [vmem:[#allocation2] sm:$0xff]
        %v533 = vld [vmem:[#allocation2 + $0x8] sm:$0xff]
        %536 = vrot.lane.b32.xlu0 %v532, 116
        %v537 = vpop.permute.xlu0 %536
        %538 = vrot.lane.b32.xlu0 %v533, 116
        %v539 = vpop.permute.xlu0 %538
        %542 = vst.msk [vmem:[#allocation3 + $0x50] sm:$0xff] %vm481, %v537
        %543 = vst.msk [vmem:[#allocation3 + $0x58] sm:$0xff] %vm481, %v539
        %v544 = vld [vmem:[#allocation2] sm:$0xff]
        %v545 = vld [vmem:[#allocation2 + $0x8] sm:$0xff]
        %548 = vrot.lane.b32.xlu0 %v544, 108
        %v549 = vpop.permute.xlu0 %548
        %550 = vrot.lane.b32.xlu0 %v545, 108
        %v551 = vpop.permute.xlu0 %550
        %554 = vst.msk [vmem:[#allocation3 + $0x60] sm:$0xff] %vm481, %v549
        %555 = vst.msk [vmem:[#allocation3 + $0x68] sm:$0xff] %vm481, %v551
        %v556 = vld [vmem:[#allocation2] sm:$0xff]
        %v557 = vld [vmem:[#allocation2 + $0x8] sm:$0xff]
        %560 = vrot.lane.b32.xlu0 %v556, 107
        %v561 = vpop.permute.xlu0 %560
        %562 = vrot.lane.b32.xlu0 %v557, 107
        %v563 = vpop.permute.xlu0 %562
        %566 = vst.msk [vmem:[#allocation3 + $0x70] sm:$0xff] %vm481, %v561
        %567 = vst.msk [vmem:[#allocation3 + $0x78] sm:$0xff] %vm481, %v563
        %v568 = vld [vmem:[#allocation2] sm:$0xff]
        %v569 = vld [vmem:[#allocation2 + $0x8] sm:$0xff]
        %572 = vrot.lane.b32.xlu0 %v568, 106
        %v573 = vpop.permute.xlu0 %572
        %574 = vrot.lane.b32.xlu0 %v569, 106
        %v575 = vpop.permute.xlu0 %574
        %578 = vst.msk [vmem:[#allocation3 + $0x80] sm:$0xff] %vm481, %v573
        %579 = vst.msk [vmem:[#allocation3 + $0x88] sm:$0xff] %vm481, %v575
        %v580 = vld [vmem:[#allocation8] sm:$0xff]
        %v581 = vld [vmem:[#allocation3] sm:$0xff]
        %v582 = vld [vmem:[#allocation3 + $0x8] sm:$0xff]
        %v583 = vld [vmem:[#allocation3 + $0x10] sm:$0xff]
        %v584 = vld [vmem:[#allocation3 + $0x18] sm:$0xff]
        %v585 = vld [vmem:[#allocation3 + $0x20] sm:$0xff]
        %v586 = vld [vmem:[#allocation3 + $0x28] sm:$0xff]
        %v587 = vld [vmem:[#allocation3 + $0x30] sm:$0xff]
        %v588 = vld [vmem:[#allocation3 + $0x38] sm:$0xff]
        %v589 = vld [vmem:[#allocation3 + $0x40] sm:$0xff]
        %v590 = vld [vmem:[#allocation3 + $0x48] sm:$0xff]
        %v591 = vld [vmem:[#allocation3 + $0x50] sm:$0xff]
        %v592 = vld [vmem:[#allocation3 + $0x58] sm:$0xff]
        %v593 = vld [vmem:[#allocation3 + $0x60] sm:$0xff]
        %v594 = vld [vmem:[#allocation3 + $0x68] sm:$0xff]
        %v595 = vld [vmem:[#allocation3 + $0x70] sm:$0xff]
        %v596 = vld [vmem:[#allocation3 + $0x78] sm:$0xff]
        %v597 = vld [vmem:[#allocation3 + $0x80] sm:$0xff]
        %v598 = vld [vmem:[#allocation3 + $0x88] sm:$0xff]
        %v599 = vpack.c.bf16 %v582, %v581
        %v600 = vpack.c.bf16 %v584, %v583
        %v601 = vpack.c.bf16 %v586, %v585
        %v602 = vpack.c.bf16 %v588, %v587
        %v603 = vpack.c.bf16 %v590, %v589
        %v604 = vpack.c.bf16 %v592, %v591
        %v605 = vpack.c.bf16 %v594, %v593
        %v606 = vpack.c.bf16 %v596, %v595
        %v607 = vpack.c.bf16 %v598, %v597
        %v609 = vunpack.c.l.b16 %v580
        %v610 = vunpack.c.h.b16 %v580
        %v611 = vpack.c.b16 %v609, %v609
        %v612 = vpack.c.b16 %v610, %v610
        %v615 = vsel %vm446, %v612, 0
        %617 = vmatpush.bf16.msra.mxu0 %v606
        %618 = vmatpush.bf16.msra.mxu0 %v605
        %619 = vmatpush.bf16.msra.mxu0 %v604
        %620 = vmatpush.bf16.msra.mxu0 %v603
        %621 = vmatpush.bf16.msra.mxu0 %v602
        %622 = vmatpush.bf16.msra.mxu0 %v601
        %623 = vmatpush.bf16.msra.mxu0 %v600
        %624 = vmatpush.bf16.msra.mxu0 %v599
        %625 = vmatmul.bf16.gmra.mxu0 %v611
        %v626 = vpop.f32.mrf.mxu0
        %v627 = vadd.f32 0.0, %v626
        %v628 = vpop.f32.mrf.mxu0
        %629 = vdwg.mxu0
        %630 = vmatpush.bf16.msra.mxu0 0
        %631 = vmatpush.bf16.msra.mxu0 0
        %632 = vmatpush.bf16.msra.mxu0 0
        %633 = vmatpush.bf16.msra.mxu0 0
        %634 = vmatpush.bf16.msra.mxu0 0
        %635 = vmatpush.bf16.msra.mxu0 0
        %636 = vmatpush.bf16.msra.mxu0 0
        %637 = vmatpush.bf16.msra.mxu0 %v607
        %638 = vmatmul.bf16.gmra.mxu0 %v615
        %v639 = vpop.f32.mrf.mxu0
        %v640 = vadd.f32 %v627, %v639
        %v641 = vpop.f32.mrf.mxu0
        %642 = vdwg.mxu0
        %v643 = vld [vmem:[#allocation10] sm:$0xff]
        %645 = vset.pattern.permute.xlu0 0
        %646 = vperm.xlu0 %645, %v643
        %v647 = vpop.permute.xlu0 %646
        %v649 = vmul.f32 %v640, %v647
        %650 = vset.pattern.permute.xlu0 1
        %651 = vperm.xlu0 %650, %v643
        %v652 = vpop.permute.xlu0 %651
        %v654 = vadd.f32 %v649, %v652
        %v655 = vmax.f32 %v654, 0.0
        %v656 = vld [vmem:[#allocation11] sm:$0xff]
        %v657 = vld [vmem:[#allocation11 + $0x8] sm:$0xff]
        %v658 = vld [vmem:[#allocation11 + $0x10] sm:$0xff]
        %v659 = vld [vmem:[#allocation11 + $0x18] sm:$0xff]
        %v660 = vld [vmem:[#allocation11 + $0x20] sm:$0xff]
        %v661 = vld [vmem:[#allocation11 + $0x28] sm:$0xff]
        %v662 = vld [vmem:[#allocation11 + $0x30] sm:$0xff]
        %v663 = vld [vmem:[#allocation11 + $0x38] sm:$0xff]
        %v664 = vld [vmem:[#allocation11 + $0x40] sm:$0xff]
        %v665 = vld [vmem:[#allocation11 + $0x48] sm:$0x3f]
        %v667 = vsel %vm481, %v655, 0
        %vm669 = vcmask 1045504
        %v671 = vsel %vm669, %v665, 0
        %673 = vmatpush.msra.mxu0 0.0
        %674 = vmatpush.msra.mxu0 0.0
        %675 = vmatpush.msra.mxu0 0.0
        %676 = vmatpush.msra.mxu0 0.0
        %677 = vmatpush.msra.mxu0 0.0
        %678 = vmatpush.msra.mxu0 0.0
        %679 = vmatpush.msra.mxu0 %v671
        %680 = vmatpush.msra.mxu0 %v664
        %681 = vmatpush.msra.mxu0 %v663
        %682 = vmatpush.msra.mxu0 %v662
        %683 = vmatpush.msra.mxu0 %v661
        %684 = vmatpush.msra.mxu0 %v660
        %685 = vmatpush.msra.mxu0 %v659
        %686 = vmatpush.msra.mxu0 %v658
        %687 = vmatpush.msra.mxu0 %v657
        %688 = vmatpush.msra.mxu0 %v656
        %689 = vmatmul.f32.gmra.mxu0 %v667
        %v690 = vpop.f32.mrf.mxu0
        %v691 = vadd.f32 0.0, %v690
        %692 = vdwg.mxu0
        %v693 = vld [vmem:[%s5] sm:$0xff]
        %v694 = vld [vmem:[%s5 + $0x8] sm:$0xff]
        %v695 = vld [vmem:[%s5 + $0x10] sm:$0xff]
        %v696 = vld [vmem:[%s5 + $0x18] sm:$0xff]
        %v697 = vld [vmem:[%s5 + $0x20] sm:$0xff]
        %v698 = vld [vmem:[%s5 + $0x28] sm:$0xff]
        %v699 = vld [vmem:[%s5 + $0x30] sm:$0xff]
        %v700 = vld [vmem:[%s5 + $0x38] sm:$0xff]
        %v701 = vld [vmem:[%s5 + $0x40] sm:$0xff]
        %v702 = vld [vmem:[%s5 + $0x48] sm:$0xff]
        %v703 = vld [vmem:[%s5 + $0x50] sm:$0xff]
        %v704 = vld [vmem:[%s5 + $0x58] sm:$0xff]
        %v705 = vld [vmem:[%s5 + $0x60] sm:$0xff]
        %v706 = vld [vmem:[%s5 + $0x68] sm:$0xff]
        %v707 = vld [vmem:[%s5 + $0x70] sm:$0xff]
        %v708 = vld [vmem:[%s5 + $0x78] sm:$0xff]
        %v709 = vld [vmem:[%s5 + $0x80] sm:$0xff]
        %v710 = vld [vmem:[%s5 + $0x88] sm:$0xff]
        %v711 = vld [vmem:[%s5 + $0x90] sm:$0xff]
        %v712 = vld [vmem:[%s5 + $0x98] sm:$0xff]
        %v713 = vld [vmem:[%s5 + $0xa0] sm:$0xff]
        %v714 = vld [vmem:[%s5 + $0xa8] sm:$0xff]
        %v715 = vld [vmem:[%s5 + $0xb0] sm:$0xff]
        %v716 = vld [vmem:[%s5 + $0xb8] sm:$0xff]
        %vm717 = vcmask 523264
        %v719 = vsel %vm717, %v691, 0
        %721 = vmatpush.msra.mxu0 0.0
        %722 = vmatpush.msra.mxu0 0.0
        %723 = vmatpush.msra.mxu0 0.0
        %724 = vmatpush.msra.mxu0 0.0
        %725 = vmatpush.msra.mxu0 0.0
        %726 = vmatpush.msra.mxu0 0.0
        %727 = vmatpush.msra.mxu0 0.0
        %728 = vmatpush.msra.mxu0 0.0
        %729 = vmatpush.msra.mxu0 %v714
        %730 = vmatpush.msra.mxu0 %v711
        %731 = vmatpush.msra.mxu0 %v708
        %732 = vmatpush.msra.mxu0 %v705
        %733 = vmatpush.msra.mxu0 %v702
        %734 = vmatpush.msra.mxu0 %v699
        %735 = vmatpush.msra.mxu0 %v696
        %736 = vmatpush.msra.mxu0 %v693
        %737 = vmatmul.f32.gmra.mxu0 %v719
        %v738 = vpop.f32.mrf.mxu0
        %v739 = vadd.f32 0.0, %v738
        %740 = vdwg.mxu0
        %741 = vmatpush.msra.mxu0 0.0
        %742 = vmatpush.msra.mxu0 0.0
        %743 = vmatpush.msra.mxu0 0.0
        %744 = vmatpush.msra.mxu0 0.0
        %745 = vmatpush.msra.mxu0 0.0
        %746 = vmatpush.msra.mxu0 0.0
        %747 = vmatpush.msra.mxu0 0.0
        %748 = vmatpush.msra.mxu0 0.0
        %749 = vmatpush.msra.mxu0 %v715
        %750 = vmatpush.msra.mxu0 %v712
        %751 = vmatpush.msra.mxu0 %v709
        %752 = vmatpush.msra.mxu0 %v706
        %753 = vmatpush.msra.mxu0 %v703
        %754 = vmatpush.msra.mxu0 %v700
        %755 = vmatpush.msra.mxu0 %v697
        %756 = vmatpush.msra.mxu0 %v694
        %757 = vmatmul.f32.gmra.mxu0 %v719
        %v758 = vpop.f32.mrf.mxu0
        %v759 = vadd.f32 0.0, %v758
        %760 = vdwg.mxu0
        %761 = vmatpush.msra.mxu0 0.0
        %762 = vmatpush.msra.mxu0 0.0
        %763 = vmatpush.msra.mxu0 0.0
        %764 = vmatpush.msra.mxu0 0.0
        %765 = vmatpush.msra.mxu0 0.0
        %766 = vmatpush.msra.mxu0 0.0
        %767 = vmatpush.msra.mxu0 0.0
        %768 = vmatpush.msra.mxu0 0.0
        %769 = vmatpush.msra.mxu0 %v716
        %770 = vmatpush.msra.mxu0 %v713
        %771 = vmatpush.msra.mxu0 %v710
        %772 = vmatpush.msra.mxu0 %v707
        %773 = vmatpush.msra.mxu0 %v704
        %774 = vmatpush.msra.mxu0 %v701
        %775 = vmatpush.msra.mxu0 %v698
        %776 = vmatpush.msra.mxu0 %v695
        %777 = vmatmul.f32.gmra.mxu0 %v719
        %v778 = vpop.f32.mrf.mxu0
        %v779 = vadd.f32 0.0, %v778
        %780 = vdwg.mxu0
        %781 = vst [vmem:[#allocation4] sm:$0xff] %v739
        %782 = vst [vmem:[#allocation4 + $0x8] sm:$0xff] %v759
        %vm783 = vcmask 556032
        %784 = vst.msk [vmem:[#allocation4 + $0x10] sm:$0xff] %vm783, %v779
        %v785 = vld [vmem:[#allocation4] sm:$0xff]
        %v786 = vld [vmem:[#allocation4 + $0x8] sm:$0xff]
        %v787 = vld [vmem:[#allocation4 + $0x10] sm:$0xff]
        %788 = vst [vmem:[#allocation5] sm:$0xff] %v785
        %789 = vst [vmem:[#allocation5 + $0x8] sm:$0xff] %v786
        %vm790 = vcmask 244736
        %791 = vst.msk [vmem:[#allocation5 + $0x10] sm:$0xff] %vm790, %v787
        %v792 = vld [vmem:[#allocation4] sm:$0xff]
        %v793 = vld [vmem:[#allocation4 + $0x8] sm:$0xff]
        %v794 = vld [vmem:[#allocation4 + $0x10] sm:$0xff]
        %798 = vrot.lane.b32.xlu0 %v792, 127
        %v799 = vpop.permute.xlu0 %798
        %800 = vrot.lane.b32.xlu0 %v793, 127
        %v801 = vpop.permute.xlu0 %800
        %802 = vrot.lane.b32.xlu0 %v794, 127
        %v803 = vpop.permute.xlu0 %802
        %vm804 = vcmask 1039360
        %v805 = vsel %vm804, %v799, %v801
        %v806 = vsel %vm804, %v801, %v803
        %810 = vst [vmem:[#allocation5 + $0x18] sm:$0xff] %v805
        %811 = vst [vmem:[#allocation5 + $0x20] sm:$0xff] %v806
        %812 = vst.msk [vmem:[#allocation5 + $0x28] sm:$0xff] %vm790, %v803
        %v813 = vld [vmem:[#allocation4] sm:$0xff]
        %v814 = vld [vmem:[#allocation4 + $0x8] sm:$0xff]
        %v815 = vld [vmem:[#allocation4 + $0x10] sm:$0xff]
        %819 = vrot.lane.b32.xlu0 %v813, 126
        %v820 = vpop.permute.xlu0 %819
        %821 = vrot.lane.b32.xlu0 %v814, 126
        %v822 = vpop.permute.xlu0 %821
        %823 = vrot.lane.b32.xlu0 %v815, 126
        %v824 = vpop.permute.xlu0 %823
        %vm825 = vcmask 1031168
        %v826 = vsel %vm825, %v820, %v822
        %v827 = vsel %vm825, %v822, %v824
        %831 = vst [vmem:[#allocation5 + $0x30] sm:$0xff] %v826
        %832 = vst [vmem:[#allocation5 + $0x38] sm:$0xff] %v827
        %833 = vst.msk [vmem:[#allocation5 + $0x40] sm:$0xff] %vm790, %v824
        %v834 = vld [vmem:[#allocation4] sm:$0xff]
        %v835 = vld [vmem:[#allocation4 + $0x8] sm:$0xff]
        %v836 = vld [vmem:[#allocation4 + $0x10] sm:$0xff]
        %840 = vrot.lane.b32.xlu0 %v834, 110
        %v841 = vpop.permute.xlu0 %840
        %842 = vrot.lane.b32.xlu0 %v835, 110
        %v843 = vpop.permute.xlu0 %842
        %844 = vrot.lane.b32.xlu0 %v836, 110
        %v845 = vpop.permute.xlu0 %844
        %vm846 = vcmask 900096
        %v847 = vsel %vm846, %v841, %v843
        %v848 = vsel %vm846, %v843, %v845
        %852 = vst [vmem:[#allocation5 + $0x48] sm:$0xff] %v847
        %853 = vst [vmem:[#allocation5 + $0x50] sm:$0xff] %v848
        %854 = vst.msk [vmem:[#allocation5 + $0x58] sm:$0xff] %vm790, %v845
        %v855 = vld [vmem:[#allocation4] sm:$0xff]
        %v856 = vld [vmem:[#allocation4 + $0x8] sm:$0xff]
        %v857 = vld [vmem:[#allocation4 + $0x10] sm:$0xff]
        %861 = vrot.lane.b32.xlu0 %v855, 109
        %v862 = vpop.permute.xlu0 %861
        %863 = vrot.lane.b32.xlu0 %v856, 109
        %v864 = vpop.permute.xlu0 %863
        %865 = vrot.lane.b32.xlu0 %v857, 109
        %v866 = vpop.permute.xlu0 %865
        %vm867 = vcmask 891904
        %v868 = vsel %vm867, %v862, %v864
        %v869 = vsel %vm867, %v864, %v866
        %873 = vst [vmem:[#allocation5 + $0x60] sm:$0xff] %v868
        %874 = vst [vmem:[#allocation5 + $0x68] sm:$0xff] %v869
        %875 = vst.msk [vmem:[#allocation5 + $0x70] sm:$0xff] %vm790, %v866
        %v876 = vld [vmem:[#allocation4] sm:$0xff]
        %v877 = vld [vmem:[#allocation4 + $0x8] sm:$0xff]
        %v878 = vld [vmem:[#allocation4 + $0x10] sm:$0xff]
        %882 = vrot.lane.b32.xlu0 %v876, 108
        %v883 = vpop.permute.xlu0 %882
        %884 = vrot.lane.b32.xlu0 %v877, 108
        %v885 = vpop.permute.xlu0 %884
        %886 = vrot.lane.b32.xlu0 %v878, 108
        %v887 = vpop.permute.xlu0 %886
        %vm888 = vcmask 883712
        %v889 = vsel %vm888, %v883, %v885
        %v890 = vsel %vm888, %v885, %v887
        %894 = vst [vmem:[#allocation5 + $0x78] sm:$0xff] %v889
        %895 = vst [vmem:[#allocation5 + $0x80] sm:$0xff] %v890
        %896 = vst.msk [vmem:[#allocation5 + $0x88] sm:$0xff] %vm790, %v887
        %v897 = vld [vmem:[#allocation4] sm:$0xff]
        %v898 = vld [vmem:[#allocation4 + $0x8] sm:$0xff]
        %v899 = vld [vmem:[#allocation4 + $0x10] sm:$0xff]
        %903 = vrot.lane.b32.xlu0 %v897, 92
        %v904 = vpop.permute.xlu0 %903
        %905 = vrot.lane.b32.xlu0 %v898, 92
        %v906 = vpop.permute.xlu0 %905
        %907 = vrot.lane.b32.xlu0 %v899, 92
        %v908 = vpop.permute.xlu0 %907
        %vm909 = vcmask 752640
        %v910 = vsel %vm909, %v904, %v906
        %v911 = vsel %vm909, %v906, %v908
        %915 = vst [vmem:[#allocation5 + $0x90] sm:$0xff] %v910
        %916 = vst [vmem:[#allocation5 + $0x98] sm:$0xff] %v911
        %917 = vst.msk [vmem:[#allocation5 + $0xa0] sm:$0xff] %vm790, %v908
        %v918 = vld [vmem:[#allocation4] sm:$0xff]
        %v919 = vld [vmem:[#allocation4 + $0x8] sm:$0xff]
        %v920 = vld [vmem:[#allocation4 + $0x10] sm:$0xff]
        %924 = vrot.lane.b32.xlu0 %v918, 91
        %v925 = vpop.permute.xlu0 %924
        %926 = vrot.lane.b32.xlu0 %v919, 91
        %v927 = vpop.permute.xlu0 %926
        %928 = vrot.lane.b32.xlu0 %v920, 91
        %v929 = vpop.permute.xlu0 %928
        %vm930 = vcmask 744448
        %v931 = vsel %vm930, %v925, %v927
        %v932 = vsel %vm930, %v927, %v929
        %936 = vst [vmem:[#allocation5 + $0xa8] sm:$0xff] %v931
        %937 = vst [vmem:[#allocation5 + $0xb0] sm:$0xff] %v932
        %938 = vst.msk [vmem:[#allocation5 + $0xb8] sm:$0xff] %vm790, %v929
        %v939 = vld [vmem:[#allocation4] sm:$0xff]
        %v940 = vld [vmem:[#allocation4 + $0x8] sm:$0xff]
        %v941 = vld [vmem:[#allocation4 + $0x10] sm:$0xff]
        %945 = vrot.lane.b32.xlu0 %v939, 90
        %v946 = vpop.permute.xlu0 %945
        %947 = vrot.lane.b32.xlu0 %v940, 90
        %v948 = vpop.permute.xlu0 %947
        %949 = vrot.lane.b32.xlu0 %v941, 90
        %v950 = vpop.permute.xlu0 %949
        %vm951 = vcmask 736256
        %v952 = vsel %vm951, %v946, %v948
        %v953 = vsel %vm951, %v948, %v950
        %957 = vst [vmem:[#allocation5 + $0xc0] sm:$0xff] %v952
        %958 = vst [vmem:[#allocation5 + $0xc8] sm:$0xff] %v953
        %959 = vst.msk [vmem:[#allocation5 + $0xd0] sm:$0xff] %vm790, %v950
        %v960 = vld [vmem:[#allocation13] sm:$0x3]
        %v961 = vld [vmem:[#allocation5] sm:$0xff]
        %v962 = vld [vmem:[#allocation5 + $0x8] sm:$0xff]
        %v963 = vld [vmem:[#allocation5 + $0x10] sm:$0xff]
        %v964 = vld [vmem:[#allocation5 + $0x18] sm:$0xff]
        %v965 = vld [vmem:[#allocation5 + $0x20] sm:$0xff]
        %v966 = vld [vmem:[#allocation5 + $0x28] sm:$0xff]
        %v967 = vld [vmem:[#allocation5 + $0x30] sm:$0xff]
        %v968 = vld [vmem:[#allocation5 + $0x38] sm:$0xff]
        %v969 = vld [vmem:[#allocation5 + $0x40] sm:$0xff]
        %v970 = vld [vmem:[#allocation5 + $0x48] sm:$0xff]
        %v971 = vld [vmem:[#allocation5 + $0x50] sm:$0xff]
        %v972 = vld [vmem:[#allocation5 + $0x58] sm:$0xff]
        %v973 = vld [vmem:[#allocation5 + $0x60] sm:$0xff]
        %v974 = vld [vmem:[#allocation5 + $0x68] sm:$0xff]
        %v975 = vld [vmem:[#allocation5 + $0x70] sm:$0xff]
        %v976 = vld [vmem:[#allocation5 + $0x78] sm:$0xff]
        %v977 = vld [vmem:[#allocation5 + $0x80] sm:$0xff]
        %v978 = vld [vmem:[#allocation5 + $0x88] sm:$0xff]
        %v979 = vld [vmem:[#allocation5 + $0x90] sm:$0xff]
        %v980 = vld [vmem:[#allocation5 + $0x98] sm:$0xff]
        %v981 = vld [vmem:[#allocation5 + $0xa0] sm:$0xff]
        %v982 = vld [vmem:[#allocation5 + $0xa8] sm:$0xff]
        %v983 = vld [vmem:[#allocation5 + $0xb0] sm:$0xff]
        %v984 = vld [vmem:[#allocation5 + $0xb8] sm:$0xff]
        %v985 = vld [vmem:[#allocation5 + $0xc0] sm:$0xff]
        %v986 = vld [vmem:[#allocation5 + $0xc8] sm:$0xff]
        %v987 = vld [vmem:[#allocation5 + $0xd0] sm:$0xff]
        %v988 = vpack.c.bf16 %v964, %v961
        %v989 = vpack.c.bf16 %v965, %v962
        %v990 = vpack.c.bf16 %v966, %v963
        %v991 = vpack.c.bf16 %v970, %v967
        %v992 = vpack.c.bf16 %v971, %v968
        %v993 = vpack.c.bf16 %v972, %v969
        %v994 = vpack.c.bf16 %v976, %v973
        %v995 = vpack.c.bf16 %v977, %v974
        %v996 = vpack.c.bf16 %v978, %v975
        %v997 = vpack.c.bf16 %v982, %v979
        %v998 = vpack.c.bf16 %v983, %v980
        %v999 = vpack.c.bf16 %v984, %v981
        %v1000 = vpack.c.bf16 %v985, %v985
        %v1001 = vpack.c.bf16 %v986, %v986
        %v1002 = vpack.c.bf16 %v987, %v987
        %vm1003 = vcmask 588800
        %v1005 = vsel %vm1003, %v960, 0
        %vm1007 = vcmask 1043456
        %v1009 = vsel %vm1007, %v1000, 0
        %v1012 = vsel %vm1007, %v1001, 0
        %v1015 = vsel %vm1007, %v1002, 0
        %1017 = vmatpush.bf16.msra.mxu0 0
        %1018 = vmatpush.bf16.msra.mxu0 0
        %1019 = vmatpush.bf16.msra.mxu0 0
        %1020 = vmatpush.bf16.msra.mxu0 %v1009
        %1021 = vmatpush.bf16.msra.mxu0 %v997
        %1022 = vmatpush.bf16.msra.mxu0 %v994
        %1023 = vmatpush.bf16.msra.mxu0 %v991
        %1024 = vmatpush.bf16.msra.mxu0 %v988
        %1025 = vmatmul.bf16.gmra.mxu0 %v1005
        %v1026 = vpop.f32.mrf.mxu0
        %v1027 = vadd.f32 0.0, %v1026
        %v1028 = vpop.f32.mrf.mxu0
        %1029 = vdwg.mxu0
        %1030 = vmatpush.bf16.msra.mxu0 0
        %1031 = vmatpush.bf16.msra.mxu0 0
        %1032 = vmatpush.bf16.msra.mxu0 0
        %1033 = vmatpush.bf16.msra.mxu0 %v1012
        %1034 = vmatpush.bf16.msra.mxu0 %v998
        %1035 = vmatpush.bf16.msra.mxu0 %v995
        %1036 = vmatpush.bf16.msra.mxu0 %v992
        %1037 = vmatpush.bf16.msra.mxu0 %v989
        %1038 = vmatmul.bf16.gmra.mxu0 %v1005
        %v1039 = vpop.f32.mrf.mxu0
        %v1040 = vadd.f32 0.0, %v1039
        %v1041 = vpop.f32.mrf.mxu0
        %1042 = vdwg.mxu0
        %1043 = vmatpush.bf16.msra.mxu0 0
        %1044 = vmatpush.bf16.msra.mxu0 0
        %1045 = vmatpush.bf16.msra.mxu0 0
        %1046 = vmatpush.bf16.msra.mxu0 %v1015
        %1047 = vmatpush.bf16.msra.mxu0 %v999
        %1048 = vmatpush.bf16.msra.mxu0 %v996
        %1049 = vmatpush.bf16.msra.mxu0 %v993
        %1050 = vmatpush.bf16.msra.mxu0 %v990
        %1051 = vmatmul.bf16.gmra.mxu0 %v1005
        %v1052 = vpop.f32.mrf.mxu0
        %v1053 = vadd.f32 0.0, %v1052
        %v1054 = vpop.f32.mrf.mxu0
        %1055 = vdwg.mxu0
        %v1056 = vld [vmem:[#allocation14] sm:$0xf]
        %1058 = vset.pattern.permute.xlu0 0
        %1059 = vperm.xlu0 %1058, %v1056
        %v1060 = vpop.permute.xlu0 %1059
        %v1062 = vmul.f32 %v1027, %v1060
        %v1063 = vmul.f32 %v1040, %v1060
        %v1064 = vmul.f32 %v1053, %v1060
        %1065 = vset.pattern.permute.xlu0 1
        %1066 = vperm.xlu0 %1065, %v1056
        %v1067 = vpop.permute.xlu0 %1066
        %v1069 = vadd.f32 %v1062, %v1067
        %v1070 = vadd.f32 %v1063, %v1067
        %v1071 = vadd.f32 %v1064, %v1067
        %v1072 = vmax.f32 %v1069, 0.0
        %v1073 = vmax.f32 %v1070, 0.0
        %v1074 = vmax.f32 %v1071, 0.0
        %v1075 = vld [vmem:[#allocation16] sm:$0xff]
        %v1076 = vld [vmem:[#allocation16 + $0x8] sm:$0xff]
        %v1077 = vld [vmem:[#allocation16 + $0x10] sm:$0xff]
        %v1078 = vld [vmem:[#allocation16 + $0x18] sm:$0xff]
        %v1079 = vld [vmem:[#allocation16 + $0x20] sm:$0xff]
        %v1080 = vld [vmem:[#allocation16 + $0x28] sm:$0xff]
        %v1081 = vld [vmem:[#allocation16 + $0x30] sm:$0xff]
        %v1082 = vld [vmem:[#allocation16 + $0x38] sm:$0xff]
        %v1083 = vld [vmem:[#allocation16 + $0x40] sm:$0xff]
        %v1084 = vld [vmem:[#allocation16 + $0x48] sm:$0xff]
        %v1085 = vld [vmem:[#allocation16 + $0x50] sm:$0xff]
        %v1086 = vld [vmem:[#allocation16 + $0x58] sm:$0xff]
        %v1087 = vld [vmem:[#allocation16 + $0x60] sm:$0xff]
        %v1088 = vld [vmem:[#allocation16 + $0x68] sm:$0xff]
        %v1089 = vld [vmem:[#allocation16 + $0x70] sm:$0xff]
        %v1090 = vld [vmem:[#allocation16 + $0x78] sm:$0xff]
        %v1091 = vld [vmem:[#allocation16 + $0x80] sm:$0xff]
        %v1092 = vld [vmem:[#allocation16 + $0x88] sm:$0xff]
        %v1093 = vld [vmem:[#allocation16 + $0x90] sm:$0xff]
        %v1094 = vld [vmem:[#allocation16 + $0x98] sm:$0xff]
        %v1095 = vld [vmem:[#allocation16 + $0xa0] sm:$0xff]
        %v1096 = vld [vmem:[#allocation16 + $0xa8] sm:$0xff]
        %v1097 = vld [vmem:[#allocation16 + $0xb0] sm:$0xff]
        %v1098 = vld [vmem:[#allocation16 + $0xb8] sm:$0xff]
        %v1099 = vld [vmem:[#allocation16 + $0xc0] sm:$0xff]
        %v1100 = vld [vmem:[#allocation16 + $0xc8] sm:$0xff]
        %v1101 = vld [vmem:[#allocation16 + $0xd0] sm:$0xff]
        %v1102 = vld [vmem:[#allocation16 + $0xd8] sm:$0xff]
        %v1103 = vld [vmem:[#allocation16 + $0xe0] sm:$0xff]
        %v1104 = vld [vmem:[#allocation16 + $0xe8] sm:$0xff]
        %v1105 = vld [vmem:[#allocation16 + $0xf0] sm:$0xff]
        %v1106 = vld [vmem:[#allocation16 + $0xf8] sm:$0xff]
        %v1107 = vld [vmem:[#allocation16 + $0x100] sm:$0xff]
        %v1108 = vld [vmem:[#allocation16 + $0x108] sm:$0xff]
        %v1109 = vld [vmem:[#allocation16 + $0x110] sm:$0xff]
        %v1110 = vld [vmem:[#allocation16 + $0x118] sm:$0xff]
        %v1111 = vld [vmem:[#allocation16 + $0x120] sm:$0xff]
        %v1112 = vld [vmem:[#allocation16 + $0x128] sm:$0xff]
        %v1113 = vld [vmem:[#allocation16 + $0x130] sm:$0xff]
        %v1114 = vld [vmem:[#allocation16 + $0x138] sm:$0xff]
        %v1115 = vld [vmem:[#allocation16 + $0x140] sm:$0xff]
        %v1116 = vld [vmem:[#allocation16 + $0x148] sm:$0xff]
        %v1117 = vld [vmem:[#allocation16 + $0x150] sm:$0xff]
        %v1118 = vld [vmem:[#allocation16 + $0x158] sm:$0xff]
        %v1119 = vld [vmem:[#allocation16 + $0x160] sm:$0xff]
        %v1120 = vld [vmem:[#allocation16 + $0x168] sm:$0xff]
        %v1121 = vld [vmem:[#allocation16 + $0x170] sm:$0xff]
        %v1122 = vld [vmem:[#allocation16 + $0x178] sm:$0xff]
        %v1123 = vld [vmem:[#allocation16 + $0x180] sm:$0xff]
        %v1124 = vld [vmem:[#allocation16 + $0x188] sm:$0xff]
        %v1125 = vld [vmem:[#allocation16 + $0x190] sm:$0xff]
        %v1126 = vld [vmem:[#allocation16 + $0x198] sm:$0xff]
        %v1127 = vld [vmem:[#allocation16 + $0x1a0] sm:$0xff]
        %v1128 = vld [vmem:[#allocation16 + $0x1a8] sm:$0xff]
        %v1129 = vld [vmem:[#allocation16 + $0x1b0] sm:$0xff]
        %v1130 = vld [vmem:[#allocation16 + $0x1b8] sm:$0xff]
        %v1131 = vld [vmem:[#allocation16 + $0x1c0] sm:$0xff]
        %v1132 = vld [vmem:[#allocation16 + $0x1c8] sm:$0xff]
        %v1133 = vld [vmem:[#allocation16 + $0x1d0] sm:$0xff]
        %v1134 = vld [vmem:[#allocation16 + $0x1d8] sm:$0xff]
        %v1135 = vld [vmem:[#allocation16 + $0x1e0] sm:$0xff]
        %v1136 = vld [vmem:[#allocation16 + $0x1e8] sm:$0xff]
        %v1137 = vld [vmem:[#allocation16 + $0x1f0] sm:$0xff]
        %v1138 = vld [vmem:[#allocation16 + $0x1f8] sm:$0xff]
        %v1139 = vld [vmem:[#allocation16 + $0x200] sm:$0xff]
        %v1140 = vld [vmem:[#allocation16 + $0x208] sm:$0xff]
        %v1141 = vld [vmem:[#allocation16 + $0x210] sm:$0xff]
        %v1142 = vld [vmem:[#allocation16 + $0x218] sm:$0xff]
        %v1143 = vld [vmem:[#allocation16 + $0x220] sm:$0xff]
        %v1144 = vld [vmem:[#allocation16 + $0x228] sm:$0xff]
        %v1145 = vld [vmem:[#allocation16 + $0x230] sm:$0x3f]
        %v1146 = vld [vmem:[#allocation16 + $0x238] sm:$0x3f]
        %v1148 = vsel %vm790, %v1074, 0
        %v1151 = vsel %vm669, %v1145, 0
        %v1154 = vsel %vm669, %v1146, 0
        %1156 = vmatpush.msra.mxu0 %v1105
        %1157 = vmatpush.msra.mxu0 %v1103
        %1158 = vmatpush.msra.mxu0 %v1101
        %1159 = vmatpush.msra.mxu0 %v1099
        %1160 = vmatpush.msra.mxu0 %v1097
        %1161 = vmatpush.msra.mxu0 %v1095
        %1162 = vmatpush.msra.mxu0 %v1093
        %1163 = vmatpush.msra.mxu0 %v1091
        %1164 = vmatpush.msra.mxu0 %v1089
        %1165 = vmatpush.msra.mxu0 %v1087
        %1166 = vmatpush.msra.mxu0 %v1085
        %1167 = vmatpush.msra.mxu0 %v1083
        %1168 = vmatpush.msra.mxu0 %v1081
        %1169 = vmatpush.msra.mxu0 %v1079
        %1170 = vmatpush.msra.mxu0 %v1077
        %1171 = vmatpush.msra.mxu0 %v1075
        %1172 = vmatmul.f32.gmra.mxu0 %v1072
        %v1173 = vpop.f32.mrf.mxu0
        %v1174 = vadd.f32 0.0, %v1173
        %1175 = vdwg.mxu0
        %1176 = vmatpush.msra.mxu0 %v1137
        %1177 = vmatpush.msra.mxu0 %v1135
        %1178 = vmatpush.msra.mxu0 %v1133
        %1179 = vmatpush.msra.mxu0 %v1131
        %1180 = vmatpush.msra.mxu0 %v1129
        %1181 = vmatpush.msra.mxu0 %v1127
        %1182 = vmatpush.msra.mxu0 %v1125
        %1183 = vmatpush.msra.mxu0 %v1123
        %1184 = vmatpush.msra.mxu0 %v1121
        %1185 = vmatpush.msra.mxu0 %v1119
        %1186 = vmatpush.msra.mxu0 %v1117
        %1187 = vmatpush.msra.mxu0 %v1115
        %1188 = vmatpush.msra.mxu0 %v1113
        %1189 = vmatpush.msra.mxu0 %v1111
        %1190 = vmatpush.msra.mxu0 %v1109
        %1191 = vmatpush.msra.mxu0 %v1107
        %1192 = vmatmul.f32.gmra.mxu0 %v1073
        %v1193 = vpop.f32.mrf.mxu0
        %v1194 = vadd.f32 %v1174, %v1193
        %1195 = vdwg.mxu0
        %1196 = vmatpush.msra.mxu0 0.0
        %1197 = vmatpush.msra.mxu0 0.0
        %1198 = vmatpush.msra.mxu0 0.0
        %1199 = vmatpush.msra.mxu0 0.0
        %1200 = vmatpush.msra.mxu0 0.0
        %1201 = vmatpush.msra.mxu0 0.0
        %1202 = vmatpush.msra.mxu0 0.0
        %1203 = vmatpush.msra.mxu0 0.0
        %1204 = vmatpush.msra.mxu0 0.0
        %1205 = vmatpush.msra.mxu0 0.0
        %1206 = vmatpush.msra.mxu0 0.0
        %1207 = vmatpush.msra.mxu0 0.0
        %1208 = vmatpush.msra.mxu0 %v1151
        %1209 = vmatpush.msra.mxu0 %v1143
        %1210 = vmatpush.msra.mxu0 %v1141
        %1211 = vmatpush.msra.mxu0 %v1139
        %1212 = vmatmul.f32.gmra.mxu0 %v1148
        %v1213 = vpop.f32.mrf.mxu0
        %v1214 = vadd.f32 %v1194, %v1213
        %1215 = vdwg.mxu0
        %1216 = vmatpush.msra.mxu0 %v1106
        %1217 = vmatpush.msra.mxu0 %v1104
        %1218 = vmatpush.msra.mxu0 %v1102
        %1219 = vmatpush.msra.mxu0 %v1100
        %1220 = vmatpush.msra.mxu0 %v1098
        %1221 = vmatpush.msra.mxu0 %v1096
        %1222 = vmatpush.msra.mxu0 %v1094
        %1223 = vmatpush.msra.mxu0 %v1092
        %1224 = vmatpush.msra.mxu0 %v1090
        %1225 = vmatpush.msra.mxu0 %v1088
        %1226 = vmatpush.msra.mxu0 %v1086
        %1227 = vmatpush.msra.mxu0 %v1084
        %1228 = vmatpush.msra.mxu0 %v1082
        %1229 = vmatpush.msra.mxu0 %v1080
        %1230 = vmatpush.msra.mxu0 %v1078
        %1231 = vmatpush.msra.mxu0 %v1076
        %1232 = vmatmul.f32.gmra.mxu0 %v1072
        %v1233 = vpop.f32.mrf.mxu0
        %v1234 = vadd.f32 0.0, %v1233
        %1235 = vdwg.mxu0
        %1236 = vmatpush.msra.mxu0 %v1138
        %1237 = vmatpush.msra.mxu0 %v1136
        %1238 = vmatpush.msra.mxu0 %v1134
        %1239 = vmatpush.msra.mxu0 %v1132
        %1240 = vmatpush.msra.mxu0 %v1130
        %1241 = vmatpush.msra.mxu0 %v1128
        %1242 = vmatpush.msra.mxu0 %v1126
        %1243 = vmatpush.msra.mxu0 %v1124
        %1244 = vmatpush.msra.mxu0 %v1122
        %1245 = vmatpush.msra.mxu0 %v1120
        %1246 = vmatpush.msra.mxu0 %v1118
        %1247 = vmatpush.msra.mxu0 %v1116
        %1248 = vmatpush.msra.mxu0 %v1114
        %1249 = vmatpush.msra.mxu0 %v1112
        %1250 = vmatpush.msra.mxu0 %v1110
        %1251 = vmatpush.msra.mxu0 %v1108
        %1252 = vmatmul.f32.gmra.mxu0 %v1073
        %v1253 = vpop.f32.mrf.mxu0
        %v1254 = vadd.f32 %v1234, %v1253
        %1255 = vdwg.mxu0
        %1256 = vmatpush.msra.mxu0 0.0
        %1257 = vmatpush.msra.mxu0 0.0
        %1258 = vmatpush.msra.mxu0 0.0
        %1259 = vmatpush.msra.mxu0 0.0
        %1260 = vmatpush.msra.mxu0 0.0
        %1261 = vmatpush.msra.mxu0 0.0
        %1262 = vmatpush.msra.mxu0 0.0
        %1263 = vmatpush.msra.mxu0 0.0
        %1264 = vmatpush.msra.mxu0 0.0
        %1265 = vmatpush.msra.mxu0 0.0
        %1266 = vmatpush.msra.mxu0 0.0
        %1267 = vmatpush.msra.mxu0 0.0
        %1268 = vmatpush.msra.mxu0 %v1154
        %1269 = vmatpush.msra.mxu0 %v1144
        %1270 = vmatpush.msra.mxu0 %v1142
        %1271 = vmatpush.msra.mxu0 %v1140
        %1272 = vmatmul.f32.gmra.mxu0 %v1148
        %v1273 = vpop.f32.mrf.mxu0
        %v1274 = vadd.f32 %v1254, %v1273
        %1275 = vdwg.mxu0
        %v1278 = vrot.slane %v1274, 4
        %v1279 = vsel %vm1007, %v1214, %v1278
        %1281 = vst [vmem:[%s440] sm:$0xff] %v1279
        %p1282 = scmp.lt.s32.totalorder %s24, 1
        %s1283 = scalar_select %p1282, %s24, 1
        %s1284 = smul.addr %s1283, 2
        %s1285 = smul.addr %s1284, 4
        %s1286 = scalar_lea.vmem %s9, %s1285
        // Predicated region
        $region85: #{_lambda_.5} parent=55 // pred_check
          %p1287 = pneg %p236
        $region86: #{_lambda_.5} parent=55 // pred_check_branch
          %1289 = sbr.rel (%p1287) target = $region88
        $region87: #{_lambda_.5} parent=55 // pred_region
          _
        $region88: #{_lambda_.5} parent=55 // pred_fallthru
          _
      $region56: #{_lambda_.5} parent=5 // pred_fallthru
        _
      %p1290 = scmp.le.s32.totalorder 2, %s19
      // Predicated region
      $region89: #{_lambda_.5} parent=5 // pred_check
        %p1291 = pneg %p1290
      $region90: #{_lambda_.5} parent=5 // pred_check_branch
        %1293 = sbr.rel (%p1291) target = $region92
      $region91: #{_lambda_.5} parent=5 // pred_region
        %s1294 = ssub.s32 %s19, 2
        // Predicated region
        $region93: #{_lambda_.5} parent=91 // pred_check
          %p1295 = pneg %p242
        $region94: #{_lambda_.5} parent=91 // pred_check_branch
          %1297 = sbr.rel (%p1295) target = $region96
        $region95: #{_lambda_.5} parent=91 // pred_region
          %p1298 = scmp.lt.s32.totalorder %s25, 1
          %s1299 = scalar_select %p1298, %s25, 1
          %s1300 = smul.addr %s1299, 2
          %s1301 = smul.addr %s1300, 4
          %s1302 = scalar_lea.vmem %s9, %s1301
        $region96: #{_lambda_.5} parent=91 // pred_fallthru
          _
      $region92: #{_lambda_.5} parent=5 // pred_fallthru
        _
    $region6: #{_lambda_.5} parent=1 // loop_footer
      %s23 = sadd.s32 1, %s19
    $region7: #{_lambda_.5} parent=1 // loop_footer_branch
      %18 = sbr.rel target = $region3
    $region8: #{_lambda_.5} parent=1 // loop_exit
      _
    %1303 = vsyncpa [#allocation7], 1
    %s1304 = scalar_lea.sflag [#allocation7], 1
    %1305 = vsyncpa %s1304, 1
    %1306 = vsyncpa [#allocation9], 1
    %1307 = vsyncpa [#allocation12], 1
    %1308 = vsyncpa [#allocation15], 1

</llo_original>
